<compile_context>
chip_gen: v7x
topology: tpu7x:2x2x1
jax: 0.10.0
libtpu: 0.0.40
codegen_flags: <defaults>
</compile_context>

<pallas_src>
import numpy as np
import jax
import jax.numpy as jnp
from jax import lax
from jax.experimental import pallas as pl
from jax.experimental.pallas import tpu as pltpu

# ----------------------------- model hyper-parameters -----------------------------
NUM_ENTITIES = 128
NUM_RELATIONS = 16
EMB_DIM = 64                     # embedding_dim
EMB_D1 = 8                       # embedding_shape1
EMB_D2 = EMB_DIM // EMB_D1       # 8
HS = 2 * EMB_D1                  # stacked height (cat along dim 2) = 16
WS = EMB_D2                      # 8
K_IN = HS * WS                   # 128 (MXU-perfect contraction dim)
CONV_C = 32
OH, OW = HS - 2, WS - 2          # valid 3x3 conv -> 14 x 6
HIDDEN = CONV_C * OH * OW        # 2688 (hidden_size consistent with this config)
PAD_DIM = 128                    # fc-output / score-K dim zero-padded 64 -> 128
BATCH = 2
TB = 8                           # batch tile = one sublane tile (pad B up to multiple)
BN_EPS = 1e-5


# ----------------------------------- fused kernel ----------------------------------
def conve_fused_kernel(e1_ref, rel_ref,                    # scalar prefetch (SMEM, int32)
                       emb_e_ref, emb_rel_ref,             # (128,64)/(16,64) f32 tables
                       wconv_ref, bconv_ref, fcw_ref, fcb_ref, eT_ref, b_ref,
                       out_ref,                            # (TB, 128) f32 scores
                       x_scratch):                         # (TB, 128) f32 VMEM scratch
    """Fused: gather/stack -> [bn0+conv+bias+bn1 as matmul] -> ReLU -> [fc+bn2] -> ReLU
    -> entity scores (+bias) -> sigmoid.  One batch tile of TB rows per grid step."""
    i = pl.program_id(0)
    base = i * TB

    # ---- in-kernel embedding gather + concat into the stacked (TB, 128) input ----
    # Row layout matches PyTorch: x_flat[:, 0:64] = emb_e[e1], x_flat[:, 64:128] = emb_rel[rel]
    # (view(-1,1,8,8) + cat(dim=2) + NCHW flatten).  TB is small & static -> unrolled.
    for t in range(TB):
        e_idx = e1_ref[base + t]
        r_idx = rel_ref[base + t]
        x_scratch[pl.ds(t, 1), 0:EMB_DIM] = emb_e_ref[pl.ds(e_idx, 1), :]
        x_scratch[pl.ds(t, 1), EMB_DIM:K_IN] = emb_rel_ref[pl.ds(r_idx, 1), :]

    x = x_scratch[...]                                                 # (TB, 128) f32

    # conv (+bn0/bn1/bias folded) as one MXU matmul, f32 accumulation, then ReLU
    h = jnp.dot(x.astype(jnp.bfloat16), wconv_ref[...],
                preferred_element_type=jnp.float32)                    # (TB, HIDDEN)
    h = jnp.maximum(h + bconv_ref[...], 0.0)

    # fc (+bn2 folded, zero-padded to 128 cols) then ReLU -- hidden never leaves VMEM
    z = jnp.dot(h.astype(jnp.bfloat16), fcw_ref[...],
                preferred_element_type=jnp.float32)                    # (TB, PAD_DIM)
    z = jnp.maximum(z + fcb_ref[...], 0.0)

    # entity scores + per-entity bias, sigmoid (padded K rows of eT are zero)
    logits = jnp.dot(z.astype(jnp.bfloat16), eT_ref[...],
                     preferred_element_type=jnp.float32) + b_ref[...]  # (TB, NUM_ENTITIES)
    out_ref[...] = jax.nn.sigmoid(logits)


# --------------------------------- pallas wrapper -----------------------------------
def fused_stage(e1_idx, rel_idx, params):
    B = int(e1_idx.shape[0])
    num_tiles = pl.cdiv(B, TB)
    b_pad = num_tiles * TB
    pad = b_pad - B
    e1_p = jnp.pad(e1_idx.astype(jnp.int32), (0, pad))     # padding_idx=0 rows, sliced off
    rel_p = jnp.pad(rel_idx.astype(jnp.int32), (0, pad))

    const = lambda i, e1, rel: (0, 0)                       # weights: DMA once, stay resident

    grid_spec = pltpu.PrefetchScalarGridSpec(
        num_scalar_prefetch=2,
        grid=(num_tiles,),
        in_specs=[
            pl.BlockSpec((NUM_ENTITIES, EMB_DIM), const),    # emb_e  (f32)
            pl.BlockSpec((NUM_RELATIONS, EMB_DIM), const),   # emb_rel(f32)
            pl.BlockSpec((K_IN, HIDDEN), const),             # wconv  (bf16)
            pl.BlockSpec((1, HIDDEN), const),                # bconv  (f32)
            pl.BlockSpec((HIDDEN, PAD_DIM), const),          # fcw    (bf16)
            pl.BlockSpec((1, PAD_DIM), const),               # fcb    (f32)
            pl.BlockSpec((PAD_DIM, NUM_ENTITIES), const),    # emb_e^T padded (bf16)
            pl.BlockSpec((1, NUM_ENTITIES), const),          # b      (f32)
        ],
        out_specs=pl.BlockSpec((TB, NUM_ENTITIES), lambda i, e1, rel: (i, 0)),
        scratch_shapes=[pltpu.VMEM((TB, K_IN), jnp.float32)],
    )

    weight_bytes = (2 * K_IN * HIDDEN + 4 * HIDDEN + 2 * HIDDEN * PAD_DIM + 4 * PAD_DIM
                    + 2 * PAD_DIM * NUM_ENTITIES + 4 * NUM_ENTITIES
                    + 4 * (NUM_ENTITIES + NUM_RELATIONS) * EMB_DIM)
    cost = pl.CostEstimate(
        flops=2 * b_pad * (K_IN * HIDDEN + HIDDEN * PAD_DIM + PAD_DIM * NUM_ENTITIES),
        transcendentals=b_pad * NUM_ENTITIES,
        bytes_accessed=weight_bytes + 4 * b_pad * (2 + K_IN + NUM_ENTITIES),
    )

    out = pl.pallas_call(
        conve_fused_kernel,
        out_shape=jax.ShapeDtypeStruct((b_pad, NUM_ENTITIES), jnp.float32),
        grid_spec=grid_spec,
        compiler_params=pltpu.CompilerParams(
            dimension_semantics=("parallel",)),              # 2nd TC on v7x; no-op v5e/v6e
        cost_estimate=cost,
    )(e1_p, rel_p,
      params['emb_e'], params['emb_rel'],
      params['wconv'], params['bconv'], params['fcw'], params['fcb'],
      params['embT'], params['bvec'])
    return out[:B]


def conve_forward(params, e1, rel):
    # Everything (gather, stack, conv, fc, scores, sigmoid) happens inside one pallas_call.
    return fused_stage(e1, rel, params)


# -------------------------- host-side folding of conv + BN --------------------------
def _fold_conv_to_matmul(conv_w, conv_b, s0, t0, s1, t1):
    """Fold bn0 -> 3x3 VALID conv (1->32) -> bias -> bn1 into (W_conv, b_conv).

    W_conv: (HS*WS, HIDDEN) with column order (c, oh, ow) == PyTorch NCHW flatten.
    """
    w = np.asarray(conv_w)[:, 0].astype(np.float64)                    # (C, 3, 3)
    s0 = float(np.asarray(s0)[0]); t0 = float(np.asarray(t0)[0])
    s1 = np.asarray(s1).astype(np.float64)
    t1 = np.asarray(t1).astype(np.float64)
    cb = np.asarray(conv_b).astype(np.float64)

    w_scaled = w * (s0 * s1)[:, None, None]                            # bn0/bn1 scale fold

    Wc = np.zeros((HS, WS, CONV_C, OH, OW), np.float64)
    oh = np.arange(OH)[:, None, None]
    ow = np.arange(OW)[None, :, None]
    cc = np.arange(CONV_C)[None, None, :]
    for di in range(3):
        for dj in range(3):
            Wc[oh + di, ow + dj, cc, oh, ow] += w_scaled[cc, di, dj]
    W_conv = Wc.reshape(HS * WS, HIDDEN).astype(np.float32)

    wsum = w.sum(axis=(1, 2))                                          # (C,)
    b_c = s1 * (t0 * wsum + cb) + t1                                   # (C,) valid-conv only
    b_conv = np.broadcast_to(b_c[:, None], (CONV_C, OH * OW)).reshape(1, HIDDEN)
    return W_conv, b_conv.astype(np.float32)


# ------------------------------ deterministic params -------------------------------
def _bn_fold(kg, kb, km, kv, n):
    g = 1.0 + 0.1 * jax.random.normal(kg, (n,), jnp.float32)
    b = 0.05 * jax.random.normal(kb, (n,), jnp.float32)
    m = 0.02 * jax.random.normal(km, (n,), jnp.float32)
    v = 0.9 + 0.2 * jax.random.uniform(kv, (n,), jnp.float32)
    scale = g / jnp.sqrt(v + BN_EPS)
    shift = b - m * scale
    return scale, shift


def build_params():
    key = jax.random.PRNGKey(0)
    ks = jax.random.split(key, 16)

    emb_e = (jax.random.normal(ks[0], (NUM_ENTITIES, EMB_DIM), jnp.float32) * 0.1).at[0].set(0.0)
    emb_rel = (jax.random.normal(ks[1], (NUM_RELATIONS, EMB_DIM), jnp.float32) * 0.1).at[0].set(0.0)
    conv_w = jax.random.normal(ks[2], (CONV_C, 1, 3, 3), jnp.float32) * 0.2     # OIHW
    conv_b = jax.random.normal(ks[3], (CONV_C,), jnp.float32) * 0.1
    fc_w = jax.random.normal(ks[4], (EMB_DIM, HIDDEN), jnp.float32) * (1.0 / np.sqrt(HIDDEN))
    fc_b = jax.random.normal(ks[5], (EMB_DIM,), jnp.float32) * 0.1
    b_param = jax.random.normal(ks[6], (NUM_ENTITIES,), jnp.float32) * 0.1

    sc0, sh0 = _bn_fold(ks[7], ks[8], ks[9], ks[10], 1)                # BatchNorm2d(1)
    sc1, sh1 = _bn_fold(ks[11], ks[12], ks[13], ks[14], CONV_C)        # BatchNorm2d(32)
    k2 = jax.random.split(ks[15], 4)
    sc2, sh2 = _bn_fold(k2[0], k2[1], k2[2], k2[3], EMB_DIM)           # BatchNorm1d(EMB_DIM)

    # --- kernel-ready folded / transposed / padded forms ---
    W_conv, b_conv = _fold_conv_to_matmul(conv_w, conv_b, sc0, sh0, sc1, sh1)

    fcw_folded = (np.asarray(fc_w).T * np.asarray(sc2)[None, :]).astype(np.float32)  # (HIDDEN, 64)
    fcb_folded = (np.asarray(fc_b) * np.asarray(sc2) + np.asarray(sh2)).astype(np.float32)

    # zero-pad fc-output / score-contraction dim 64 -> 128 for MXU / lane density
    fcw_pad = np.zeros((HIDDEN, PAD_DIM), np.float32); fcw_pad[:, :EMB_DIM] = fcw_folded
    fcb_pad = np.zeros((1, PAD_DIM), np.float32);      fcb_pad[0, :EMB_DIM] = fcb_folded
    eT_pad = np.zeros((PAD_DIM, NUM_ENTITIES), np.float32)
    eT_pad[:EMB_DIM, :] = np.asarray(emb_e).T

    params = dict(
        # raw (for the pure-JAX reference and in-kernel gather)
        emb_e=emb_e, emb_rel=emb_rel, conv_w=conv_w, conv_b=conv_b,
        fc_w=fc_w, fc_b=fc_b, b_param=b_param,
        sc0=sc0, sh0=sh0, sc1=sc1, sh1=sh1, sc2=sc2, sh2=sh2,
        # kernel-ready (weights bf16 for the MXU, biases f32)
        wconv=jnp.asarray(W_conv, jnp.bfloat16),                       # (128, 2688)
        bconv=jnp.asarray(b_conv, jnp.float32),                        # (1, 2688)
        fcw=jnp.asarray(fcw_pad, jnp.bfloat16),                        # (2688, 128)
        fcb=jnp.asarray(fcb_pad, jnp.float32),                         # (1, 128)
        embT=jnp.asarray(eT_pad, jnp.bfloat16),                        # (128, 128)
        bvec=jnp.asarray(b_param.reshape(1, NUM_ENTITIES), jnp.float32),
    )
    return params


# --------------------------------- pure-JAX reference -------------------------------
def reference_forward(params, e1, rel):
    e1e = jnp.take(params['emb_e'], e1, axis=0).reshape(-1, 1, EMB_D1, EMB_D2)
    rele = jnp.take(params['emb_rel'], rel, axis=0).reshape(-1, 1, EMB_D1, EMB_D2)
    x = jnp.concatenate([e1e, rele], axis=2)                           # (B,1,HS,WS)
    x = x * params['sc0'][None, :, None, None] + params['sh0'][None, :, None, None]
    x = lax.conv_general_dilated(x, params['conv_w'], (1, 1), 'VALID',
                                 dimension_numbers=('NCHW', 'OIHW', 'NCHW'))
    x = x + params['conv_b'][None, :, None, None]
    x = x * params['sc1'][None, :, None, None] + params['sh1'][None, :, None, None]
    x = jnp.maximum(x, 0.0)
    x = x.reshape(x.shape[0], -1)                                      # NCHW flatten
    x = x @ params['fc_w'].T + params['fc_b']
    x = x * params['sc2'] + params['sh2']
    x = jnp.maximum(x, 0.0)
    x = x @ params['emb_e'].T + params['b_param']
    return jax.nn.sigmoid(x)


# -------------------------------------- main ----------------------------------------
if __name__ == "__main__":
    params = build_params()
    k1, k2 = jax.random.split(jax.random.PRNGKey(0))
    e1 = jax.random.randint(k1, (BATCH,), 0, NUM_ENTITIES, dtype=jnp.int32)
    rel = jax.random.randint(k2, (BATCH,), 0, NUM_RELATIONS, dtype=jnp.int32)

    out = conve_forward(params, e1, rel)
    out = jax.block_until_ready(out)

    ref = reference_forward(params, e1, rel)
    np.testing.assert_allclose(np.asarray(out), np.asarray(ref), atol=1e-2, rtol=1e-2)
    print("KERNEL_OK")
</pallas_src>

<mosaic_0001>
module attributes {stable_mosaic.version = 11 : i64} {
  func.func @conve_fused_kernel(%arg0: i32, %arg1: memref<8xi32, #tpu.memory_space<smem>>, %arg2: memref<8xi32, #tpu.memory_space<smem>>, %arg3: memref<128x64xf32, #tpu.memory_space<vmem>>, %arg4: memref<16x64xf32, #tpu.memory_space<vmem>>, %arg5: memref<128x2688xbf16, #tpu.memory_space<vmem>>, %arg6: memref<1x2688xf32, #tpu.memory_space<vmem>>, %arg7: memref<2688x128xbf16, #tpu.memory_space<vmem>>, %arg8: memref<1x128xf32, #tpu.memory_space<vmem>>, %arg9: memref<128x128xbf16, #tpu.memory_space<vmem>>, %arg10: memref<1x128xf32, #tpu.memory_space<vmem>>, %arg11: memref<8x128xf32, #tpu.memory_space<vmem>>, %arg12: memref<8x128xf32, #tpu.memory_space<vmem>>) attributes {dimension_semantics = [#tpu.dimension_semantics<parallel>], iteration_bounds = array<i64: 1>, scalar_prefetch = 2 : i64, scratch_operands = 1 : i64, tpu.core_type = #tpu.core_type<tc>, window_params = [{pipeline_mode = #tpu.pipeline_mode<synchronous>, transform_indices = @transform_0, window_bounds = array<i64: 128, 64>}, {pipeline_mode = #tpu.pipeline_mode<synchronous>, transform_indices = @transform_1, window_bounds = array<i64: 16, 64>}, {pipeline_mode = #tpu.pipeline_mode<synchronous>, transform_indices = @transform_2, window_bounds = array<i64: 128, 2688>}, {pipeline_mode = #tpu.pipeline_mode<synchronous>, transform_indices = @transform_3, window_bounds = array<i64: 1, 2688>}, {pipeline_mode = #tpu.pipeline_mode<synchronous>, transform_indices = @transform_4, window_bounds = array<i64: 2688, 128>}, {pipeline_mode = #tpu.pipeline_mode<synchronous>, transform_indices = @transform_5, window_bounds = array<i64: 1, 128>}, {pipeline_mode = #tpu.pipeline_mode<synchronous>, transform_indices = @transform_6, window_bounds = array<i64: 128, 128>}, {pipeline_mode = #tpu.pipeline_mode<synchronous>, transform_indices = @transform_7, window_bounds = array<i64: 1, 128>}, {transform_indices = @transform_8, window_bounds = array<i64: 8, 128>}]} {
    %c8_i32 = arith.constant 8 : i32
    %0 = arith.muli %arg0, %c8_i32 : i32
    %c0_i32 = arith.constant 0 : i32
    %1 = arith.addi %0, %c0_i32 : i32
    %2 = arith.index_cast %1 : i32 to index
    %3 = memref.load %arg1[%2] : memref<8xi32, #tpu.memory_space<smem>>
    %c0_i32_0 = arith.constant 0 : i32
    %4 = arith.addi %0, %c0_i32_0 : i32
    %5 = arith.index_cast %4 : i32 to index
    %6 = memref.load %arg2[%5] : memref<8xi32, #tpu.memory_space<smem>>
    %7 = arith.index_cast %3 : i32 to index
    %c0 = arith.constant 0 : index
    %8 = vector.load %arg3[%7, %c0] : memref<128x64xf32, #tpu.memory_space<vmem>>, vector<1x64xf32>
    %c0_1 = arith.constant 0 : index
    %c0_2 = arith.constant 0 : index
    %9 = vector.load %arg12[%c0_1, %c0_2] : memref<8x128xf32, #tpu.memory_space<vmem>>, vector<1x64xf32>
    tpu.vector_store %arg12[%c0_1, %c0_2], %8 {strides = array<i32>} : memref<8x128xf32, #tpu.memory_space<vmem>>, vector<1x64xf32>,
    %10 = arith.index_cast %6 : i32 to index
    %c0_3 = arith.constant 0 : index
    %11 = vector.load %arg4[%10, %c0_3] : memref<16x64xf32, #tpu.memory_space<vmem>>, vector<1x64xf32>
    %c0_4 = arith.constant 0 : index
    %c64 = arith.constant 64 : index
    %12 = vector.load %arg12[%c0_4, %c64] : memref<8x128xf32, #tpu.memory_space<vmem>>, vector<1x64xf32>
    tpu.vector_store %arg12[%c0_4, %c64], %11 {strides = array<i32>} : memref<8x128xf32, #tpu.memory_space<vmem>>, vector<1x64xf32>,
    %c1_i32 = arith.constant 1 : i32
    %13 = arith.addi %0, %c1_i32 : i32
    %14 = arith.index_cast %13 : i32 to index
    %15 = memref.load %arg1[%14] : memref<8xi32, #tpu.memory_space<smem>>
    %c1_i32_5 = arith.constant 1 : i32
    %16 = arith.addi %0, %c1_i32_5 : i32
    %17 = arith.index_cast %16 : i32 to index
    %18 = memref.load %arg2[%17] : memref<8xi32, #tpu.memory_space<smem>>
    %19 = arith.index_cast %15 : i32 to index
    %c0_6 = arith.constant 0 : index
    %20 = vector.load %arg3[%19, %c0_6] : memref<128x64xf32, #tpu.memory_space<vmem>>, vector<1x64xf32>
    %c1 = arith.constant 1 : index
    %c0_7 = arith.constant 0 : index
    %21 = vector.load %arg12[%c1, %c0_7] : memref<8x128xf32, #tpu.memory_space<vmem>>, vector<1x64xf32>
    tpu.vector_store %arg12[%c1, %c0_7], %20 {strides = array<i32>} : memref<8x128xf32, #tpu.memory_space<vmem>>, vector<1x64xf32>,
    %22 = arith.index_cast %18 : i32 to index
    %c0_8 = arith.constant 0 : index
    %23 = vector.load %arg4[%22, %c0_8] : memref<16x64xf32, #tpu.memory_space<vmem>>, vector<1x64xf32>
    %c1_9 = arith.constant 1 : index
    %c64_10 = arith.constant 64 : index
    %24 = vector.load %arg12[%c1_9, %c64_10] : memref<8x128xf32, #tpu.memory_space<vmem>>, vector<1x64xf32>
    tpu.vector_store %arg12[%c1_9, %c64_10], %23 {strides = array<i32>} : memref<8x128xf32, #tpu.memory_space<vmem>>, vector<1x64xf32>,
    %c2_i32 = arith.constant 2 : i32
    %25 = arith.addi %0, %c2_i32 : i32
    %26 = arith.index_cast %25 : i32 to index
    %27 = memref.load %arg1[%26] : memref<8xi32, #tpu.memory_space<smem>>
    %c2_i32_11 = arith.constant 2 : i32
    %28 = arith.addi %0, %c2_i32_11 : i32
    %29 = arith.index_cast %28 : i32 to index
    %30 = memref.load %arg2[%29] : memref<8xi32, #tpu.memory_space<smem>>
    %31 = arith.index_cast %27 : i32 to index
    %c0_12 = arith.constant 0 : index
    %32 = vector.load %arg3[%31, %c0_12] : memref<128x64xf32, #tpu.memory_space<vmem>>, vector<1x64xf32>
    %c2 = arith.constant 2 : index
    %c0_13 = arith.constant 0 : index
    %33 = vector.load %arg12[%c2, %c0_13] : memref<8x128xf32, #tpu.memory_space<vmem>>, vector<1x64xf32>
    tpu.vector_store %arg12[%c2, %c0_13], %32 {strides = array<i32>} : memref<8x128xf32, #tpu.memory_space<vmem>>, vector<1x64xf32>,
    %34 = arith.index_cast %30 : i32 to index
    %c0_14 = arith.constant 0 : index
    %35 = vector.load %arg4[%34, %c0_14] : memref<16x64xf32, #tpu.memory_space<vmem>>, vector<1x64xf32>
    %c2_15 = arith.constant 2 : index
    %c64_16 = arith.constant 64 : index
    %36 = vector.load %arg12[%c2_15, %c64_16] : memref<8x128xf32, #tpu.memory_space<vmem>>, vector<1x64xf32>
    tpu.vector_store %arg12[%c2_15, %c64_16], %35 {strides = array<i32>} : memref<8x128xf32, #tpu.memory_space<vmem>>, vector<1x64xf32>,
    %c3_i32 = arith.constant 3 : i32
    %37 = arith.addi %0, %c3_i32 : i32
    %38 = arith.index_cast %37 : i32 to index
    %39 = memref.load %arg1[%38] : memref<8xi32, #tpu.memory_space<smem>>
    %c3_i32_17 = arith.constant 3 : i32
    %40 = arith.addi %0, %c3_i32_17 : i32
    %41 = arith.index_cast %40 : i32 to index
    %42 = memref.load %arg2[%41] : memref<8xi32, #tpu.memory_space<smem>>
    %43 = arith.index_cast %39 : i32 to index
    %c0_18 = arith.constant 0 : index
    %44 = vector.load %arg3[%43, %c0_18] : memref<128x64xf32, #tpu.memory_space<vmem>>, vector<1x64xf32>
    %c3 = arith.constant 3 : index
    %c0_19 = arith.constant 0 : index
    %45 = vector.load %arg12[%c3, %c0_19] : memref<8x128xf32, #tpu.memory_space<vmem>>, vector<1x64xf32>
    tpu.vector_store %arg12[%c3, %c0_19], %44 {strides = array<i32>} : memref<8x128xf32, #tpu.memory_space<vmem>>, vector<1x64xf32>,
    %46 = arith.index_cast %42 : i32 to index
    %c0_20 = arith.constant 0 : index
    %47 = vector.load %arg4[%46, %c0_20] : memref<16x64xf32, #tpu.memory_space<vmem>>, vector<1x64xf32>
    %c3_21 = arith.constant 3 : index
    %c64_22 = arith.constant 64 : index
    %48 = vector.load %arg12[%c3_21, %c64_22] : memref<8x128xf32, #tpu.memory_space<vmem>>, vector<1x64xf32>
    tpu.vector_store %arg12[%c3_21, %c64_22], %47 {strides = array<i32>} : memref<8x128xf32, #tpu.memory_space<vmem>>, vector<1x64xf32>,
    %c4_i32 = arith.constant 4 : i32
    %49 = arith.addi %0, %c4_i32 : i32
    %50 = arith.index_cast %49 : i32 to index
    %51 = memref.load %arg1[%50] : memref<8xi32, #tpu.memory_space<smem>>
    %c4_i32_23 = arith.constant 4 : i32
    %52 = arith.addi %0, %c4_i32_23 : i32
    %53 = arith.index_cast %52 : i32 to index
    %54 = memref.load %arg2[%53] : memref<8xi32, #tpu.memory_space<smem>>
    %55 = arith.index_cast %51 : i32 to index
    %c0_24 = arith.constant 0 : index
    %56 = vector.load %arg3[%55, %c0_24] : memref<128x64xf32, #tpu.memory_space<vmem>>, vector<1x64xf32>
    %c4 = arith.constant 4 : index
    %c0_25 = arith.constant 0 : index
    %57 = vector.load %arg12[%c4, %c0_25] : memref<8x128xf32, #tpu.memory_space<vmem>>, vector<1x64xf32>
    tpu.vector_store %arg12[%c4, %c0_25], %56 {strides = array<i32>} : memref<8x128xf32, #tpu.memory_space<vmem>>, vector<1x64xf32>,
    %58 = arith.index_cast %54 : i32 to index
    %c0_26 = arith.constant 0 : index
    %59 = vector.load %arg4[%58, %c0_26] : memref<16x64xf32, #tpu.memory_space<vmem>>, vector<1x64xf32>
    %c4_27 = arith.constant 4 : index
    %c64_28 = arith.constant 64 : index
    %60 = vector.load %arg12[%c4_27, %c64_28] : memref<8x128xf32, #tpu.memory_space<vmem>>, vector<1x64xf32>
    tpu.vector_store %arg12[%c4_27, %c64_28], %59 {strides = array<i32>} : memref<8x128xf32, #tpu.memory_space<vmem>>, vector<1x64xf32>,
    %c5_i32 = arith.constant 5 : i32
    %61 = arith.addi %0, %c5_i32 : i32
    %62 = arith.index_cast %61 : i32 to index
    %63 = memref.load %arg1[%62] : memref<8xi32, #tpu.memory_space<smem>>
    %c5_i32_29 = arith.constant 5 : i32
    %64 = arith.addi %0, %c5_i32_29 : i32
    %65 = arith.index_cast %64 : i32 to index
    %66 = memref.load %arg2[%65] : memref<8xi32, #tpu.memory_space<smem>>
    %67 = arith.index_cast %63 : i32 to index
    %c0_30 = arith.constant 0 : index
    %68 = vector.load %arg3[%67, %c0_30] : memref<128x64xf32, #tpu.memory_space<vmem>>, vector<1x64xf32>
    %c5 = arith.constant 5 : index
    %c0_31 = arith.constant 0 : index
    %69 = vector.load %arg12[%c5, %c0_31] : memref<8x128xf32, #tpu.memory_space<vmem>>, vector<1x64xf32>
    tpu.vector_store %arg12[%c5, %c0_31], %68 {strides = array<i32>} : memref<8x128xf32, #tpu.memory_space<vmem>>, vector<1x64xf32>,
    %70 = arith.index_cast %66 : i32 to index
    %c0_32 = arith.constant 0 : index
    %71 = vector.load %arg4[%70, %c0_32] : memref<16x64xf32, #tpu.memory_space<vmem>>, vector<1x64xf32>
    %c5_33 = arith.constant 5 : index
    %c64_34 = arith.constant 64 : index
    %72 = vector.load %arg12[%c5_33, %c64_34] : memref<8x128xf32, #tpu.memory_space<vmem>>, vector<1x64xf32>
    tpu.vector_store %arg12[%c5_33, %c64_34], %71 {strides = array<i32>} : memref<8x128xf32, #tpu.memory_space<vmem>>, vector<1x64xf32>,
    %c6_i32 = arith.constant 6 : i32
    %73 = arith.addi %0, %c6_i32 : i32
    %74 = arith.index_cast %73 : i32 to index
    %75 = memref.load %arg1[%74] : memref<8xi32, #tpu.memory_space<smem>>
    %c6_i32_35 = arith.constant 6 : i32
    %76 = arith.addi %0, %c6_i32_35 : i32
    %77 = arith.index_cast %76 : i32 to index
    %78 = memref.load %arg2[%77] : memref<8xi32, #tpu.memory_space<smem>>
    %79 = arith.index_cast %75 : i32 to index
    %c0_36 = arith.constant 0 : index
    %80 = vector.load %arg3[%79, %c0_36] : memref<128x64xf32, #tpu.memory_space<vmem>>, vector<1x64xf32>
    %c6 = arith.constant 6 : index
    %c0_37 = arith.constant 0 : index
    %81 = vector.load %arg12[%c6, %c0_37] : memref<8x128xf32, #tpu.memory_space<vmem>>, vector<1x64xf32>
    tpu.vector_store %arg12[%c6, %c0_37], %80 {strides = array<i32>} : memref<8x128xf32, #tpu.memory_space<vmem>>, vector<1x64xf32>,
    %82 = arith.index_cast %78 : i32 to index
    %c0_38 = arith.constant 0 : index
    %83 = vector.load %arg4[%82, %c0_38] : memref<16x64xf32, #tpu.memory_space<vmem>>, vector<1x64xf32>
    %c6_39 = arith.constant 6 : index
    %c64_40 = arith.constant 64 : index
    %84 = vector.load %arg12[%c6_39, %c64_40] : memref<8x128xf32, #tpu.memory_space<vmem>>, vector<1x64xf32>
    tpu.vector_store %arg12[%c6_39, %c64_40], %83 {strides = array<i32>} : memref<8x128xf32, #tpu.memory_space<vmem>>, vector<1x64xf32>,
    %c7_i32 = arith.constant 7 : i32
    %85 = arith.addi %0, %c7_i32 : i32
    %86 = arith.index_cast %85 : i32 to index
    %87 = memref.load %arg1[%86] : memref<8xi32, #tpu.memory_space<smem>>
    %c7_i32_41 = arith.constant 7 : i32
    %88 = arith.addi %0, %c7_i32_41 : i32
    %89 = arith.index_cast %88 : i32 to index
    %90 = memref.load %arg2[%89] : memref<8xi32, #tpu.memory_space<smem>>
    %91 = arith.index_cast %87 : i32 to index
    %c0_42 = arith.constant 0 : index
    %92 = vector.load %arg3[%91, %c0_42] : memref<128x64xf32, #tpu.memory_space<vmem>>, vector<1x64xf32>
    %c7 = arith.constant 7 : index
    %c0_43 = arith.constant 0 : index
    %93 = vector.load %arg12[%c7, %c0_43] : memref<8x128xf32, #tpu.memory_space<vmem>>, vector<1x64xf32>
    tpu.vector_store %arg12[%c7, %c0_43], %92 {strides = array<i32>} : memref<8x128xf32, #tpu.memory_space<vmem>>, vector<1x64xf32>,
    %94 = arith.index_cast %90 : i32 to index
    %c0_44 = arith.constant 0 : index
    %95 = vector.load %arg4[%94, %c0_44] : memref<16x64xf32, #tpu.memory_space<vmem>>, vector<1x64xf32>
    %c7_45 = arith.constant 7 : index
    %c64_46 = arith.constant 64 : index
    %96 = vector.load %arg12[%c7_45, %c64_46] : memref<8x128xf32, #tpu.memory_space<vmem>>, vector<1x64xf32>
    tpu.vector_store %arg12[%c7_45, %c64_46], %95 {strides = array<i32>} : memref<8x128xf32, #tpu.memory_space<vmem>>, vector<1x64xf32>,
    %c0_47 = arith.constant 0 : index
    %c0_48 = arith.constant 0 : index
    %97 = vector.load %arg12[%c0_47, %c0_48] : memref<8x128xf32, #tpu.memory_space<vmem>>, vector<8x128xf32>
    %98 = arith.truncf %97 : vector<8x128xf32> to vector<8x128xbf16>
    %c0_49 = arith.constant 0 : index
    %c0_50 = arith.constant 0 : index
    %99 = vector.load %arg5[%c0_49, %c0_50] : memref<128x2688xbf16, #tpu.memory_space<vmem>>, vector<128x2688xbf16>
    %cst = arith.constant dense<0.000000e+00> : vector<8x2688xf32>
    %100 = tpu.matmul %98, %99, %cst {dimension_numbers = #tpu.dot_dimension_numbers<[1], [0], [0], [1], [0, 0, 1, 1], [], []>} : vector<8x128xbf16>, vector<128x2688xbf16>, vector<8x2688xf32> -> vector<8x2688xf32>
    %c0_51 = arith.constant 0 : index
    %c0_52 = arith.constant 0 : index
    %101 = vector.load %arg6[%c0_51, %c0_52] : memref<1x2688xf32, #tpu.memory_space<vmem>>, vector<1x2688xf32>
    %102 = vector.broadcast %101 : vector<1x2688xf32> to vector<8x2688xf32>
    %103 = arith.addf %100, %102 : vector<8x2688xf32>
    %cst_53 = arith.constant 0.000000e+00 : f32
    %104 = vector.broadcast %cst_53 : f32 to vector<8x2688xf32>
    %105 = arith.maximumf %103, %104 : vector<8x2688xf32>
    %106 = arith.truncf %105 : vector<8x2688xf32> to vector<8x2688xbf16>
    %c0_54 = arith.constant 0 : index
    %c0_55 = arith.constant 0 : index
    %107 = vector.load %arg7[%c0_54, %c0_55] : memref<2688x128xbf16, #tpu.memory_space<vmem>>, vector<2688x128xbf16>
    %cst_56 = arith.constant dense<0.000000e+00> : vector<8x128xf32>
    %108 = tpu.matmul %106, %107, %cst_56 {dimension_numbers = #tpu.dot_dimension_numbers<[1], [0], [0], [1], [0, 0, 1, 1], [], []>} : vector<8x2688xbf16>, vector<2688x128xbf16>, vector<8x128xf32> -> vector<8x128xf32>
    %c0_57 = arith.constant 0 : index
    %c0_58 = arith.constant 0 : index
    %109 = vector.load %arg8[%c0_57, %c0_58] : memref<1x128xf32, #tpu.memory_space<vmem>>, vector<1x128xf32>
    %110 = vector.broadcast %109 : vector<1x128xf32> to vector<8x128xf32>
    %111 = arith.addf %108, %110 : vector<8x128xf32>
    %cst_59 = arith.constant 0.000000e+00 : f32
    %112 = vector.broadcast %cst_59 : f32 to vector<8x128xf32>
    %113 = arith.maximumf %111, %112 : vector<8x128xf32>
    %114 = arith.truncf %113 : vector<8x128xf32> to vector<8x128xbf16>
    %c0_60 = arith.constant 0 : index
    %c0_61 = arith.constant 0 : index
    %115 = vector.load %arg9[%c0_60, %c0_61] : memref<128x128xbf16, #tpu.memory_space<vmem>>, vector<128x128xbf16>
    %cst_62 = arith.constant dense<0.000000e+00> : vector<8x128xf32>
    %116 = tpu.matmul %114, %115, %cst_62 {dimension_numbers = #tpu.dot_dimension_numbers<[1], [0], [0], [1], [0, 0, 1, 1], [], []>} : vector<8x128xbf16>, vector<128x128xbf16>, vector<8x128xf32> -> vector<8x128xf32>
    %c0_63 = arith.constant 0 : index
    %c0_64 = arith.constant 0 : index
    %117 = vector.load %arg10[%c0_63, %c0_64] : memref<1x128xf32, #tpu.memory_space<vmem>>, vector<1x128xf32>
    %118 = vector.broadcast %117 : vector<1x128xf32> to vector<8x128xf32>
    %119 = arith.addf %116, %118 : vector<8x128xf32>
    %120 = arith.negf %119 : vector<8x128xf32>
    %121 = math.exp %120 : vector<8x128xf32>
    %cst_65 = arith.constant 1.000000e+00 : f32
    %122 = vector.broadcast %cst_65 : f32 to vector<8x128xf32>
    %123 = arith.addf %122, %121 : vector<8x128xf32>
    %124 = arith.divf %122, %123 : vector<8x128xf32>
    %c0_66 = arith.constant 0 : index
    %c0_67 = arith.constant 0 : index
    %125 = vector.load %arg11[%c0_66, %c0_67] : memref<8x128xf32, #tpu.memory_space<vmem>>, vector<8x128xf32>
    tpu.vector_store %arg11[%c0_66, %c0_67], %124 {strides = array<i32>} : memref<8x128xf32, #tpu.memory_space<vmem>>, vector<8x128xf32>,
    return
  }
  func.func @transform_0(%arg0: i32, %arg1: memref<8xi32, #tpu.memory_space<smem>>, %arg2: memref<8xi32, #tpu.memory_space<smem>>) -> (i32, i32) {
    %c0_i32 = arith.constant 0 : i32
    %c0_i32_0 = arith.constant 0 : i32
    %c0_i32_1 = arith.constant 0 : i32
    return %c0_i32, %c0_i32_0 : i32, i32
  }
  func.func @transform_1(%arg0: i32, %arg1: memref<8xi32, #tpu.memory_space<smem>>, %arg2: memref<8xi32, #tpu.memory_space<smem>>) -> (i32, i32) {
    %c0_i32 = arith.constant 0 : i32
    %c0_i32_0 = arith.constant 0 : i32
    %c0_i32_1 = arith.constant 0 : i32
    return %c0_i32, %c0_i32_0 : i32, i32
  }
  func.func @transform_2(%arg0: i32, %arg1: memref<8xi32, #tpu.memory_space<smem>>, %arg2: memref<8xi32, #tpu.memory_space<smem>>) -> (i32, i32) {
    %c0_i32 = arith.constant 0 : i32
    %c0_i32_0 = arith.constant 0 : i32
    %c0_i32_1 = arith.constant 0 : i32
    return %c0_i32, %c0_i32_0 : i32, i32
  }
  func.func @transform_3(%arg0: i32, %arg1: memref<8xi32, #tpu.memory_space<smem>>, %arg2: memref<8xi32, #tpu.memory_space<smem>>) -> (i32, i32) {
    %c0_i32 = arith.constant 0 : i32
    %c0_i32_0 = arith.constant 0 : i32
    %c0_i32_1 = arith.constant 0 : i32
    return %c0_i32, %c0_i32_0 : i32, i32
  }
  func.func @transform_4(%arg0: i32, %arg1: memref<8xi32, #tpu.memory_space<smem>>, %arg2: memref<8xi32, #tpu.memory_space<smem>>) -> (i32, i32) {
    %c0_i32 = arith.constant 0 : i32
    %c0_i32_0 = arith.constant 0 : i32
    %c0_i32_1 = arith.constant 0 : i32
    return %c0_i32, %c0_i32_0 : i32, i32
  }
  func.func @transform_5(%arg0: i32, %arg1: memref<8xi32, #tpu.memory_space<smem>>, %arg2: memref<8xi32, #tpu.memory_space<smem>>) -> (i32, i32) {
    %c0_i32 = arith.constant 0 : i32
    %c0_i32_0 = arith.constant 0 : i32
    %c0_i32_1 = arith.constant 0 : i32
    return %c0_i32, %c0_i32_0 : i32, i32
  }
  func.func @transform_6(%arg0: i32, %arg1: memref<8xi32, #tpu.memory_space<smem>>, %arg2: memref<8xi32, #tpu.memory_space<smem>>) -> (i32, i32) {
    %c0_i32 = arith.constant 0 : i32
    %c0_i32_0 = arith.constant 0 : i32
    %c0_i32_1 = arith.constant 0 : i32
    return %c0_i32, %c0_i32_0 : i32, i32
  }
  func.func @transform_7(%arg0: i32, %arg1: memref<8xi32, #tpu.memory_space<smem>>, %arg2: memref<8xi32, #tpu.memory_space<smem>>) -> (i32, i32) {
    %c0_i32 = arith.constant 0 : i32
    %c0_i32_0 = arith.constant 0 : i32
    %c0_i32_1 = arith.constant 0 : i32
    return %c0_i32, %c0_i32_0 : i32, i32
  }
  func.func @transform_8(%arg0: i32, %arg1: memref<8xi32, #tpu.memory_space<smem>>, %arg2: memref<8xi32, #tpu.memory_space<smem>>) -> (i32, i32) {
    %c0_i32 = arith.constant 0 : i32
    %c0_i32_0 = arith.constant 0 : i32
    return %arg0, %c0_i32 : i32, i32
  }
}

</mosaic_0001>

<llo_original>
// kernel: tpu_custom_call.1
$region0: #{tpu_custom_call.1}
  #allocation0 [shape = 'u32[]', space=smem, size = 0x4, offset = 0x4, fixed_abs, tag = 'smem constant byte address 0x4 - core index']
  #allocation1 [shape = 'u32[144,128]{1,0:T(1,128)}', space=vmem, size = 0x12000, scoped, tag = 'internal scratch']
  #allocation2 [shape = 'f32[8,128]{1,0:T(8,128)}', space=vmem, size = 0x1000, scoped, tag = 'scratch operand']
  #allocation3 [shape = 's32[1]{0}', space=sflag, size = 0x4, scoped, tag = 'scoped memory for tpu_custom_call.1']
  #allocation4 [shape = 'u8[512]{0}', space=smem, size = 0x200, scoped, tag = 'prefetched SMEM operand 0']
  #allocation5 [shape = 'u8[512]{0}', space=smem, size = 0x200, scoped, tag = 'prefetched SMEM operand 1']
  %s0 = inlined_call_operand.vmem [shape: s32[8], index: 0, kind: input, shape index: {}]
  %s1 = inlined_call_operand.vmem [shape: s32[8], index: 1, kind: input, shape index: {}]
  %s2 = inlined_call_operand.vmem [shape: f32[128,64], index: 2, kind: input, shape index: {}]
  %s3 = inlined_call_operand.vmem [shape: f32[16,64], index: 3, kind: input, shape index: {}]
  %s4 = inlined_call_operand.hbm [shape: bf16[128,2688], index: 4, kind: input, shape index: {}]
  %s5 = inlined_call_operand.vmem [shape: f32[1,2688], index: 5, kind: input, shape index: {}]
  %s6 = inlined_call_operand.hbm [shape: bf16[2688,128], index: 6, kind: input, shape index: {}]
  %s7 = inlined_call_operand.vmem [shape: f32[1,128], index: 7, kind: input, shape index: {}]
  %s8 = inlined_call_operand.vmem [shape: bf16[128,128], index: 8, kind: input, shape index: {}]
  %s9 = inlined_call_operand.vmem [shape: f32[1,128], index: 9, kind: input, shape index: {}]
  %s10 = inlined_call_operand.hbm [shape: f32[8,128], index: 10, kind: output, shape index: {}]
  %s11 = sld [smem:[#allocation0]]
  $region50: #{tpu_custom_call.1} parent=0
    _
  %s13 = ssub.s32 1, %s11
  %s14 = scalar_select 0, %s13, %s11
  %s15 = sshll.u32 %s0, 4
  %s16 = int_to_ptr.vmem [resolvable:$true] %s15
  %18 = dma.vmem_to_smem %s16, 16, [#allocation4], [#allocation3]
  %s19 = sshll.u32 %s1, 4
  %s20 = int_to_ptr.vmem [resolvable:$true] %s19
  %22 = dma.vmem_to_smem %s20, 16, [#allocation5], [#allocation3]
  %23 = dma.done [#allocation3], 32
  %24 = sfence
  $region1: #{tpu_custom_call.1} parent=0
    #allocation6 [shape = 'u8[688128]{0}', space=vmem, size = 0xa8000, scoped, tag = 'input window, operand 4, single buffered']
    #allocation7 [shape = 's32[1]{0}', space=sflag, size = 0x4, scoped, tag = 'scoped memory for tpu_custom_call.1']
    #allocation8 [shape = 's32[1]{0}', space=sflag, size = 0x4, scoped, tag = 'scoped memory for tpu_custom_call.1']
    #allocation9 [shape = 'u8[688128]{0}', space=vmem, size = 0xa8000, scoped, tag = 'input window, operand 6, single buffered']
    #allocation10 [shape = 's32[1]{0}', space=sflag, size = 0x4, scoped, tag = 'scoped memory for tpu_custom_call.1']
    #allocation11 [shape = 'u8[4096]{0}', space=vmem, size = 0x1000, scoped, tag = 'output window, operand 0, single buffered']
    %25 = vsyncpa [#allocation7], 0
    %26 = vsyncpa [#allocation10], 0
    %27 = vsyncpa [#allocation8], 0
    // Predicated region
    $region2: #{tpu_custom_call.1} parent=1 // pred_check
      _
    $region3: #{tpu_custom_call.1} parent=1 // pred_check_branch
      %29 = sbr.rel (0) target = $region5
    $region4: #{tpu_custom_call.1} parent=1 // pred_region
      _
    $region5: #{tpu_custom_call.1} parent=1 // pred_fallthru
      _
    // Predicated region
    $region6: #{tpu_custom_call.1} parent=1 // pred_check
      _
    $region7: #{tpu_custom_call.1} parent=1 // pred_check_branch
      %31 = sbr.rel (0) target = $region9
    $region8: #{tpu_custom_call.1} parent=1 // pred_region
      _
    $region9: #{tpu_custom_call.1} parent=1 // pred_fallthru
      _
    // Predicated region
    $region10: #{tpu_custom_call.1} parent=1 // pred_check
      _
    $region11: #{tpu_custom_call.1} parent=1 // pred_check_branch
      %33 = sbr.rel (0) target = $region13
    $region12: #{tpu_custom_call.1} parent=1 // pred_region
      %s35 = ssub.s32 21504, 21504
      %36 = vsyncadd [#allocation7], %s35
      %s37 = sshll.u32 [#allocation6], 4
      %s38 = int_to_ptr.vmem [resolvable:$true] %s37
      %43 = dma.hbm_to_vmem [thread:$0]  %s4, 21504, %s38, [#allocation7], 1344, 1344, 84
    $region13: #{tpu_custom_call.1} parent=1 // pred_fallthru
      _
    // Predicated region
    $region14: #{tpu_custom_call.1} parent=1 // pred_check
      _
    $region15: #{tpu_custom_call.1} parent=1 // pred_check_branch
      %45 = sbr.rel (0) target = $region17
    $region16: #{tpu_custom_call.1} parent=1 // pred_region
      _
    $region17: #{tpu_custom_call.1} parent=1 // pred_fallthru
      _
    // Predicated region
    $region18: #{tpu_custom_call.1} parent=1 // pred_check
      _
    $region19: #{tpu_custom_call.1} parent=1 // pred_check_branch
      %47 = sbr.rel (0) target = $region21
    $region20: #{tpu_custom_call.1} parent=1 // pred_region
      %s49 = ssub.s32 21504, 21504
      %50 = vsyncadd [#allocation10], %s49
      %s51 = sshll.u32 [#allocation9], 4
      %s52 = int_to_ptr.vmem [resolvable:$true] %s51
      %57 = dma.hbm_to_vmem [thread:$0]  %s6, 21504, %s52, [#allocation10], 64, 64, 4
    $region21: #{tpu_custom_call.1} parent=1 // pred_fallthru
      _
    // Predicated region
    $region22: #{tpu_custom_call.1} parent=1 // pred_check
      _
    $region23: #{tpu_custom_call.1} parent=1 // pred_check_branch
      %59 = sbr.rel (0) target = $region25
    $region24: #{tpu_custom_call.1} parent=1 // pred_region
      _
    $region25: #{tpu_custom_call.1} parent=1 // pred_fallthru
      _
    // Predicated region
    $region26: #{tpu_custom_call.1} parent=1 // pred_check
      _
    $region27: #{tpu_custom_call.1} parent=1 // pred_check_branch
      %61 = sbr.rel (0) target = $region29
    $region28: #{tpu_custom_call.1} parent=1 // pred_region
      _
    $region29: #{tpu_custom_call.1} parent=1 // pred_fallthru
      _
    // Predicated region
    $region30: #{tpu_custom_call.1} parent=1 // pred_check
      _
    $region31: #{tpu_custom_call.1} parent=1 // pred_check_branch
      %63 = sbr.rel (0) target = $region33
    $region32: #{tpu_custom_call.1} parent=1 // pred_region
      _
    $region33: #{tpu_custom_call.1} parent=1 // pred_fallthru
      _
    // Predicated region
    $region34: #{tpu_custom_call.1} parent=1 // pred_check
      _
    $region35: #{tpu_custom_call.1} parent=1 // pred_check_branch
      %65 = sbr.rel (0) target = $region37
    $region36: #{tpu_custom_call.1} parent=1 // pred_region
      %66 = dma.done [#allocation7], 21504
    $region37: #{tpu_custom_call.1} parent=1 // pred_fallthru
      _
    // Predicated region
    $region38: #{tpu_custom_call.1} parent=1 // pred_check
      _
    $region39: #{tpu_custom_call.1} parent=1 // pred_check_branch
      %68 = sbr.rel (0) target = $region41
    $region40: #{tpu_custom_call.1} parent=1 // pred_region
      %69 = dma.done [#allocation10], 21504
    $region41: #{tpu_custom_call.1} parent=1 // pred_fallthru
      _
    %s71 = smul.u32 0, 8
    %s72 = sld [smem:[#allocation4 + %s71]]
    %s73 = sld [smem:[#allocation5 + %s71]]
    %s74 = scalar_lea.vmem %s2, %s72
    %v75 = vld [vmem:[%s74] sm:$0x1]
    %vm76 = vcmask 516096
    %77 = vst.msk [vmem:[#allocation2] sm:$0x1] %vm76, %v75
    %s78 = scalar_lea.vmem %s3, %s73
    %v79 = vld [vmem:[%s78] sm:$0x1]
    %81 = vrot.lane.b32.xlu0 %v79, 64
    %v82 = vpop.permute.xlu0 %81
    %vm84 = vcmask 1040896
    %85 = vst.msk [vmem:[#allocation2] sm:$0x1] %vm84, %v82
    %s86 = sadd.s32 %s71, 1
    %s87 = sld [smem:[#allocation4 + %s86]]
    %s88 = sld [smem:[#allocation5 + %s86]]
    %s89 = scalar_lea.vmem %s2, %s87
    %v90 = vld [vmem:[%s89] sm:$0x1]
    %91 = vst.msk [vmem:[#allocation2 + $0x1] sm:$0x1] %vm76, %v90
    %s92 = scalar_lea.vmem %s3, %s88
    %v93 = vld [vmem:[%s92] sm:$0x1]
    %95 = vrot.lane.b32.xlu0 %v93, 64
    %v96 = vpop.permute.xlu0 %95
    %98 = vst.msk [vmem:[#allocation2 + $0x1] sm:$0x1] %vm84, %v96
    %s99 = sadd.s32 %s71, 2
    %s100 = sld [smem:[#allocation4 + %s99]]
    %s101 = sld [smem:[#allocation5 + %s99]]
    %s102 = scalar_lea.vmem %s2, %s100
    %v103 = vld [vmem:[%s102] sm:$0x1]
    %104 = vst.msk [vmem:[#allocation2 + $0x2] sm:$0x1] %vm76, %v103
    %s105 = scalar_lea.vmem %s3, %s101
    %v106 = vld [vmem:[%s105] sm:$0x1]
    %108 = vrot.lane.b32.xlu0 %v106, 64
    %v109 = vpop.permute.xlu0 %108
    %111 = vst.msk [vmem:[#allocation2 + $0x2] sm:$0x1] %vm84, %v109
    %s112 = sadd.s32 %s71, 3
    %s113 = sld [smem:[#allocation4 + %s112]]
    %s114 = sld [smem:[#allocation5 + %s112]]
    %s115 = scalar_lea.vmem %s2, %s113
    %v116 = vld [vmem:[%s115] sm:$0x1]
    %117 = vst.msk [vmem:[#allocation2 + $0x3] sm:$0x1] %vm76, %v116
    %s118 = scalar_lea.vmem %s3, %s114
    %v119 = vld [vmem:[%s118] sm:$0x1]
    %121 = vrot.lane.b32.xlu0 %v119, 64
    %v122 = vpop.permute.xlu0 %121
    %124 = vst.msk [vmem:[#allocation2 + $0x3] sm:$0x1] %vm84, %v122
    %s125 = sadd.s32 %s71, 4
    %s126 = sld [smem:[#allocation4 + %s125]]
    %s127 = sld [smem:[#allocation5 + %s125]]
    %s128 = scalar_lea.vmem %s2, %s126
    %v129 = vld [vmem:[%s128] sm:$0x1]
    %130 = vst.msk [vmem:[#allocation2 + $0x4] sm:$0x1] %vm76, %v129
    %s131 = scalar_lea.vmem %s3, %s127
    %v132 = vld [vmem:[%s131] sm:$0x1]
    %134 = vrot.lane.b32.xlu0 %v132, 64
    %v135 = vpop.permute.xlu0 %134
    %137 = vst.msk [vmem:[#allocation2 + $0x4] sm:$0x1] %vm84, %v135
    %s138 = sadd.s32 %s71, 5
    %s139 = sld [smem:[#allocation4 + %s138]]
    %s140 = sld [smem:[#allocation5 + %s138]]
    %s141 = scalar_lea.vmem %s2, %s139
    %v142 = vld [vmem:[%s141] sm:$0x1]
    %143 = vst.msk [vmem:[#allocation2 + $0x5] sm:$0x1] %vm76, %v142
    %s144 = scalar_lea.vmem %s3, %s140
    %v145 = vld [vmem:[%s144] sm:$0x1]
    %147 = vrot.lane.b32.xlu0 %v145, 64
    %v148 = vpop.permute.xlu0 %147
    %150 = vst.msk [vmem:[#allocation2 + $0x5] sm:$0x1] %vm84, %v148
    %s151 = sadd.s32 %s71, 6
    %s152 = sld [smem:[#allocation4 + %s151]]
    %s153 = sld [smem:[#allocation5 + %s151]]
    %s154 = scalar_lea.vmem %s2, %s152
    %v155 = vld [vmem:[%s154] sm:$0x1]
    %156 = vst.msk [vmem:[#allocation2 + $0x6] sm:$0x1] %vm76, %v155
    %s157 = scalar_lea.vmem %s3, %s153
    %v158 = vld [vmem:[%s157] sm:$0x1]
    %160 = vrot.lane.b32.xlu0 %v158, 64
    %v161 = vpop.permute.xlu0 %160
    %163 = vst.msk [vmem:[#allocation2 + $0x6] sm:$0x1] %vm84, %v161
    %s164 = sadd.s32 %s71, 7
    %s165 = sld [smem:[#allocation4 + %s164]]
    %s166 = sld [smem:[#allocation5 + %s164]]
    %s167 = scalar_lea.vmem %s2, %s165
    %v168 = vld [vmem:[%s167] sm:$0x1]
    %169 = vst.msk [vmem:[#allocation2 + $0x7] sm:$0x1] %vm76, %v168
    %s170 = scalar_lea.vmem %s3, %s166
    %v171 = vld [vmem:[%s170] sm:$0x1]
    %173 = vrot.lane.b32.xlu0 %v171, 64
    %v174 = vpop.permute.xlu0 %173
    %176 = vst.msk [vmem:[#allocation2 + $0x7] sm:$0x1] %vm84, %v174
    %v177 = vld [vmem:[#allocation2] sm:$0xff]
    %v178 = vpack.c.bf16 %v177, %v177
    %v179 = vld [vmem:[#allocation6] sm:$0xff]
    %v180 = vld [vmem:[#allocation6 + $0x8] sm:$0xff]
    %v181 = vld [vmem:[#allocation6 + $0x10] sm:$0xff]
    %v182 = vld [vmem:[#allocation6 + $0x18] sm:$0xff]
    %v183 = vld [vmem:[#allocation6 + $0x20] sm:$0xff]
    %v184 = vld [vmem:[#allocation6 + $0x28] sm:$0xff]
    %v185 = vld [vmem:[#allocation6 + $0x30] sm:$0xff]
    %v186 = vld [vmem:[#allocation6 + $0x38] sm:$0xff]
    %v187 = vld [vmem:[#allocation6 + $0x40] sm:$0xff]
    %v188 = vld [vmem:[#allocation6 + $0x48] sm:$0xff]
    %v189 = vld [vmem:[#allocation6 + $0x50] sm:$0xf]
    %v190 = vld [vmem:[#allocation6 + $0x54] sm:$0xff]
    %v191 = vld [vmem:[#allocation6 + $0x5c] sm:$0xff]
    %v192 = vld [vmem:[#allocation6 + $0x64] sm:$0xff]
    %v193 = vld [vmem:[#allocation6 + $0x6c] sm:$0xff]
    %v194 = vld [vmem:[#allocation6 + $0x74] sm:$0xff]
    %v195 = vld [vmem:[#allocation6 + $0x7c] sm:$0xff]
    %v196 = vld [vmem:[#allocation6 + $0x84] sm:$0xff]
    %v197 = vld [vmem:[#allocation6 + $0x8c] sm:$0xff]
    %v198 = vld [vmem:[#allocation6 + $0x94] sm:$0xff]
    %v199 = vld [vmem:[#allocation6 + $0x9c] sm:$0xff]
    %v200 = vld [vmem:[#allocation6 + $0xa4] sm:$0xf]
    %v201 = vld [vmem:[#allocation6 + $0xa8] sm:$0xff]
    %v202 = vld [vmem:[#allocation6 + $0xb0] sm:$0xff]
    %v203 = vld [vmem:[#allocation6 + $0xb8] sm:$0xff]
    %v204 = vld [vmem:[#allocation6 + $0xc0] sm:$0xff]
    %v205 = vld [vmem:[#allocation6 + $0xc8] sm:$0xff]
    %v206 = vld [vmem:[#allocation6 + $0xd0] sm:$0xff]
    %v207 = vld [vmem:[#allocation6 + $0xd8] sm:$0xff]
    %v208 = vld [vmem:[#allocation6 + $0xe0] sm:$0xff]
    %v209 = vld [vmem:[#allocation6 + $0xe8] sm:$0xff]
    %v210 = vld [vmem:[#allocation6 + $0xf0] sm:$0xff]
    %v211 = vld [vmem:[#allocation6 + $0xf8] sm:$0xf]
    %v212 = vld [vmem:[#allocation6 + $0xfc] sm:$0xff]
    %v213 = vld [vmem:[#allocation6 + $0x104] sm:$0xff]
    %v214 = vld [vmem:[#allocation6 + $0x10c] sm:$0xff]
    %v215 = vld [vmem:[#allocation6 + $0x114] sm:$0xff]
    %v216 = vld [vmem:[#allocation6 + $0x11c] sm:$0xff]
    %v217 = vld [vmem:[#allocation6 + $0x124] sm:$0xff]
    %v218 = vld [vmem:[#allocation6 + $0x12c] sm:$0xff]
    %v219 = vld [vmem:[#allocation6 + $0x134] sm:$0xff]
    %v220 = vld [vmem:[#allocation6 + $0x13c] sm:$0xff]
    %v221 = vld [vmem:[#allocation6 + $0x144] sm:$0xff]
    %v222 = vld [vmem:[#allocation6 + $0x14c] sm:$0xf]
    %v223 = vld [vmem:[#allocation6 + $0x150] sm:$0xff]
    %v224 = vld [vmem:[#allocation6 + $0x158] sm:$0xff]
    %v225 = vld [vmem:[#allocation6 + $0x160] sm:$0xff]
    %v226 = vld [vmem:[#allocation6 + $0x168] sm:$0xff]
    %v227 = vld [vmem:[#allocation6 + $0x170] sm:$0xff]
    %v228 = vld [vmem:[#allocation6 + $0x178] sm:$0xff]
    %v229 = vld [vmem:[#allocation6 + $0x180] sm:$0xff]
    %v230 = vld [vmem:[#allocation6 + $0x188] sm:$0xff]
    %v231 = vld [vmem:[#allocation6 + $0x190] sm:$0xff]
    %v232 = vld [vmem:[#allocation6 + $0x198] sm:$0xff]
    %v233 = vld [vmem:[#allocation6 + $0x1a0] sm:$0xf]
    %v234 = vld [vmem:[#allocation6 + $0x1a4] sm:$0xff]
    %v235 = vld [vmem:[#allocation6 + $0x1ac] sm:$0xff]
    %v236 = vld [vmem:[#allocation6 + $0x1b4] sm:$0xff]
    %v237 = vld [vmem:[#allocation6 + $0x1bc] sm:$0xff]
    %v238 = vld [vmem:[#allocation6 + $0x1c4] sm:$0xff]
    %v239 = vld [vmem:[#allocation6 + $0x1cc] sm:$0xff]
    %v240 = vld [vmem:[#allocation6 + $0x1d4] sm:$0xff]
    %v241 = vld [vmem:[#allocation6 + $0x1dc] sm:$0xff]
    %v242 = vld [vmem:[#allocation6 + $0x1e4] sm:$0xff]
    %v243 = vld [vmem:[#allocation6 + $0x1ec] sm:$0xff]
    %v244 = vld [vmem:[#allocation6 + $0x1f4] sm:$0xf]
    %v245 = vld [vmem:[#allocation6 + $0x1f8] sm:$0xff]
    %v246 = vld [vmem:[#allocation6 + $0x200] sm:$0xff]
    %v247 = vld [vmem:[#allocation6 + $0x208] sm:$0xff]
    %v248 = vld [vmem:[#allocation6 + $0x210] sm:$0xff]
    %v249 = vld [vmem:[#allocation6 + $0x218] sm:$0xff]
    %v250 = vld [vmem:[#allocation6 + $0x220] sm:$0xff]
    %v251 = vld [vmem:[#allocation6 + $0x228] sm:$0xff]
    %v252 = vld [vmem:[#allocation6 + $0x230] sm:$0xff]
    %v253 = vld [vmem:[#allocation6 + $0x238] sm:$0xff]
    %v254 = vld [vmem:[#allocation6 + $0x240] sm:$0xff]
    %v255 = vld [vmem:[#allocation6 + $0x248] sm:$0xf]
    %v256 = vld [vmem:[#allocation6 + $0x24c] sm:$0xff]
    %v257 = vld [vmem:[#allocation6 + $0x254] sm:$0xff]
    %v258 = vld [vmem:[#allocation6 + $0x25c] sm:$0xff]
    %v259 = vld [vmem:[#allocation6 + $0x264] sm:$0xff]
    %v260 = vld [vmem:[#allocation6 + $0x26c] sm:$0xff]
    %v261 = vld [vmem:[#allocation6 + $0x274] sm:$0xff]
    %v262 = vld [vmem:[#allocation6 + $0x27c] sm:$0xff]
    %v263 = vld [vmem:[#allocation6 + $0x284] sm:$0xff]
    %v264 = vld [vmem:[#allocation6 + $0x28c] sm:$0xff]
    %v265 = vld [vmem:[#allocation6 + $0x294] sm:$0xff]
    %v266 = vld [vmem:[#allocation6 + $0x29c] sm:$0xf]
    %v267 = vld [vmem:[#allocation6 + $0x2a0] sm:$0xff]
    %v268 = vld [vmem:[#allocation6 + $0x2a8] sm:$0xff]
    %v269 = vld [vmem:[#allocation6 + $0x2b0] sm:$0xff]
    %v270 = vld [vmem:[#allocation6 + $0x2b8] sm:$0xff]
    %v271 = vld [vmem:[#allocation6 + $0x2c0] sm:$0xff]
    %v272 = vld [vmem:[#allocation6 + $0x2c8] sm:$0xff]
    %v273 = vld [vmem:[#allocation6 + $0x2d0] sm:$0xff]
    %v274 = vld [vmem:[#allocation6 + $0x2d8] sm:$0xff]
    %v275 = vld [vmem:[#allocation6 + $0x2e0] sm:$0xff]
    %v276 = vld [vmem:[#allocation6 + $0x2e8] sm:$0xff]
    %v277 = vld [vmem:[#allocation6 + $0x2f0] sm:$0xf]
    %v278 = vld [vmem:[#allocation6 + $0x2f4] sm:$0xff]
    %v279 = vld [vmem:[#allocation6 + $0x2fc] sm:$0xff]
    %v280 = vld [vmem:[#allocation6 + $0x304] sm:$0xff]
    %v281 = vld [vmem:[#allocation6 + $0x30c] sm:$0xff]
    %v282 = vld [vmem:[#allocation6 + $0x314] sm:$0xff]
    %v283 = vld [vmem:[#allocation6 + $0x31c] sm:$0xff]
    %v284 = vld [vmem:[#allocation6 + $0x324] sm:$0xff]
    %v285 = vld [vmem:[#allocation6 + $0x32c] sm:$0xff]
    %v286 = vld [vmem:[#allocation6 + $0x334] sm:$0xff]
    %v287 = vld [vmem:[#allocation6 + $0x33c] sm:$0xff]
    %v288 = vld [vmem:[#allocation6 + $0x344] sm:$0xf]
    %v289 = vld [vmem:[#allocation6 + $0x348] sm:$0xff]
    %v290 = vld [vmem:[#allocation6 + $0x350] sm:$0xff]
    %v291 = vld [vmem:[#allocation6 + $0x358] sm:$0xff]
    %v292 = vld [vmem:[#allocation6 + $0x360] sm:$0xff]
    %v293 = vld [vmem:[#allocation6 + $0x368] sm:$0xff]
    %v294 = vld [vmem:[#allocation6 + $0x370] sm:$0xff]
    %v295 = vld [vmem:[#allocation6 + $0x378] sm:$0xff]
    %v296 = vld [vmem:[#allocation6 + $0x380] sm:$0xff]
    %v297 = vld [vmem:[#allocation6 + $0x388] sm:$0xff]
    %v298 = vld [vmem:[#allocation6 + $0x390] sm:$0xff]
    %v299 = vld [vmem:[#allocation6 + $0x398] sm:$0xf]
    %v300 = vld [vmem:[#allocation6 + $0x39c] sm:$0xff]
    %v301 = vld [vmem:[#allocation6 + $0x3a4] sm:$0xff]
    %v302 = vld [vmem:[#allocation6 + $0x3ac] sm:$0xff]
    %v303 = vld [vmem:[#allocation6 + $0x3b4] sm:$0xff]
    %v304 = vld [vmem:[#allocation6 + $0x3bc] sm:$0xff]
    %v305 = vld [vmem:[#allocation6 + $0x3c4] sm:$0xff]
    %v306 = vld [vmem:[#allocation6 + $0x3cc] sm:$0xff]
    %v307 = vld [vmem:[#allocation6 + $0x3d4] sm:$0xff]
    %v308 = vld [vmem:[#allocation6 + $0x3dc] sm:$0xff]
    %v309 = vld [vmem:[#allocation6 + $0x3e4] sm:$0xff]
    %v310 = vld [vmem:[#allocation6 + $0x3ec] sm:$0xf]
    %v311 = vld [vmem:[#allocation6 + $0x3f0] sm:$0xff]
    %v312 = vld [vmem:[#allocation6 + $0x3f8] sm:$0xff]
    %v313 = vld [vmem:[#allocation6 + $0x400] sm:$0xff]
    %v314 = vld [vmem:[#allocation6 + $0x408] sm:$0xff]
    %v315 = vld [vmem:[#allocation6 + $0x410] sm:$0xff]
    %v316 = vld [vmem:[#allocation6 + $0x418] sm:$0xff]
    %v317 = vld [vmem:[#allocation6 + $0x420] sm:$0xff]
    %v318 = vld [vmem:[#allocation6 + $0x428] sm:$0xff]
    %v319 = vld [vmem:[#allocation6 + $0x430] sm:$0xff]
    %v320 = vld [vmem:[#allocation6 + $0x438] sm:$0xff]
    %v321 = vld [vmem:[#allocation6 + $0x440] sm:$0xf]
    %v322 = vld [vmem:[#allocation6 + $0x444] sm:$0xff]
    %v323 = vld [vmem:[#allocation6 + $0x44c] sm:$0xff]
    %v324 = vld [vmem:[#allocation6 + $0x454] sm:$0xff]
    %v325 = vld [vmem:[#allocation6 + $0x45c] sm:$0xff]
    %v326 = vld [vmem:[#allocation6 + $0x464] sm:$0xff]
    %v327 = vld [vmem:[#allocation6 + $0x46c] sm:$0xff]
    %v328 = vld [vmem:[#allocation6 + $0x474] sm:$0xff]
    %v329 = vld [vmem:[#allocation6 + $0x47c] sm:$0xff]
    %v330 = vld [vmem:[#allocation6 + $0x484] sm:$0xff]
    %v331 = vld [vmem:[#allocation6 + $0x48c] sm:$0xff]
    %v332 = vld [vmem:[#allocation6 + $0x494] sm:$0xf]
    %v333 = vld [vmem:[#allocation6 + $0x498] sm:$0xff]
    %v334 = vld [vmem:[#allocation6 + $0x4a0] sm:$0xff]
    %v335 = vld [vmem:[#allocation6 + $0x4a8] sm:$0xff]
    %v336 = vld [vmem:[#allocation6 + $0x4b0] sm:$0xff]
    %v337 = vld [vmem:[#allocation6 + $0x4b8] sm:$0xff]
    %v338 = vld [vmem:[#allocation6 + $0x4c0] sm:$0xff]
    %v339 = vld [vmem:[#allocation6 + $0x4c8] sm:$0xff]
    %v340 = vld [vmem:[#allocation6 + $0x4d0] sm:$0xff]
    %v341 = vld [vmem:[#allocation6 + $0x4d8] sm:$0xff]
    %v342 = vld [vmem:[#allocation6 + $0x4e0] sm:$0xff]
    %v343 = vld [vmem:[#allocation6 + $0x4e8] sm:$0xf]
    %v344 = vld [vmem:[#allocation6 + $0x4ec] sm:$0xff]
    %v345 = vld [vmem:[#allocation6 + $0x4f4] sm:$0xff]
    %v346 = vld [vmem:[#allocation6 + $0x4fc] sm:$0xff]
    %v347 = vld [vmem:[#allocation6 + $0x504] sm:$0xff]
    %v348 = vld [vmem:[#allocation6 + $0x50c] sm:$0xff]
    %v349 = vld [vmem:[#allocation6 + $0x514] sm:$0xff]
    %v350 = vld [vmem:[#allocation6 + $0x51c] sm:$0xff]
    %v351 = vld [vmem:[#allocation6 + $0x524] sm:$0xff]
    %v352 = vld [vmem:[#allocation6 + $0x52c] sm:$0xff]
    %v353 = vld [vmem:[#allocation6 + $0x534] sm:$0xff]
    %v354 = vld [vmem:[#allocation6 + $0x53c] sm:$0xf]
    %v355 = vld [vmem:[%s5] sm:$0xff]
    %v356 = vld [vmem:[%s5 + $0x8] sm:$0xff]
    %v357 = vld [vmem:[%s5 + $0x10] sm:$0x1f]
    %v361 = vlaneseq
    %v362 = vshrl.u32 %v361, 7
    %v363 = vsub.s32 0, %v362
    %v364 = vrot.slane %v355, %v363
    %v365 = vlaneseq
    %v366 = vshrl.u32 %v365, 7
    %v367 = vsub.s32 1, %v366
    %v368 = vrot.slane %v355, %v367
    %v369 = vlaneseq
    %v370 = vshrl.u32 %v369, 7
    %v371 = vsub.s32 2, %v370
    %v372 = vrot.slane %v355, %v371
    %v373 = vlaneseq
    %v374 = vshrl.u32 %v373, 7
    %v375 = vsub.s32 3, %v374
    %v376 = vrot.slane %v355, %v375
    %v377 = vlaneseq
    %v378 = vshrl.u32 %v377, 7
    %v379 = vsub.s32 4, %v378
    %v380 = vrot.slane %v355, %v379
    %v381 = vlaneseq
    %v382 = vshrl.u32 %v381, 7
    %v383 = vsub.s32 5, %v382
    %v384 = vrot.slane %v355, %v383
    %v385 = vlaneseq
    %v386 = vshrl.u32 %v385, 7
    %v387 = vsub.s32 6, %v386
    %v388 = vrot.slane %v355, %v387
    %v389 = vlaneseq
    %v390 = vshrl.u32 %v389, 7
    %v391 = vsub.s32 7, %v390
    %v392 = vrot.slane %v355, %v391
    %v393 = vlaneseq
    %v394 = vshrl.u32 %v393, 7
    %v395 = vsub.s32 0, %v394
    %v396 = vrot.slane %v356, %v395
    %v397 = vlaneseq
    %v398 = vshrl.u32 %v397, 7
    %v399 = vsub.s32 1, %v398
    %v400 = vrot.slane %v356, %v399
    %v401 = vlaneseq
    %v402 = vshrl.u32 %v401, 7
    %v403 = vsub.s32 2, %v402
    %v404 = vrot.slane %v356, %v403
    %v405 = vlaneseq
    %v406 = vshrl.u32 %v405, 7
    %v407 = vsub.s32 3, %v406
    %v408 = vrot.slane %v356, %v407
    %v409 = vlaneseq
    %v410 = vshrl.u32 %v409, 7
    %v411 = vsub.s32 4, %v410
    %v412 = vrot.slane %v356, %v411
    %v413 = vlaneseq
    %v414 = vshrl.u32 %v413, 7
    %v415 = vsub.s32 5, %v414
    %v416 = vrot.slane %v356, %v415
    %v417 = vlaneseq
    %v418 = vshrl.u32 %v417, 7
    %v419 = vsub.s32 6, %v418
    %v420 = vrot.slane %v356, %v419
    %v421 = vlaneseq
    %v422 = vshrl.u32 %v421, 7
    %v423 = vsub.s32 7, %v422
    %v424 = vrot.slane %v356, %v423
    %v425 = vlaneseq
    %v426 = vshrl.u32 %v425, 7
    %v427 = vsub.s32 0, %v426
    %v428 = vrot.slane %v357, %v427
    %v429 = vlaneseq
    %v430 = vshrl.u32 %v429, 7
    %v431 = vsub.s32 1, %v430
    %v432 = vrot.slane %v357, %v431
    %v433 = vlaneseq
    %v434 = vshrl.u32 %v433, 7
    %v435 = vsub.s32 2, %v434
    %v436 = vrot.slane %v357, %v435
    %v437 = vlaneseq
    %v438 = vshrl.u32 %v437, 7
    %v439 = vsub.s32 3, %v438
    %v440 = vrot.slane %v357, %v439
    %v441 = vlaneseq
    %v442 = vshrl.u32 %v441, 7
    %v443 = vsub.s32 4, %v442
    %v444 = vrot.slane %v357, %v443
    %v642 = vunpack.c.l.b16 %v179
    %v643 = vunpack.c.h.b16 %v179
    %v644 = vunpack.c.l.b16 %v180
    %v645 = vunpack.c.h.b16 %v180
    %v646 = vunpack.c.l.b16 %v181
    %v647 = vunpack.c.h.b16 %v181
    %v648 = vunpack.c.l.b16 %v182
    %v649 = vunpack.c.h.b16 %v182
    %v650 = vunpack.c.l.b16 %v183
    %v651 = vunpack.c.h.b16 %v183
    %v652 = vunpack.c.l.b16 %v184
    %v653 = vunpack.c.h.b16 %v184
    %v654 = vunpack.c.l.b16 %v185
    %v655 = vunpack.c.h.b16 %v185
    %v656 = vunpack.c.l.b16 %v186
    %v657 = vunpack.c.h.b16 %v186
    %v658 = vunpack.c.l.b16 %v187
    %v659 = vunpack.c.h.b16 %v187
    %v660 = vunpack.c.l.b16 %v188
    %v661 = vunpack.c.h.b16 %v188
    %v662 = vunpack.c.l.b16 %v189
    %v663 = vunpack.c.l.b16 %v190
    %v664 = vunpack.c.h.b16 %v190
    %v665 = vunpack.c.l.b16 %v191
    %v666 = vunpack.c.h.b16 %v191
    %v667 = vunpack.c.l.b16 %v192
    %v668 = vunpack.c.h.b16 %v192
    %v669 = vunpack.c.l.b16 %v193
    %v670 = vunpack.c.h.b16 %v193
    %v671 = vunpack.c.l.b16 %v194
    %v672 = vunpack.c.h.b16 %v194
    %v673 = vunpack.c.l.b16 %v195
    %v674 = vunpack.c.h.b16 %v195
    %v675 = vunpack.c.l.b16 %v196
    %v676 = vunpack.c.h.b16 %v196
    %v677 = vunpack.c.l.b16 %v197
    %v678 = vunpack.c.h.b16 %v197
    %v679 = vunpack.c.l.b16 %v198
    %v680 = vunpack.c.h.b16 %v198
    %v681 = vunpack.c.l.b16 %v199
    %v682 = vunpack.c.h.b16 %v199
    %v683 = vunpack.c.l.b16 %v200
    %v684 = vunpack.c.l.b16 %v201
    %v685 = vunpack.c.h.b16 %v201
    %v686 = vunpack.c.l.b16 %v202
    %v687 = vunpack.c.h.b16 %v202
    %v688 = vunpack.c.l.b16 %v203
    %v689 = vunpack.c.h.b16 %v203
    %v690 = vunpack.c.l.b16 %v204
    %v691 = vunpack.c.h.b16 %v204
    %v692 = vunpack.c.l.b16 %v205
    %v693 = vunpack.c.h.b16 %v205
    %v694 = vunpack.c.l.b16 %v206
    %v695 = vunpack.c.h.b16 %v206
    %v696 = vunpack.c.l.b16 %v207
    %v697 = vunpack.c.h.b16 %v207
    %v698 = vunpack.c.l.b16 %v208
    %v699 = vunpack.c.h.b16 %v208
    %v700 = vunpack.c.l.b16 %v209
    %v701 = vunpack.c.h.b16 %v209
    %v702 = vunpack.c.l.b16 %v210
    %v703 = vunpack.c.h.b16 %v210
    %v704 = vunpack.c.l.b16 %v211
    %v705 = vunpack.c.l.b16 %v212
    %v706 = vunpack.c.h.b16 %v212
    %v707 = vunpack.c.l.b16 %v213
    %v708 = vunpack.c.h.b16 %v213
    %v709 = vunpack.c.l.b16 %v214
    %v710 = vunpack.c.h.b16 %v214
    %v711 = vunpack.c.l.b16 %v215
    %v712 = vunpack.c.h.b16 %v215
    %v713 = vunpack.c.l.b16 %v216
    %v714 = vunpack.c.h.b16 %v216
    %v715 = vunpack.c.l.b16 %v217
    %v716 = vunpack.c.h.b16 %v217
    %v717 = vunpack.c.l.b16 %v218
    %v718 = vunpack.c.h.b16 %v218
    %v719 = vunpack.c.l.b16 %v219
    %v720 = vunpack.c.h.b16 %v219
    %v721 = vunpack.c.l.b16 %v220
    %v722 = vunpack.c.h.b16 %v220
    %v723 = vunpack.c.l.b16 %v221
    %v724 = vunpack.c.h.b16 %v221
    %v725 = vunpack.c.l.b16 %v222
    %v726 = vunpack.c.l.b16 %v223
    %v727 = vunpack.c.h.b16 %v223
    %v728 = vunpack.c.l.b16 %v224
    %v729 = vunpack.c.h.b16 %v224
    %v730 = vunpack.c.l.b16 %v225
    %v731 = vunpack.c.h.b16 %v225
    %v732 = vunpack.c.l.b16 %v226
    %v733 = vunpack.c.h.b16 %v226
    %v734 = vunpack.c.l.b16 %v227
    %v735 = vunpack.c.h.b16 %v227
    %v736 = vunpack.c.l.b16 %v228
    %v737 = vunpack.c.h.b16 %v228
    %v738 = vunpack.c.l.b16 %v229
    %v739 = vunpack.c.h.b16 %v229
    %v740 = vunpack.c.l.b16 %v230
    %v741 = vunpack.c.h.b16 %v230
    %v742 = vunpack.c.l.b16 %v231
    %v743 = vunpack.c.h.b16 %v231
    %v744 = vunpack.c.l.b16 %v232
    %v745 = vunpack.c.h.b16 %v232
    %v746 = vunpack.c.l.b16 %v233
    %v747 = vunpack.c.l.b16 %v234
    %v748 = vunpack.c.h.b16 %v234
    %v749 = vunpack.c.l.b16 %v235
    %v750 = vunpack.c.h.b16 %v235
    %v751 = vunpack.c.l.b16 %v236
    %v752 = vunpack.c.h.b16 %v236
    %v753 = vunpack.c.l.b16 %v237
    %v754 = vunpack.c.h.b16 %v237
    %v755 = vunpack.c.l.b16 %v238
    %v756 = vunpack.c.h.b16 %v238
    %v757 = vunpack.c.l.b16 %v239
    %v758 = vunpack.c.h.b16 %v239
    %v759 = vunpack.c.l.b16 %v240
    %v760 = vunpack.c.h.b16 %v240
    %v761 = vunpack.c.l.b16 %v241
    %v762 = vunpack.c.h.b16 %v241
    %v763 = vunpack.c.l.b16 %v242
    %v764 = vunpack.c.h.b16 %v242
    %v765 = vunpack.c.l.b16 %v243
    %v766 = vunpack.c.h.b16 %v243
    %v767 = vunpack.c.l.b16 %v244
    %v768 = vunpack.c.l.b16 %v245
    %v769 = vunpack.c.h.b16 %v245
    %v770 = vunpack.c.l.b16 %v246
    %v771 = vunpack.c.h.b16 %v246
    %v772 = vunpack.c.l.b16 %v247
    %v773 = vunpack.c.h.b16 %v247
    %v774 = vunpack.c.l.b16 %v248
    %v775 = vunpack.c.h.b16 %v248
    %v776 = vunpack.c.l.b16 %v249
    %v777 = vunpack.c.h.b16 %v249
    %v778 = vunpack.c.l.b16 %v250
    %v779 = vunpack.c.h.b16 %v250
    %v780 = vunpack.c.l.b16 %v251
    %v781 = vunpack.c.h.b16 %v251
    %v782 = vunpack.c.l.b16 %v252
    %v783 = vunpack.c.h.b16 %v252
    %v784 = vunpack.c.l.b16 %v253
    %v785 = vunpack.c.h.b16 %v253
    %v786 = vunpack.c.l.b16 %v254
    %v787 = vunpack.c.h.b16 %v254
    %v788 = vunpack.c.l.b16 %v255
    %v789 = vunpack.c.l.b16 %v256
    %v790 = vunpack.c.h.b16 %v256
    %v791 = vunpack.c.l.b16 %v257
    %v792 = vunpack.c.h.b16 %v257
    %v793 = vunpack.c.l.b16 %v258
    %v794 = vunpack.c.h.b16 %v258
    %v795 = vunpack.c.l.b16 %v259
    %v796 = vunpack.c.h.b16 %v259
    %v797 = vunpack.c.l.b16 %v260
    %v798 = vunpack.c.h.b16 %v260
    %v799 = vunpack.c.l.b16 %v261
    %v800 = vunpack.c.h.b16 %v261
    %v801 = vunpack.c.l.b16 %v262
    %v802 = vunpack.c.h.b16 %v262
    %v803 = vunpack.c.l.b16 %v263
    %v804 = vunpack.c.h.b16 %v263
    %v805 = vunpack.c.l.b16 %v264
    %v806 = vunpack.c.h.b16 %v264
    %v807 = vunpack.c.l.b16 %v265
    %v808 = vunpack.c.h.b16 %v265
    %v809 = vunpack.c.l.b16 %v266
    %v810 = vunpack.c.l.b16 %v267
    %v811 = vunpack.c.h.b16 %v267
    %v812 = vunpack.c.l.b16 %v268
    %v813 = vunpack.c.h.b16 %v268
    %v814 = vunpack.c.l.b16 %v269
    %v815 = vunpack.c.h.b16 %v269
    %v816 = vunpack.c.l.b16 %v270
    %v817 = vunpack.c.h.b16 %v270
    %v818 = vunpack.c.l.b16 %v271
    %v819 = vunpack.c.h.b16 %v271
    %v820 = vunpack.c.l.b16 %v272
    %v821 = vunpack.c.h.b16 %v272
    %v822 = vunpack.c.l.b16 %v273
    %v823 = vunpack.c.h.b16 %v273
    %v824 = vunpack.c.l.b16 %v274
    %v825 = vunpack.c.h.b16 %v274
    %v826 = vunpack.c.l.b16 %v275
    %v827 = vunpack.c.h.b16 %v275
    %v828 = vunpack.c.l.b16 %v276
    %v829 = vunpack.c.h.b16 %v276
    %v830 = vunpack.c.l.b16 %v277
    %v831 = vunpack.c.l.b16 %v278
    %v832 = vunpack.c.h.b16 %v278
    %v833 = vunpack.c.l.b16 %v279
    %v834 = vunpack.c.h.b16 %v279
    %v835 = vunpack.c.l.b16 %v280
    %v836 = vunpack.c.h.b16 %v280
    %v837 = vunpack.c.l.b16 %v281
    %v838 = vunpack.c.h.b16 %v281
    %v839 = vunpack.c.l.b16 %v282
    %v840 = vunpack.c.h.b16 %v282
    %v841 = vunpack.c.l.b16 %v283
    %v842 = vunpack.c.h.b16 %v283
    %v843 = vunpack.c.l.b16 %v284
    %v844 = vunpack.c.h.b16 %v284
    %v845 = vunpack.c.l.b16 %v285
    %v846 = vunpack.c.h.b16 %v285
    %v847 = vunpack.c.l.b16 %v286
    %v848 = vunpack.c.h.b16 %v286
    %v849 = vunpack.c.l.b16 %v287
    %v850 = vunpack.c.h.b16 %v287
    %v851 = vunpack.c.l.b16 %v288
    %v852 = vunpack.c.l.b16 %v289
    %v853 = vunpack.c.h.b16 %v289
    %v854 = vunpack.c.l.b16 %v290
    %v855 = vunpack.c.h.b16 %v290
    %v856 = vunpack.c.l.b16 %v291
    %v857 = vunpack.c.h.b16 %v291
    %v858 = vunpack.c.l.b16 %v292
    %v859 = vunpack.c.h.b16 %v292
    %v860 = vunpack.c.l.b16 %v293
    %v861 = vunpack.c.h.b16 %v293
    %v862 = vunpack.c.l.b16 %v294
    %v863 = vunpack.c.h.b16 %v294
    %v864 = vunpack.c.l.b16 %v295
    %v865 = vunpack.c.h.b16 %v295
    %v866 = vunpack.c.l.b16 %v296
    %v867 = vunpack.c.h.b16 %v296
    %v868 = vunpack.c.l.b16 %v297
    %v869 = vunpack.c.h.b16 %v297
    %v870 = vunpack.c.l.b16 %v298
    %v871 = vunpack.c.h.b16 %v298
    %v872 = vunpack.c.l.b16 %v299
    %v873 = vunpack.c.l.b16 %v300
    %v874 = vunpack.c.h.b16 %v300
    %v875 = vunpack.c.l.b16 %v301
    %v876 = vunpack.c.h.b16 %v301
    %v877 = vunpack.c.l.b16 %v302
    %v878 = vunpack.c.h.b16 %v302
    %v879 = vunpack.c.l.b16 %v303
    %v880 = vunpack.c.h.b16 %v303
    %v881 = vunpack.c.l.b16 %v304
    %v882 = vunpack.c.h.b16 %v304
    %v883 = vunpack.c.l.b16 %v305
    %v884 = vunpack.c.h.b16 %v305
    %v885 = vunpack.c.l.b16 %v306
    %v886 = vunpack.c.h.b16 %v306
    %v887 = vunpack.c.l.b16 %v307
    %v888 = vunpack.c.h.b16 %v307
    %v889 = vunpack.c.l.b16 %v308
    %v890 = vunpack.c.h.b16 %v308
    %v891 = vunpack.c.l.b16 %v309
    %v892 = vunpack.c.h.b16 %v309
    %v893 = vunpack.c.l.b16 %v310
    %v894 = vunpack.c.l.b16 %v311
    %v895 = vunpack.c.h.b16 %v311
    %v896 = vunpack.c.l.b16 %v312
    %v897 = vunpack.c.h.b16 %v312
    %v898 = vunpack.c.l.b16 %v313
    %v899 = vunpack.c.h.b16 %v313
    %v900 = vunpack.c.l.b16 %v314
    %v901 = vunpack.c.h.b16 %v314
    %v902 = vunpack.c.l.b16 %v315
    %v903 = vunpack.c.h.b16 %v315
    %v904 = vunpack.c.l.b16 %v316
    %v905 = vunpack.c.h.b16 %v316
    %v906 = vunpack.c.l.b16 %v317
    %v907 = vunpack.c.h.b16 %v317
    %v908 = vunpack.c.l.b16 %v318
    %v909 = vunpack.c.h.b16 %v318
    %v910 = vunpack.c.l.b16 %v319
    %v911 = vunpack.c.h.b16 %v319
    %v912 = vunpack.c.l.b16 %v320
    %v913 = vunpack.c.h.b16 %v320
    %v914 = vunpack.c.l.b16 %v321
    %v915 = vunpack.c.l.b16 %v322
    %v916 = vunpack.c.h.b16 %v322
    %v917 = vunpack.c.l.b16 %v323
    %v918 = vunpack.c.h.b16 %v323
    %v919 = vunpack.c.l.b16 %v324
    %v920 = vunpack.c.h.b16 %v324
    %v921 = vunpack.c.l.b16 %v325
    %v922 = vunpack.c.h.b16 %v325
    %v923 = vunpack.c.l.b16 %v326
    %v924 = vunpack.c.h.b16 %v326
    %v925 = vunpack.c.l.b16 %v327
    %v926 = vunpack.c.h.b16 %v327
    %v927 = vunpack.c.l.b16 %v328
    %v928 = vunpack.c.h.b16 %v328
    %v929 = vunpack.c.l.b16 %v329
    %v930 = vunpack.c.h.b16 %v329
    %v931 = vunpack.c.l.b16 %v330
    %v932 = vunpack.c.h.b16 %v330
    %v933 = vunpack.c.l.b16 %v331
    %v934 = vunpack.c.h.b16 %v331
    %v935 = vunpack.c.l.b16 %v332
    %v936 = vunpack.c.l.b16 %v333
    %v937 = vunpack.c.h.b16 %v333
    %v938 = vunpack.c.l.b16 %v334
    %v939 = vunpack.c.h.b16 %v334
    %v940 = vunpack.c.l.b16 %v335
    %v941 = vunpack.c.h.b16 %v335
    %v942 = vunpack.c.l.b16 %v336
    %v943 = vunpack.c.h.b16 %v336
    %v944 = vunpack.c.l.b16 %v337
    %v945 = vunpack.c.h.b16 %v337
    %v946 = vunpack.c.l.b16 %v338
    %v947 = vunpack.c.h.b16 %v338
    %v948 = vunpack.c.l.b16 %v339
    %v949 = vunpack.c.h.b16 %v339
    %v950 = vunpack.c.l.b16 %v340
    %v951 = vunpack.c.h.b16 %v340
    %v952 = vunpack.c.l.b16 %v341
    %v953 = vunpack.c.h.b16 %v341
    %v954 = vunpack.c.l.b16 %v342
    %v955 = vunpack.c.h.b16 %v342
    %v956 = vunpack.c.l.b16 %v343
    %v957 = vunpack.c.l.b16 %v344
    %v958 = vunpack.c.h.b16 %v344
    %v959 = vunpack.c.l.b16 %v345
    %v960 = vunpack.c.h.b16 %v345
    %v961 = vunpack.c.l.b16 %v346
    %v962 = vunpack.c.h.b16 %v346
    %v963 = vunpack.c.l.b16 %v347
    %v964 = vunpack.c.h.b16 %v347
    %v965 = vunpack.c.l.b16 %v348
    %v966 = vunpack.c.h.b16 %v348
    %v967 = vunpack.c.l.b16 %v349
    %v968 = vunpack.c.h.b16 %v349
    %v969 = vunpack.c.l.b16 %v350
    %v970 = vunpack.c.h.b16 %v350
    %v971 = vunpack.c.l.b16 %v351
    %v972 = vunpack.c.h.b16 %v351
    %v973 = vunpack.c.l.b16 %v352
    %v974 = vunpack.c.h.b16 %v352
    %v975 = vunpack.c.l.b16 %v353
    %v976 = vunpack.c.h.b16 %v353
    %v977 = vunpack.c.l.b16 %v354
    %v978 = vpack.c.b16 %v663, %v642
    %v979 = vpack.c.b16 %v664, %v643
    %v980 = vpack.c.b16 %v665, %v644
    %v981 = vpack.c.b16 %v666, %v645
    %v982 = vpack.c.b16 %v667, %v646
    %v983 = vpack.c.b16 %v668, %v647
    %v984 = vpack.c.b16 %v669, %v648
    %v985 = vpack.c.b16 %v670, %v649
    %v986 = vpack.c.b16 %v671, %v650
    %v987 = vpack.c.b16 %v672, %v651
    %v988 = vpack.c.b16 %v673, %v652
    %v989 = vpack.c.b16 %v674, %v653
    %v990 = vpack.c.b16 %v675, %v654
    %v991 = vpack.c.b16 %v676, %v655
    %v992 = vpack.c.b16 %v677, %v656
    %v993 = vpack.c.b16 %v678, %v657
    %v994 = vpack.c.b16 %v679, %v658
    %v995 = vpack.c.b16 %v680, %v659
    %v996 = vpack.c.b16 %v681, %v660
    %v997 = vpack.c.b16 %v682, %v661
    %v998 = vpack.c.b16 %v683, %v662
    %v999 = vpack.c.b16 %v705, %v684
    %v1000 = vpack.c.b16 %v706, %v685
    %v1001 = vpack.c.b16 %v707, %v686
    %v1002 = vpack.c.b16 %v708, %v687
    %v1003 = vpack.c.b16 %v709, %v688
    %v1004 = vpack.c.b16 %v710, %v689
    %v1005 = vpack.c.b16 %v711, %v690
    %v1006 = vpack.c.b16 %v712, %v691
    %v1007 = vpack.c.b16 %v713, %v692
    %v1008 = vpack.c.b16 %v714, %v693
    %v1009 = vpack.c.b16 %v715, %v694
    %v1010 = vpack.c.b16 %v716, %v695
    %v1011 = vpack.c.b16 %v717, %v696
    %v1012 = vpack.c.b16 %v718, %v697
    %v1013 = vpack.c.b16 %v719, %v698
    %v1014 = vpack.c.b16 %v720, %v699
    %v1015 = vpack.c.b16 %v721, %v700
    %v1016 = vpack.c.b16 %v722, %v701
    %v1017 = vpack.c.b16 %v723, %v702
    %v1018 = vpack.c.b16 %v724, %v703
    %v1019 = vpack.c.b16 %v725, %v704
    %v1020 = vpack.c.b16 %v747, %v726
    %v1021 = vpack.c.b16 %v748, %v727
    %v1022 = vpack.c.b16 %v749, %v728
    %v1023 = vpack.c.b16 %v750, %v729
    %v1024 = vpack.c.b16 %v751, %v730
    %v1025 = vpack.c.b16 %v752, %v731
    %v1026 = vpack.c.b16 %v753, %v732
    %v1027 = vpack.c.b16 %v754, %v733
    %v1028 = vpack.c.b16 %v755, %v734
    %v1029 = vpack.c.b16 %v756, %v735
    %v1030 = vpack.c.b16 %v757, %v736
    %v1031 = vpack.c.b16 %v758, %v737
    %v1032 = vpack.c.b16 %v759, %v738
    %v1033 = vpack.c.b16 %v760, %v739
    %v1034 = vpack.c.b16 %v761, %v740
    %v1035 = vpack.c.b16 %v762, %v741
    %v1036 = vpack.c.b16 %v763, %v742
    %v1037 = vpack.c.b16 %v764, %v743
    %v1038 = vpack.c.b16 %v765, %v744
    %v1039 = vpack.c.b16 %v766, %v745
    %v1040 = vpack.c.b16 %v767, %v746
    %v1041 = vpack.c.b16 %v789, %v768
    %v1042 = vpack.c.b16 %v790, %v769
    %v1043 = vpack.c.b16 %v791, %v770
    %v1044 = vpack.c.b16 %v792, %v771
    %v1045 = vpack.c.b16 %v793, %v772
    %v1046 = vpack.c.b16 %v794, %v773
    %v1047 = vpack.c.b16 %v795, %v774
    %v1048 = vpack.c.b16 %v796, %v775
    %v1049 = vpack.c.b16 %v797, %v776
    %v1050 = vpack.c.b16 %v798, %v777
    %v1051 = vpack.c.b16 %v799, %v778
    %v1052 = vpack.c.b16 %v800, %v779
    %v1053 = vpack.c.b16 %v801, %v780
    %v1054 = vpack.c.b16 %v802, %v781
    %v1055 = vpack.c.b16 %v803, %v782
    %v1056 = vpack.c.b16 %v804, %v783
    %v1057 = vpack.c.b16 %v805, %v784
    %v1058 = vpack.c.b16 %v806, %v785
    %v1059 = vpack.c.b16 %v807, %v786
    %v1060 = vpack.c.b16 %v808, %v787
    %v1061 = vpack.c.b16 %v809, %v788
    %v1062 = vpack.c.b16 %v831, %v810
    %v1063 = vpack.c.b16 %v832, %v811
    %v1064 = vpack.c.b16 %v833, %v812
    %v1065 = vpack.c.b16 %v834, %v813
    %v1066 = vpack.c.b16 %v835, %v814
    %v1067 = vpack.c.b16 %v836, %v815
    %v1068 = vpack.c.b16 %v837, %v816
    %v1069 = vpack.c.b16 %v838, %v817
    %v1070 = vpack.c.b16 %v839, %v818
    %v1071 = vpack.c.b16 %v840, %v819
    %v1072 = vpack.c.b16 %v841, %v820
    %v1073 = vpack.c.b16 %v842, %v821
    %v1074 = vpack.c.b16 %v843, %v822
    %v1075 = vpack.c.b16 %v844, %v823
    %v1076 = vpack.c.b16 %v845, %v824
    %v1077 = vpack.c.b16 %v846, %v825
    %v1078 = vpack.c.b16 %v847, %v826
    %v1079 = vpack.c.b16 %v848, %v827
    %v1080 = vpack.c.b16 %v849, %v828
    %v1081 = vpack.c.b16 %v850, %v829
    %v1082 = vpack.c.b16 %v851, %v830
    %v1083 = vpack.c.b16 %v873, %v852
    %v1084 = vpack.c.b16 %v874, %v853
    %v1085 = vpack.c.b16 %v875, %v854
    %v1086 = vpack.c.b16 %v876, %v855
    %v1087 = vpack.c.b16 %v877, %v856
    %v1088 = vpack.c.b16 %v878, %v857
    %v1089 = vpack.c.b16 %v879, %v858
    %v1090 = vpack.c.b16 %v880, %v859
    %v1091 = vpack.c.b16 %v881, %v860
    %v1092 = vpack.c.b16 %v882, %v861
    %v1093 = vpack.c.b16 %v883, %v862
    %v1094 = vpack.c.b16 %v884, %v863
    %v1095 = vpack.c.b16 %v885, %v864
    %v1096 = vpack.c.b16 %v886, %v865
    %v1097 = vpack.c.b16 %v887, %v866
    %v1098 = vpack.c.b16 %v888, %v867
    %v1099 = vpack.c.b16 %v889, %v868
    %v1100 = vpack.c.b16 %v890, %v869
    %v1101 = vpack.c.b16 %v891, %v870
    %v1102 = vpack.c.b16 %v892, %v871
    %v1103 = vpack.c.b16 %v893, %v872
    %v1104 = vpack.c.b16 %v915, %v894
    %v1105 = vpack.c.b16 %v916, %v895
    %v1106 = vpack.c.b16 %v917, %v896
    %v1107 = vpack.c.b16 %v918, %v897
    %v1108 = vpack.c.b16 %v919, %v898
    %v1109 = vpack.c.b16 %v920, %v899
    %v1110 = vpack.c.b16 %v921, %v900
    %v1111 = vpack.c.b16 %v922, %v901
    %v1112 = vpack.c.b16 %v923, %v902
    %v1113 = vpack.c.b16 %v924, %v903
    %v1114 = vpack.c.b16 %v925, %v904
    %v1115 = vpack.c.b16 %v926, %v905
    %v1116 = vpack.c.b16 %v927, %v906
    %v1117 = vpack.c.b16 %v928, %v907
    %v1118 = vpack.c.b16 %v929, %v908
    %v1119 = vpack.c.b16 %v930, %v909
    %v1120 = vpack.c.b16 %v931, %v910
    %v1121 = vpack.c.b16 %v932, %v911
    %v1122 = vpack.c.b16 %v933, %v912
    %v1123 = vpack.c.b16 %v934, %v913
    %v1124 = vpack.c.b16 %v935, %v914
    %v1125 = vpack.c.b16 %v957, %v936
    %v1126 = vpack.c.b16 %v958, %v937
    %v1127 = vpack.c.b16 %v959, %v938
    %v1128 = vpack.c.b16 %v960, %v939
    %v1129 = vpack.c.b16 %v961, %v940
    %v1130 = vpack.c.b16 %v962, %v941
    %v1131 = vpack.c.b16 %v963, %v942
    %v1132 = vpack.c.b16 %v964, %v943
    %v1133 = vpack.c.b16 %v965, %v944
    %v1134 = vpack.c.b16 %v966, %v945
    %v1135 = vpack.c.b16 %v967, %v946
    %v1136 = vpack.c.b16 %v968, %v947
    %v1137 = vpack.c.b16 %v969, %v948
    %v1138 = vpack.c.b16 %v970, %v949
    %v1139 = vpack.c.b16 %v971, %v950
    %v1140 = vpack.c.b16 %v972, %v951
    %v1141 = vpack.c.b16 %v973, %v952
    %v1142 = vpack.c.b16 %v974, %v953
    %v1143 = vpack.c.b16 %v975, %v954
    %v1144 = vpack.c.b16 %v976, %v955
    %v1145 = vpack.c.b16 %v977, %v956
    %1314 = vmatprep.subr.bf16.mxu0 %v979
    %1315 = vmatpush1.bf16.msra.mxu0 %v978
    %1316 = vmatprep.subr.bf16.mxu0 %v1000
    %1317 = vmatpush1.bf16.msra.mxu0 %v999
    %1318 = vmatprep.subr.bf16.mxu0 %v1021
    %1319 = vmatpush1.bf16.msra.mxu0 %v1020
    %1320 = vmatprep.subr.bf16.mxu0 %v1042
    %1321 = vmatpush1.bf16.msra.mxu0 %v1041
    %1322 = vmatprep.subr.bf16.mxu0 %v1063
    %1323 = vmatpush1.bf16.msra.mxu0 %v1062
    %1324 = vmatprep.subr.bf16.mxu0 %v1084
    %1325 = vmatpush1.bf16.msra.mxu0 %v1083
    %1326 = vmatprep.subr.bf16.mxu0 %v1105
    %1327 = vmatpush1.bf16.msra.mxu0 %v1104
    %1328 = vmatprep.subr.bf16.mxu0 %v1126
    %1329 = vmatpush1.bf16.msra.mxu0 %v1125
    %1330 = vmatprep.subr.bf16.mxu0 0
    %1331 = vmatpush1.bf16.msra.mxu0 0
    %1332 = vmatprep.subr.bf16.mxu0 0
    %1333 = vmatpush1.bf16.msra.mxu0 0
    %1334 = vmatprep.subr.bf16.mxu0 0
    %1335 = vmatpush1.bf16.msra.mxu0 0
    %1336 = vmatprep.subr.bf16.mxu0 0
    %1337 = vmatpush1.bf16.msra.mxu0 0
    %1338 = vmatprep.subr.bf16.mxu0 0
    %1339 = vmatpush1.bf16.msra.mxu0 0
    %1340 = vmatprep.subr.bf16.mxu0 0
    %1341 = vmatpush1.bf16.msra.mxu0 0
    %1342 = vmatprep.subr.bf16.mxu0 0
    %1343 = vmatpush1.bf16.msra.mxu0 0
    %1344 = vmatprep.subr.bf16.mxu0 0
    %1345 = vmatpush1.bf16.msra.mxu0 0
    %1346 = vmatprep.mubr.bf16.mxu0 0
    %1347 = vmatmul.mubr.bf16.gmra.mrb[0].mxu0 %v178
    %v1348 = vpop.f32.mrb[0].mxu0
    %v1349 = vadd.f32 %v364, %v1348
    %v1350 = vpop.f32.mrb[0].mxu0
    %v1351 = vadd.f32 %v368, %v1350
    %v1352 = vpop.f32.mrb[0].mxu0
    %v1353 = vpop.f32.mrb[0].mxu0
    %1354 = vdwg.mxu0
    %1355 = vmatprep.subr.bf16.mxu0 %v981
    %1356 = vmatpush1.bf16.msra.mxu0 %v980
    %1357 = vmatprep.subr.bf16.mxu0 %v1002
    %1358 = vmatpush1.bf16.msra.mxu0 %v1001
    %1359 = vmatprep.subr.bf16.mxu0 %v1023
    %1360 = vmatpush1.bf16.msra.mxu0 %v1022
    %1361 = vmatprep.subr.bf16.mxu0 %v1044
    %1362 = vmatpush1.bf16.msra.mxu0 %v1043
    %1363 = vmatprep.subr.bf16.mxu0 %v1065
    %1364 = vmatpush1.bf16.msra.mxu0 %v1064
    %1365 = vmatprep.subr.bf16.mxu0 %v1086
    %1366 = vmatpush1.bf16.msra.mxu0 %v1085
    %1367 = vmatprep.subr.bf16.mxu0 %v1107
    %1368 = vmatpush1.bf16.msra.mxu0 %v1106
    %1369 = vmatprep.subr.bf16.mxu0 %v1128
    %1370 = vmatpush1.bf16.msra.mxu0 %v1127
    %1371 = vmatprep.subr.bf16.mxu0 0
    %1372 = vmatpush1.bf16.msra.mxu0 0
    %1373 = vmatprep.subr.bf16.mxu0 0
    %1374 = vmatpush1.bf16.msra.mxu0 0
    %1375 = vmatprep.subr.bf16.mxu0 0
    %1376 = vmatpush1.bf16.msra.mxu0 0
    %1377 = vmatprep.subr.bf16.mxu0 0
    %1378 = vmatpush1.bf16.msra.mxu0 0
    %1379 = vmatprep.subr.bf16.mxu0 0
    %1380 = vmatpush1.bf16.msra.mxu0 0
    %1381 = vmatprep.subr.bf16.mxu0 0
    %1382 = vmatpush1.bf16.msra.mxu0 0
    %1383 = vmatprep.subr.bf16.mxu0 0
    %1384 = vmatpush1.bf16.msra.mxu0 0
    %1385 = vmatprep.subr.bf16.mxu0 0
    %1386 = vmatpush1.bf16.msra.mxu0 0
    %1387 = vmatprep.mubr.bf16.mxu0 0
    %1388 = vmatmul.mubr.bf16.gmra.mrb[0].mxu0 %v178
    %v1389 = vpop.f32.mrb[0].mxu0
    %v1390 = vadd.f32 %v372, %v1389
    %v1391 = vpop.f32.mrb[0].mxu0
    %v1392 = vadd.f32 %v376, %v1391
    %v1393 = vpop.f32.mrb[0].mxu0
    %v1394 = vpop.f32.mrb[0].mxu0
    %1395 = vdwg.mxu0
    %1396 = vmatprep.subr.bf16.mxu0 %v983
    %1397 = vmatpush1.bf16.msra.mxu0 %v982
    %1398 = vmatprep.subr.bf16.mxu0 %v1004
    %1399 = vmatpush1.bf16.msra.mxu0 %v1003
    %1400 = vmatprep.subr.bf16.mxu0 %v1025
    %1401 = vmatpush1.bf16.msra.mxu0 %v1024
    %1402 = vmatprep.subr.bf16.mxu0 %v1046
    %1403 = vmatpush1.bf16.msra.mxu0 %v1045
    %1404 = vmatprep.subr.bf16.mxu0 %v1067
    %1405 = vmatpush1.bf16.msra.mxu0 %v1066
    %1406 = vmatprep.subr.bf16.mxu0 %v1088
    %1407 = vmatpush1.bf16.msra.mxu0 %v1087
    %1408 = vmatprep.subr.bf16.mxu0 %v1109
    %1409 = vmatpush1.bf16.msra.mxu0 %v1108
    %1410 = vmatprep.subr.bf16.mxu0 %v1130
    %1411 = vmatpush1.bf16.msra.mxu0 %v1129
    %1412 = vmatprep.subr.bf16.mxu0 0
    %1413 = vmatpush1.bf16.msra.mxu0 0
    %1414 = vmatprep.subr.bf16.mxu0 0
    %1415 = vmatpush1.bf16.msra.mxu0 0
    %1416 = vmatprep.subr.bf16.mxu0 0
    %1417 = vmatpush1.bf16.msra.mxu0 0
    %1418 = vmatprep.subr.bf16.mxu0 0
    %1419 = vmatpush1.bf16.msra.mxu0 0
    %1420 = vmatprep.subr.bf16.mxu0 0
    %1421 = vmatpush1.bf16.msra.mxu0 0
    %1422 = vmatprep.subr.bf16.mxu0 0
    %1423 = vmatpush1.bf16.msra.mxu0 0
    %1424 = vmatprep.subr.bf16.mxu0 0
    %1425 = vmatpush1.bf16.msra.mxu0 0
    %1426 = vmatprep.subr.bf16.mxu0 0
    %1427 = vmatpush1.bf16.msra.mxu0 0
    %1428 = vmatprep.mubr.bf16.mxu0 0
    %1429 = vmatmul.mubr.bf16.gmra.mrb[0].mxu0 %v178
    %v1430 = vpop.f32.mrb[0].mxu0
    %v1431 = vadd.f32 %v380, %v1430
    %v1432 = vpop.f32.mrb[0].mxu0
    %v1433 = vadd.f32 %v384, %v1432
    %v1434 = vpop.f32.mrb[0].mxu0
    %v1435 = vpop.f32.mrb[0].mxu0
    %1436 = vdwg.mxu0
    %1437 = vmatprep.subr.bf16.mxu0 %v985
    %1438 = vmatpush1.bf16.msra.mxu0 %v984
    %1439 = vmatprep.subr.bf16.mxu0 %v1006
    %1440 = vmatpush1.bf16.msra.mxu0 %v1005
    %1441 = vmatprep.subr.bf16.mxu0 %v1027
    %1442 = vmatpush1.bf16.msra.mxu0 %v1026
    %1443 = vmatprep.subr.bf16.mxu0 %v1048
    %1444 = vmatpush1.bf16.msra.mxu0 %v1047
    %1445 = vmatprep.subr.bf16.mxu0 %v1069
    %1446 = vmatpush1.bf16.msra.mxu0 %v1068
    %1447 = vmatprep.subr.bf16.mxu0 %v1090
    %1448 = vmatpush1.bf16.msra.mxu0 %v1089
    %1449 = vmatprep.subr.bf16.mxu0 %v1111
    %1450 = vmatpush1.bf16.msra.mxu0 %v1110
    %1451 = vmatprep.subr.bf16.mxu0 %v1132
    %1452 = vmatpush1.bf16.msra.mxu0 %v1131
    %1453 = vmatprep.subr.bf16.mxu0 0
    %1454 = vmatpush1.bf16.msra.mxu0 0
    %1455 = vmatprep.subr.bf16.mxu0 0
    %1456 = vmatpush1.bf16.msra.mxu0 0
    %1457 = vmatprep.subr.bf16.mxu0 0
    %1458 = vmatpush1.bf16.msra.mxu0 0
    %1459 = vmatprep.subr.bf16.mxu0 0
    %1460 = vmatpush1.bf16.msra.mxu0 0
    %1461 = vmatprep.subr.bf16.mxu0 0
    %1462 = vmatpush1.bf16.msra.mxu0 0
    %1463 = vmatprep.subr.bf16.mxu0 0
    %1464 = vmatpush1.bf16.msra.mxu0 0
    %1465 = vmatprep.subr.bf16.mxu0 0
    %1466 = vmatpush1.bf16.msra.mxu0 0
    %1467 = vmatprep.subr.bf16.mxu0 0
    %1468 = vmatpush1.bf16.msra.mxu0 0
    %1469 = vmatprep.mubr.bf16.mxu0 0
    %1470 = vmatmul.mubr.bf16.gmra.mrb[0].mxu0 %v178
    %v1471 = vpop.f32.mrb[0].mxu0
    %v1472 = vadd.f32 %v388, %v1471
    %v1473 = vpop.f32.mrb[0].mxu0
    %v1474 = vadd.f32 %v392, %v1473
    %v1475 = vpop.f32.mrb[0].mxu0
    %v1476 = vpop.f32.mrb[0].mxu0
    %1477 = vdwg.mxu0
    %1478 = vmatprep.subr.bf16.mxu0 %v987
    %1479 = vmatpush1.bf16.msra.mxu0 %v986
    %1480 = vmatprep.subr.bf16.mxu0 %v1008
    %1481 = vmatpush1.bf16.msra.mxu0 %v1007
    %1482 = vmatprep.subr.bf16.mxu0 %v1029
    %1483 = vmatpush1.bf16.msra.mxu0 %v1028
    %1484 = vmatprep.subr.bf16.mxu0 %v1050
    %1485 = vmatpush1.bf16.msra.mxu0 %v1049
    %1486 = vmatprep.subr.bf16.mxu0 %v1071
    %1487 = vmatpush1.bf16.msra.mxu0 %v1070
    %1488 = vmatprep.subr.bf16.mxu0 %v1092
    %1489 = vmatpush1.bf16.msra.mxu0 %v1091
    %1490 = vmatprep.subr.bf16.mxu0 %v1113
    %1491 = vmatpush1.bf16.msra.mxu0 %v1112
    %1492 = vmatprep.subr.bf16.mxu0 %v1134
    %1493 = vmatpush1.bf16.msra.mxu0 %v1133
    %1494 = vmatprep.subr.bf16.mxu0 0
    %1495 = vmatpush1.bf16.msra.mxu0 0
    %1496 = vmatprep.subr.bf16.mxu0 0
    %1497 = vmatpush1.bf16.msra.mxu0 0
    %1498 = vmatprep.subr.bf16.mxu0 0
    %1499 = vmatpush1.bf16.msra.mxu0 0
    %1500 = vmatprep.subr.bf16.mxu0 0
    %1501 = vmatpush1.bf16.msra.mxu0 0
    %1502 = vmatprep.subr.bf16.mxu0 0
    %1503 = vmatpush1.bf16.msra.mxu0 0
    %1504 = vmatprep.subr.bf16.mxu0 0
    %1505 = vmatpush1.bf16.msra.mxu0 0
    %1506 = vmatprep.subr.bf16.mxu0 0
    %1507 = vmatpush1.bf16.msra.mxu0 0
    %1508 = vmatprep.subr.bf16.mxu0 0
    %1509 = vmatpush1.bf16.msra.mxu0 0
    %1510 = vmatprep.mubr.bf16.mxu0 0
    %1511 = vmatmul.mubr.bf16.gmra.mrb[0].mxu0 %v178
    %v1512 = vpop.f32.mrb[0].mxu0
    %v1513 = vadd.f32 %v396, %v1512
    %v1514 = vpop.f32.mrb[0].mxu0
    %v1515 = vadd.f32 %v400, %v1514
    %v1516 = vpop.f32.mrb[0].mxu0
    %v1517 = vpop.f32.mrb[0].mxu0
    %1518 = vdwg.mxu0
    %1519 = vmatprep.subr.bf16.mxu0 %v989
    %1520 = vmatpush1.bf16.msra.mxu0 %v988
    %1521 = vmatprep.subr.bf16.mxu0 %v1010
    %1522 = vmatpush1.bf16.msra.mxu0 %v1009
    %1523 = vmatprep.subr.bf16.mxu0 %v1031
    %1524 = vmatpush1.bf16.msra.mxu0 %v1030
    %1525 = vmatprep.subr.bf16.mxu0 %v1052
    %1526 = vmatpush1.bf16.msra.mxu0 %v1051
    %1527 = vmatprep.subr.bf16.mxu0 %v1073
    %1528 = vmatpush1.bf16.msra.mxu0 %v1072
    %1529 = vmatprep.subr.bf16.mxu0 %v1094
    %1530 = vmatpush1.bf16.msra.mxu0 %v1093
    %1531 = vmatprep.subr.bf16.mxu0 %v1115
    %1532 = vmatpush1.bf16.msra.mxu0 %v1114
    %1533 = vmatprep.subr.bf16.mxu0 %v1136
    %1534 = vmatpush1.bf16.msra.mxu0 %v1135
    %1535 = vmatprep.subr.bf16.mxu0 0
    %1536 = vmatpush1.bf16.msra.mxu0 0
    %1537 = vmatprep.subr.bf16.mxu0 0
    %1538 = vmatpush1.bf16.msra.mxu0 0
    %1539 = vmatprep.subr.bf16.mxu0 0
    %1540 = vmatpush1.bf16.msra.mxu0 0
    %1541 = vmatprep.subr.bf16.mxu0 0
    %1542 = vmatpush1.bf16.msra.mxu0 0
    %1543 = vmatprep.subr.bf16.mxu0 0
    %1544 = vmatpush1.bf16.msra.mxu0 0
    %1545 = vmatprep.subr.bf16.mxu0 0
    %1546 = vmatpush1.bf16.msra.mxu0 0
    %1547 = vmatprep.subr.bf16.mxu0 0
    %1548 = vmatpush1.bf16.msra.mxu0 0
    %1549 = vmatprep.subr.bf16.mxu0 0
    %1550 = vmatpush1.bf16.msra.mxu0 0
    %1551 = vmatprep.mubr.bf16.mxu0 0
    %1552 = vmatmul.mubr.bf16.gmra.mrb[0].mxu0 %v178
    %v1553 = vpop.f32.mrb[0].mxu0
    %v1554 = vadd.f32 %v404, %v1553
    %v1555 = vpop.f32.mrb[0].mxu0
    %v1556 = vadd.f32 %v408, %v1555
    %v1557 = vpop.f32.mrb[0].mxu0
    %v1558 = vpop.f32.mrb[0].mxu0
    %1559 = vdwg.mxu0
    %1560 = vmatprep.subr.bf16.mxu0 %v991
    %1561 = vmatpush1.bf16.msra.mxu0 %v990
    %1562 = vmatprep.subr.bf16.mxu0 %v1012
    %1563 = vmatpush1.bf16.msra.mxu0 %v1011
    %1564 = vmatprep.subr.bf16.mxu0 %v1033
    %1565 = vmatpush1.bf16.msra.mxu0 %v1032
    %1566 = vmatprep.subr.bf16.mxu0 %v1054
    %1567 = vmatpush1.bf16.msra.mxu0 %v1053
    %1568 = vmatprep.subr.bf16.mxu0 %v1075
    %1569 = vmatpush1.bf16.msra.mxu0 %v1074
    %1570 = vmatprep.subr.bf16.mxu0 %v1096
    %1571 = vmatpush1.bf16.msra.mxu0 %v1095
    %1572 = vmatprep.subr.bf16.mxu0 %v1117
    %1573 = vmatpush1.bf16.msra.mxu0 %v1116
    %1574 = vmatprep.subr.bf16.mxu0 %v1138
    %1575 = vmatpush1.bf16.msra.mxu0 %v1137
    %1576 = vmatprep.subr.bf16.mxu0 0
    %1577 = vmatpush1.bf16.msra.mxu0 0
    %1578 = vmatprep.subr.bf16.mxu0 0
    %1579 = vmatpush1.bf16.msra.mxu0 0
    %1580 = vmatprep.subr.bf16.mxu0 0
    %1581 = vmatpush1.bf16.msra.mxu0 0
    %1582 = vmatprep.subr.bf16.mxu0 0
    %1583 = vmatpush1.bf16.msra.mxu0 0
    %1584 = vmatprep.subr.bf16.mxu0 0
    %1585 = vmatpush1.bf16.msra.mxu0 0
    %1586 = vmatprep.subr.bf16.mxu0 0
    %1587 = vmatpush1.bf16.msra.mxu0 0
    %1588 = vmatprep.subr.bf16.mxu0 0
    %1589 = vmatpush1.bf16.msra.mxu0 0
    %1590 = vmatprep.subr.bf16.mxu0 0
    %1591 = vmatpush1.bf16.msra.mxu0 0
    %1592 = vmatprep.mubr.bf16.mxu0 0
    %1593 = vmatmul.mubr.bf16.gmra.mrb[0].mxu0 %v178
    %v1594 = vpop.f32.mrb[0].mxu0
    %v1595 = vadd.f32 %v412, %v1594
    %v1596 = vpop.f32.mrb[0].mxu0
    %v1597 = vadd.f32 %v416, %v1596
    %v1598 = vpop.f32.mrb[0].mxu0
    %v1599 = vpop.f32.mrb[0].mxu0
    %1600 = vdwg.mxu0
    %1601 = vmatprep.subr.bf16.mxu0 %v993
    %1602 = vmatpush1.bf16.msra.mxu0 %v992
    %1603 = vmatprep.subr.bf16.mxu0 %v1014
    %1604 = vmatpush1.bf16.msra.mxu0 %v1013
    %1605 = vmatprep.subr.bf16.mxu0 %v1035
    %1606 = vmatpush1.bf16.msra.mxu0 %v1034
    %1607 = vmatprep.subr.bf16.mxu0 %v1056
    %1608 = vmatpush1.bf16.msra.mxu0 %v1055
    %1609 = vmatprep.subr.bf16.mxu0 %v1077
    %1610 = vmatpush1.bf16.msra.mxu0 %v1076
    %1611 = vmatprep.subr.bf16.mxu0 %v1098
    %1612 = vmatpush1.bf16.msra.mxu0 %v1097
    %1613 = vmatprep.subr.bf16.mxu0 %v1119
    %1614 = vmatpush1.bf16.msra.mxu0 %v1118
    %1615 = vmatprep.subr.bf16.mxu0 %v1140
    %1616 = vmatpush1.bf16.msra.mxu0 %v1139
    %1617 = vmatprep.subr.bf16.mxu0 0
    %1618 = vmatpush1.bf16.msra.mxu0 0
    %1619 = vmatprep.subr.bf16.mxu0 0
    %1620 = vmatpush1.bf16.msra.mxu0 0
    %1621 = vmatprep.subr.bf16.mxu0 0
    %1622 = vmatpush1.bf16.msra.mxu0 0
    %1623 = vmatprep.subr.bf16.mxu0 0
    %1624 = vmatpush1.bf16.msra.mxu0 0
    %1625 = vmatprep.subr.bf16.mxu0 0
    %1626 = vmatpush1.bf16.msra.mxu0 0
    %1627 = vmatprep.subr.bf16.mxu0 0
    %1628 = vmatpush1.bf16.msra.mxu0 0
    %1629 = vmatprep.subr.bf16.mxu0 0
    %1630 = vmatpush1.bf16.msra.mxu0 0
    %1631 = vmatprep.subr.bf16.mxu0 0
    %1632 = vmatpush1.bf16.msra.mxu0 0
    %1633 = vmatprep.mubr.bf16.mxu0 0
    %1634 = vmatmul.mubr.bf16.gmra.mrb[0].mxu0 %v178
    %v1635 = vpop.f32.mrb[0].mxu0
    %v1636 = vadd.f32 %v420, %v1635
    %v1637 = vpop.f32.mrb[0].mxu0
    %v1638 = vadd.f32 %v424, %v1637
    %v1639 = vpop.f32.mrb[0].mxu0
    %v1640 = vpop.f32.mrb[0].mxu0
    %1641 = vdwg.mxu0
    %1642 = vmatprep.subr.bf16.mxu0 %v995
    %1643 = vmatpush1.bf16.msra.mxu0 %v994
    %1644 = vmatprep.subr.bf16.mxu0 %v1016
    %1645 = vmatpush1.bf16.msra.mxu0 %v1015
    %1646 = vmatprep.subr.bf16.mxu0 %v1037
    %1647 = vmatpush1.bf16.msra.mxu0 %v1036
    %1648 = vmatprep.subr.bf16.mxu0 %v1058
    %1649 = vmatpush1.bf16.msra.mxu0 %v1057
    %1650 = vmatprep.subr.bf16.mxu0 %v1079
    %1651 = vmatpush1.bf16.msra.mxu0 %v1078
    %1652 = vmatprep.subr.bf16.mxu0 %v1100
    %1653 = vmatpush1.bf16.msra.mxu0 %v1099
    %1654 = vmatprep.subr.bf16.mxu0 %v1121
    %1655 = vmatpush1.bf16.msra.mxu0 %v1120
    %1656 = vmatprep.subr.bf16.mxu0 %v1142
    %1657 = vmatpush1.bf16.msra.mxu0 %v1141
    %1658 = vmatprep.subr.bf16.mxu0 0
    %1659 = vmatpush1.bf16.msra.mxu0 0
    %1660 = vmatprep.subr.bf16.mxu0 0
    %1661 = vmatpush1.bf16.msra.mxu0 0
    %1662 = vmatprep.subr.bf16.mxu0 0
    %1663 = vmatpush1.bf16.msra.mxu0 0
    %1664 = vmatprep.subr.bf16.mxu0 0
    %1665 = vmatpush1.bf16.msra.mxu0 0
    %1666 = vmatprep.subr.bf16.mxu0 0
    %1667 = vmatpush1.bf16.msra.mxu0 0
    %1668 = vmatprep.subr.bf16.mxu0 0
    %1669 = vmatpush1.bf16.msra.mxu0 0
    %1670 = vmatprep.subr.bf16.mxu0 0
    %1671 = vmatpush1.bf16.msra.mxu0 0
    %1672 = vmatprep.subr.bf16.mxu0 0
    %1673 = vmatpush1.bf16.msra.mxu0 0
    %1674 = vmatprep.mubr.bf16.mxu0 0
    %1675 = vmatmul.mubr.bf16.gmra.mrb[0].mxu0 %v178
    %v1676 = vpop.f32.mrb[0].mxu0
    %v1677 = vadd.f32 %v428, %v1676
    %v1678 = vpop.f32.mrb[0].mxu0
    %v1679 = vadd.f32 %v432, %v1678
    %v1680 = vpop.f32.mrb[0].mxu0
    %v1681 = vpop.f32.mrb[0].mxu0
    %1682 = vdwg.mxu0
    %1683 = vmatprep.subr.bf16.mxu0 %v997
    %1684 = vmatpush1.bf16.msra.mxu0 %v996
    %1685 = vmatprep.subr.bf16.mxu0 %v1018
    %1686 = vmatpush1.bf16.msra.mxu0 %v1017
    %1687 = vmatprep.subr.bf16.mxu0 %v1039
    %1688 = vmatpush1.bf16.msra.mxu0 %v1038
    %1689 = vmatprep.subr.bf16.mxu0 %v1060
    %1690 = vmatpush1.bf16.msra.mxu0 %v1059
    %1691 = vmatprep.subr.bf16.mxu0 %v1081
    %1692 = vmatpush1.bf16.msra.mxu0 %v1080
    %1693 = vmatprep.subr.bf16.mxu0 %v1102
    %1694 = vmatpush1.bf16.msra.mxu0 %v1101
    %1695 = vmatprep.subr.bf16.mxu0 %v1123
    %1696 = vmatpush1.bf16.msra.mxu0 %v1122
    %1697 = vmatprep.subr.bf16.mxu0 %v1144
    %1698 = vmatpush1.bf16.msra.mxu0 %v1143
    %1699 = vmatprep.subr.bf16.mxu0 0
    %1700 = vmatpush1.bf16.msra.mxu0 0
    %1701 = vmatprep.subr.bf16.mxu0 0
    %1702 = vmatpush1.bf16.msra.mxu0 0
    %1703 = vmatprep.subr.bf16.mxu0 0
    %1704 = vmatpush1.bf16.msra.mxu0 0
    %1705 = vmatprep.subr.bf16.mxu0 0
    %1706 = vmatpush1.bf16.msra.mxu0 0
    %1707 = vmatprep.subr.bf16.mxu0 0
    %1708 = vmatpush1.bf16.msra.mxu0 0
    %1709 = vmatprep.subr.bf16.mxu0 0
    %1710 = vmatpush1.bf16.msra.mxu0 0
    %1711 = vmatprep.subr.bf16.mxu0 0
    %1712 = vmatpush1.bf16.msra.mxu0 0
    %1713 = vmatprep.subr.bf16.mxu0 0
    %1714 = vmatpush1.bf16.msra.mxu0 0
    %1715 = vmatprep.mubr.bf16.mxu0 0
    %1716 = vmatmul.mubr.bf16.gmra.mrb[0].mxu0 %v178
    %v1717 = vpop.f32.mrb[0].mxu0
    %v1718 = vadd.f32 %v436, %v1717
    %v1719 = vpop.f32.mrb[0].mxu0
    %v1720 = vadd.f32 %v440, %v1719
    %v1721 = vpop.f32.mrb[0].mxu0
    %v1722 = vpop.f32.mrb[0].mxu0
    %1723 = vdwg.mxu0
    %1724 = vmatprep.subr.bf16.mxu0 0
    %1725 = vmatpush1.bf16.msra.mxu0 %v998
    %1726 = vmatprep.subr.bf16.mxu0 0
    %1727 = vmatpush1.bf16.msra.mxu0 %v1019
    %1728 = vmatprep.subr.bf16.mxu0 0
    %1729 = vmatpush1.bf16.msra.mxu0 %v1040
    %1730 = vmatprep.subr.bf16.mxu0 0
    %1731 = vmatpush1.bf16.msra.mxu0 %v1061
    %1732 = vmatprep.subr.bf16.mxu0 0
    %1733 = vmatpush1.bf16.msra.mxu0 %v1082
    %1734 = vmatprep.subr.bf16.mxu0 0
    %1735 = vmatpush1.bf16.msra.mxu0 %v1103
    %1736 = vmatprep.subr.bf16.mxu0 0
    %1737 = vmatpush1.bf16.msra.mxu0 %v1124
    %1738 = vmatprep.subr.bf16.mxu0 0
    %1739 = vmatpush1.bf16.msra.mxu0 %v1145
    %1740 = vmatprep.subr.bf16.mxu0 0
    %1741 = vmatpush1.bf16.msra.mxu0 0
    %1742 = vmatprep.subr.bf16.mxu0 0
    %1743 = vmatpush1.bf16.msra.mxu0 0
    %1744 = vmatprep.subr.bf16.mxu0 0
    %1745 = vmatpush1.bf16.msra.mxu0 0
    %1746 = vmatprep.subr.bf16.mxu0 0
    %1747 = vmatpush1.bf16.msra.mxu0 0
    %1748 = vmatprep.subr.bf16.mxu0 0
    %1749 = vmatpush1.bf16.msra.mxu0 0
    %1750 = vmatprep.subr.bf16.mxu0 0
    %1751 = vmatpush1.bf16.msra.mxu0 0
    %1752 = vmatprep.subr.bf16.mxu0 0
    %1753 = vmatpush1.bf16.msra.mxu0 0
    %1754 = vmatprep.subr.bf16.mxu0 0
    %1755 = vmatpush1.bf16.msra.mxu0 0
    %1756 = vmatprep.mubr.bf16.mxu0 0
    %1757 = vmatmul.mubr.bf16.gmra.mrb[0].mxu0 %v178
    %v1758 = vpop.f32.mrb[0].mxu0
    %v1759 = vadd.f32 %v444, %v1758
    %v1760 = vpop.f32.mrb[0].mxu0
    %v1761 = vpop.f32.mrb[0].mxu0
    %v1762 = vpop.f32.mrb[0].mxu0
    %1763 = vdwg.mxu0
    %v1764 = vmax.f32 %v1349, 0.0
    %v1765 = vmax.f32 %v1351, 0.0
    %v1766 = vmax.f32 %v1390, 0.0
    %v1767 = vmax.f32 %v1392, 0.0
    %v1768 = vmax.f32 %v1431, 0.0
    %v1769 = vmax.f32 %v1433, 0.0
    %v1770 = vmax.f32 %v1472, 0.0
    %v1771 = vmax.f32 %v1474, 0.0
    %v1772 = vmax.f32 %v1513, 0.0
    %v1773 = vmax.f32 %v1515, 0.0
    %v1774 = vmax.f32 %v1554, 0.0
    %v1775 = vmax.f32 %v1556, 0.0
    %v1776 = vmax.f32 %v1595, 0.0
    %v1777 = vmax.f32 %v1597, 0.0
    %v1778 = vmax.f32 %v1636, 0.0
    %v1779 = vmax.f32 %v1638, 0.0
    %v1780 = vmax.f32 %v1677, 0.0
    %v1781 = vmax.f32 %v1679, 0.0
    %v1782 = vmax.f32 %v1718, 0.0
    %v1783 = vmax.f32 %v1720, 0.0
    %v1784 = vmax.f32 %v1759, 0.0
    %v1785 = vpack.c.bf16 %v1764, %v1764
    %v1786 = vpack.c.bf16 %v1765, %v1765
    %v1787 = vpack.c.bf16 %v1766, %v1766
    %v1788 = vpack.c.bf16 %v1767, %v1767
    %v1789 = vpack.c.bf16 %v1768, %v1768
    %v1790 = vpack.c.bf16 %v1769, %v1769
    %v1791 = vpack.c.bf16 %v1770, %v1770
    %v1792 = vpack.c.bf16 %v1771, %v1771
    %v1793 = vpack.c.bf16 %v1772, %v1772
    %v1794 = vpack.c.bf16 %v1773, %v1773
    %v1795 = vpack.c.bf16 %v1774, %v1774
    %v1796 = vpack.c.bf16 %v1775, %v1775
    %v1797 = vpack.c.bf16 %v1776, %v1776
    %v1798 = vpack.c.bf16 %v1777, %v1777
    %v1799 = vpack.c.bf16 %v1778, %v1778
    %v1800 = vpack.c.bf16 %v1779, %v1779
    %v1801 = vpack.c.bf16 %v1780, %v1780
    %v1802 = vpack.c.bf16 %v1781, %v1781
    %v1803 = vpack.c.bf16 %v1782, %v1782
    %v1804 = vpack.c.bf16 %v1783, %v1783
    %v1805 = vpack.c.bf16 %v1784, %v1784
    %v1806 = vld [vmem:[#allocation9] sm:$0xf]
    %v1807 = vld [vmem:[#allocation9 + $0x4] sm:$0xf]
    %v1808 = vld [vmem:[#allocation9 + $0x8] sm:$0xf]
    %v1809 = vld [vmem:[#allocation9 + $0xc] sm:$0xf]
    %v1810 = vld [vmem:[#allocation9 + $0x10] sm:$0xf]
    %v1811 = vld [vmem:[#allocation9 + $0x14] sm:$0xf]
    %v1812 = vld [vmem:[#allocation9 + $0x18] sm:$0xf]
    %v1813 = vld [vmem:[#allocation9 + $0x1c] sm:$0xf]
    %v1814 = vld [vmem:[#allocation9 + $0x20] sm:$0xf]
    %v1815 = vld [vmem:[#allocation9 + $0x24] sm:$0xf]
    %v1816 = vld [vmem:[#allocation9 + $0x28] sm:$0xf]
    %v1817 = vld [vmem:[#allocation9 + $0x2c] sm:$0xf]
    %v1818 = vld [vmem:[#allocation9 + $0x30] sm:$0xf]
    %v1819 = vld [vmem:[#allocation9 + $0x34] sm:$0xf]
    %v1820 = vld [vmem:[#allocation9 + $0x38] sm:$0xf]
    %v1821 = vld [vmem:[#allocation9 + $0x3c] sm:$0xf]
    %v1822 = vld [vmem:[#allocation9 + $0x40] sm:$0xf]
    %v1823 = vld [vmem:[#allocation9 + $0x44] sm:$0xf]
    %v1824 = vld [vmem:[#allocation9 + $0x48] sm:$0xf]
    %v1825 = vld [vmem:[#allocation9 + $0x4c] sm:$0xf]
    %v1826 = vld [vmem:[#allocation9 + $0x50] sm:$0xf]
    %v1827 = vld [vmem:[#allocation9 + $0x54] sm:$0xf]
    %v1828 = vld [vmem:[#allocation9 + $0x58] sm:$0xf]
    %v1829 = vld [vmem:[#allocation9 + $0x5c] sm:$0xf]
    %v1830 = vld [vmem:[#allocation9 + $0x60] sm:$0xf]
    %v1831 = vld [vmem:[#allocation9 + $0x64] sm:$0xf]
    %v1832 = vld [vmem:[#allocation9 + $0x68] sm:$0xf]
    %v1833 = vld [vmem:[#allocation9 + $0x6c] sm:$0xf]
    %v1834 = vld [vmem:[#allocation9 + $0x70] sm:$0xf]
    %v1835 = vld [vmem:[#allocation9 + $0x74] sm:$0xf]
    %v1836 = vld [vmem:[#allocation9 + $0x78] sm:$0xf]
    %v1837 = vld [vmem:[#allocation9 + $0x7c] sm:$0xf]
    %v1838 = vld [vmem:[#allocation9 + $0x80] sm:$0xf]
    %v1839 = vld [vmem:[#allocation9 + $0x84] sm:$0xf]
    %v1840 = vld [vmem:[#allocation9 + $0x88] sm:$0xf]
    %v1841 = vld [vmem:[#allocation9 + $0x8c] sm:$0xf]
    %v1842 = vld [vmem:[#allocation9 + $0x90] sm:$0xf]
    %v1843 = vld [vmem:[#allocation9 + $0x94] sm:$0xf]
    %v1844 = vld [vmem:[#allocation9 + $0x98] sm:$0xf]
    %v1845 = vld [vmem:[#allocation9 + $0x9c] sm:$0xf]
    %v1846 = vld [vmem:[#allocation9 + $0xa0] sm:$0xf]
    %v1847 = vld [vmem:[#allocation9 + $0xa4] sm:$0xf]
    %v1848 = vld [vmem:[#allocation9 + $0xa8] sm:$0xf]
    %v1849 = vld [vmem:[#allocation9 + $0xac] sm:$0xf]
    %v1850 = vld [vmem:[#allocation9 + $0xb0] sm:$0xf]
    %v1851 = vld [vmem:[#allocation9 + $0xb4] sm:$0xf]
    %v1852 = vld [vmem:[#allocation9 + $0xb8] sm:$0xf]
    %v1853 = vld [vmem:[#allocation9 + $0xbc] sm:$0xf]
    %v1854 = vld [vmem:[#allocation9 + $0xc0] sm:$0xf]
    %v1855 = vld [vmem:[#allocation9 + $0xc4] sm:$0xf]
    %v1856 = vld [vmem:[#allocation9 + $0xc8] sm:$0xf]
    %v1857 = vld [vmem:[#allocation9 + $0xcc] sm:$0xf]
    %v1858 = vld [vmem:[#allocation9 + $0xd0] sm:$0xf]
    %v1859 = vld [vmem:[#allocation9 + $0xd4] sm:$0xf]
    %v1860 = vld [vmem:[#allocation9 + $0xd8] sm:$0xf]
    %v1861 = vld [vmem:[#allocation9 + $0xdc] sm:$0xf]
    %v1862 = vld [vmem:[#allocation9 + $0xe0] sm:$0xf]
    %v1863 = vld [vmem:[#allocation9 + $0xe4] sm:$0xf]
    %v1864 = vld [vmem:[#allocation9 + $0xe8] sm:$0xf]
    %v1865 = vld [vmem:[#allocation9 + $0xec] sm:$0xf]
    %v1866 = vld [vmem:[#allocation9 + $0xf0] sm:$0xf]
    %v1867 = vld [vmem:[#allocation9 + $0xf4] sm:$0xf]
    %v1868 = vld [vmem:[#allocation9 + $0xf8] sm:$0xf]
    %v1869 = vld [vmem:[#allocation9 + $0xfc] sm:$0xf]
    %v1870 = vld [vmem:[#allocation9 + $0x100] sm:$0xf]
    %v1871 = vld [vmem:[#allocation9 + $0x104] sm:$0xf]
    %v1872 = vld [vmem:[#allocation9 + $0x108] sm:$0xf]
    %v1873 = vld [vmem:[#allocation9 + $0x10c] sm:$0xf]
    %v1874 = vld [vmem:[#allocation9 + $0x110] sm:$0xf]
    %v1875 = vld [vmem:[#allocation9 + $0x114] sm:$0xf]
    %v1876 = vld [vmem:[#allocation9 + $0x118] sm:$0xf]
    %v1877 = vld [vmem:[#allocation9 + $0x11c] sm:$0xf]
    %v1878 = vld [vmem:[#allocation9 + $0x120] sm:$0xf]
    %v1879 = vld [vmem:[#allocation9 + $0x124] sm:$0xf]
    %v1880 = vld [vmem:[#allocation9 + $0x128] sm:$0xf]
    %v1881 = vld [vmem:[#allocation9 + $0x12c] sm:$0xf]
    %v1882 = vld [vmem:[#allocation9 + $0x130] sm:$0xf]
    %v1883 = vld [vmem:[#allocation9 + $0x134] sm:$0xf]
    %v1884 = vld [vmem:[#allocation9 + $0x138] sm:$0xf]
    %v1885 = vld [vmem:[#allocation9 + $0x13c] sm:$0xf]
    %v1886 = vld [vmem:[#allocation9 + $0x140] sm:$0xf]
    %v1887 = vld [vmem:[#allocation9 + $0x144] sm:$0xf]
    %v1888 = vld [vmem:[#allocation9 + $0x148] sm:$0xf]
    %v1889 = vld [vmem:[#allocation9 + $0x14c] sm:$0xf]
    %v1890 = vld [vmem:[#allocation9 + $0x150] sm:$0xf]
    %v1891 = vld [vmem:[#allocation9 + $0x154] sm:$0xf]
    %v1892 = vld [vmem:[#allocation9 + $0x158] sm:$0xf]
    %v1893 = vld [vmem:[#allocation9 + $0x15c] sm:$0xf]
    %v1894 = vld [vmem:[#allocation9 + $0x160] sm:$0xf]
    %v1895 = vld [vmem:[#allocation9 + $0x164] sm:$0xf]
    %v1896 = vld [vmem:[#allocation9 + $0x168] sm:$0xf]
    %v1897 = vld [vmem:[#allocation9 + $0x16c] sm:$0xf]
    %v1898 = vld [vmem:[#allocation9 + $0x170] sm:$0xf]
    %v1899 = vld [vmem:[#allocation9 + $0x174] sm:$0xf]
    %v1900 = vld [vmem:[#allocation9 + $0x178] sm:$0xf]
    %v1901 = vld [vmem:[#allocation9 + $0x17c] sm:$0xf]
    %v1902 = vld [vmem:[#allocation9 + $0x180] sm:$0xf]
    %v1903 = vld [vmem:[#allocation9 + $0x184] sm:$0xf]
    %v1904 = vld [vmem:[#allocation9 + $0x188] sm:$0xf]
    %v1905 = vld [vmem:[#allocation9 + $0x18c] sm:$0xf]
    %v1906 = vld [vmem:[#allocation9 + $0x190] sm:$0xf]
    %v1907 = vld [vmem:[#allocation9 + $0x194] sm:$0xf]
    %v1908 = vld [vmem:[#allocation9 + $0x198] sm:$0xf]
    %v1909 = vld [vmem:[#allocation9 + $0x19c] sm:$0xf]
    %v1910 = vld [vmem:[#allocation9 + $0x1a0] sm:$0xf]
    %v1911 = vld [vmem:[#allocation9 + $0x1a4] sm:$0xf]
    %v1912 = vld [vmem:[#allocation9 + $0x1a8] sm:$0xf]
    %v1913 = vld [vmem:[#allocation9 + $0x1ac] sm:$0xf]
    %v1914 = vld [vmem:[#allocation9 + $0x1b0] sm:$0xf]
    %v1915 = vld [vmem:[#allocation9 + $0x1b4] sm:$0xf]
    %v1916 = vld [vmem:[#allocation9 + $0x1b8] sm:$0xf]
    %v1917 = vld [vmem:[#allocation9 + $0x1bc] sm:$0xf]
    %v1918 = vld [vmem:[#allocation9 + $0x1c0] sm:$0xf]
    %v1919 = vld [vmem:[#allocation9 + $0x1c4] sm:$0xf]
    %v1920 = vld [vmem:[#allocation9 + $0x1c8] sm:$0xf]
    %v1921 = vld [vmem:[#allocation9 + $0x1cc] sm:$0xf]
    %v1922 = vld [vmem:[#allocation9 + $0x1d0] sm:$0xf]
    %v1923 = vld [vmem:[#allocation9 + $0x1d4] sm:$0xf]
    %v1924 = vld [vmem:[#allocation9 + $0x1d8] sm:$0xf]
    %v1925 = vld [vmem:[#allocation9 + $0x1dc] sm:$0xf]
    %v1926 = vld [vmem:[#allocation9 + $0x1e0] sm:$0xf]
    %v1927 = vld [vmem:[#allocation9 + $0x1e4] sm:$0xf]
    %v1928 = vld [vmem:[#allocation9 + $0x1e8] sm:$0xf]
    %v1929 = vld [vmem:[#allocation9 + $0x1ec] sm:$0xf]
    %v1930 = vld [vmem:[#allocation9 + $0x1f0] sm:$0xf]
    %v1931 = vld [vmem:[#allocation9 + $0x1f4] sm:$0xf]
    %v1932 = vld [vmem:[#allocation9 + $0x1f8] sm:$0xf]
    %v1933 = vld [vmem:[#allocation9 + $0x1fc] sm:$0xf]
    %v1934 = vld [vmem:[#allocation9 + $0x200] sm:$0xf]
    %v1935 = vld [vmem:[#allocation9 + $0x204] sm:$0xf]
    %v1936 = vld [vmem:[#allocation9 + $0x208] sm:$0xf]
    %v1937 = vld [vmem:[#allocation9 + $0x20c] sm:$0xf]
    %v1938 = vld [vmem:[#allocation9 + $0x210] sm:$0xf]
    %v1939 = vld [vmem:[#allocation9 + $0x214] sm:$0xf]
    %v1940 = vld [vmem:[#allocation9 + $0x218] sm:$0xf]
    %v1941 = vld [vmem:[#allocation9 + $0x21c] sm:$0xf]
    %v1942 = vld [vmem:[#allocation9 + $0x220] sm:$0xf]
    %v1943 = vld [vmem:[#allocation9 + $0x224] sm:$0xf]
    %v1944 = vld [vmem:[#allocation9 + $0x228] sm:$0xf]
    %v1945 = vld [vmem:[#allocation9 + $0x22c] sm:$0xf]
    %v1946 = vld [vmem:[#allocation9 + $0x230] sm:$0xf]
    %v1947 = vld [vmem:[#allocation9 + $0x234] sm:$0xf]
    %v1948 = vld [vmem:[#allocation9 + $0x238] sm:$0xf]
    %v1949 = vld [vmem:[#allocation9 + $0x23c] sm:$0xf]
    %v1950 = vld [vmem:[#allocation9 + $0x240] sm:$0xf]
    %v1951 = vld [vmem:[#allocation9 + $0x244] sm:$0xf]
    %v1952 = vld [vmem:[#allocation9 + $0x248] sm:$0xf]
    %v1953 = vld [vmem:[#allocation9 + $0x24c] sm:$0xf]
    %v1954 = vld [vmem:[#allocation9 + $0x250] sm:$0xf]
    %v1955 = vld [vmem:[#allocation9 + $0x254] sm:$0xf]
    %v1956 = vld [vmem:[#allocation9 + $0x258] sm:$0xf]
    %v1957 = vld [vmem:[#allocation9 + $0x25c] sm:$0xf]
    %v1958 = vld [vmem:[#allocation9 + $0x260] sm:$0xf]
    %v1959 = vld [vmem:[#allocation9 + $0x264] sm:$0xf]
    %v1960 = vld [vmem:[#allocation9 + $0x268] sm:$0xf]
    %v1961 = vld [vmem:[#allocation9 + $0x26c] sm:$0xf]
    %v1962 = vld [vmem:[#allocation9 + $0x270] sm:$0xf]
    %v1963 = vld [vmem:[#allocation9 + $0x274] sm:$0xf]
    %v1964 = vld [vmem:[#allocation9 + $0x278] sm:$0xf]
    %v1965 = vld [vmem:[#allocation9 + $0x27c] sm:$0xf]
    %v1966 = vld [vmem:[#allocation9 + $0x280] sm:$0xf]
    %v1967 = vld [vmem:[#allocation9 + $0x284] sm:$0xf]
    %v1968 = vld [vmem:[#allocation9 + $0x288] sm:$0xf]
    %v1969 = vld [vmem:[#allocation9 + $0x28c] sm:$0xf]
    %v1970 = vld [vmem:[#allocation9 + $0x290] sm:$0xf]
    %v1971 = vld [vmem:[#allocation9 + $0x294] sm:$0xf]
    %v1972 = vld [vmem:[#allocation9 + $0x298] sm:$0xf]
    %v1973 = vld [vmem:[#allocation9 + $0x29c] sm:$0xf]
    %v1974 = vld [vmem:[#allocation9 + $0x2a0] sm:$0xf]
    %v1975 = vld [vmem:[#allocation9 + $0x2a4] sm:$0xf]
    %v1976 = vld [vmem:[#allocation9 + $0x2a8] sm:$0xf]
    %v1977 = vld [vmem:[#allocation9 + $0x2ac] sm:$0xf]
    %v1978 = vld [vmem:[#allocation9 + $0x2b0] sm:$0xf]
    %v1979 = vld [vmem:[#allocation9 + $0x2b4] sm:$0xf]
    %v1980 = vld [vmem:[#allocation9 + $0x2b8] sm:$0xf]
    %v1981 = vld [vmem:[#allocation9 + $0x2bc] sm:$0xf]
    %v1982 = vld [vmem:[#allocation9 + $0x2c0] sm:$0xf]
    %v1983 = vld [vmem:[#allocation9 + $0x2c4] sm:$0xf]
    %v1984 = vld [vmem:[#allocation9 + $0x2c8] sm:$0xf]
    %v1985 = vld [vmem:[#allocation9 + $0x2cc] sm:$0xf]
    %v1986 = vld [vmem:[#allocation9 + $0x2d0] sm:$0xf]
    %v1987 = vld [vmem:[#allocation9 + $0x2d4] sm:$0xf]
    %v1988 = vld [vmem:[#allocation9 + $0x2d8] sm:$0xf]
    %v1989 = vld [vmem:[#allocation9 + $0x2dc] sm:$0xf]
    %v1990 = vld [vmem:[#allocation9 + $0x2e0] sm:$0xf]
    %v1991 = vld [vmem:[#allocation9 + $0x2e4] sm:$0xf]
    %v1992 = vld [vmem:[#allocation9 + $0x2e8] sm:$0xf]
    %v1993 = vld [vmem:[#allocation9 + $0x2ec] sm:$0xf]
    %v1994 = vld [vmem:[#allocation9 + $0x2f0] sm:$0xf]
    %v1995 = vld [vmem:[#allocation9 + $0x2f4] sm:$0xf]
    %v1996 = vld [vmem:[#allocation9 + $0x2f8] sm:$0xf]
    %v1997 = vld [vmem:[#allocation9 + $0x2fc] sm:$0xf]
    %v1998 = vld [vmem:[#allocation9 + $0x300] sm:$0xf]
    %v1999 = vld [vmem:[#allocation9 + $0x304] sm:$0xf]
    %v2000 = vld [vmem:[#allocation9 + $0x308] sm:$0xf]
    %v2001 = vld [vmem:[#allocation9 + $0x30c] sm:$0xf]
    %v2002 = vld [vmem:[#allocation9 + $0x310] sm:$0xf]
    %v2003 = vld [vmem:[#allocation9 + $0x314] sm:$0xf]
    %v2004 = vld [vmem:[#allocation9 + $0x318] sm:$0xf]
    %v2005 = vld [vmem:[#allocation9 + $0x31c] sm:$0xf]
    %v2006 = vld [vmem:[#allocation9 + $0x320] sm:$0xf]
    %v2007 = vld [vmem:[#allocation9 + $0x324] sm:$0xf]
    %v2008 = vld [vmem:[#allocation9 + $0x328] sm:$0xf]
    %v2009 = vld [vmem:[#allocation9 + $0x32c] sm:$0xf]
    %v2010 = vld [vmem:[#allocation9 + $0x330] sm:$0xf]
    %v2011 = vld [vmem:[#allocation9 + $0x334] sm:$0xf]
    %v2012 = vld [vmem:[#allocation9 + $0x338] sm:$0xf]
    %v2013 = vld [vmem:[#allocation9 + $0x33c] sm:$0xf]
    %v2014 = vld [vmem:[#allocation9 + $0x340] sm:$0xf]
    %v2015 = vld [vmem:[#allocation9 + $0x344] sm:$0xf]
    %v2016 = vld [vmem:[#allocation9 + $0x348] sm:$0xf]
    %v2017 = vld [vmem:[#allocation9 + $0x34c] sm:$0xf]
    %v2018 = vld [vmem:[#allocation9 + $0x350] sm:$0xf]
    %v2019 = vld [vmem:[#allocation9 + $0x354] sm:$0xf]
    %v2020 = vld [vmem:[#allocation9 + $0x358] sm:$0xf]
    %v2021 = vld [vmem:[#allocation9 + $0x35c] sm:$0xf]
    %v2022 = vld [vmem:[#allocation9 + $0x360] sm:$0xf]
    %v2023 = vld [vmem:[#allocation9 + $0x364] sm:$0xf]
    %v2024 = vld [vmem:[#allocation9 + $0x368] sm:$0xf]
    %v2025 = vld [vmem:[#allocation9 + $0x36c] sm:$0xf]
    %v2026 = vld [vmem:[#allocation9 + $0x370] sm:$0xf]
    %v2027 = vld [vmem:[#allocation9 + $0x374] sm:$0xf]
    %v2028 = vld [vmem:[#allocation9 + $0x378] sm:$0xf]
    %v2029 = vld [vmem:[#allocation9 + $0x37c] sm:$0xf]
    %v2030 = vld [vmem:[#allocation9 + $0x380] sm:$0xf]
    %v2031 = vld [vmem:[#allocation9 + $0x384] sm:$0xf]
    %v2032 = vld [vmem:[#allocation9 + $0x388] sm:$0xf]
    %v2033 = vld [vmem:[#allocation9 + $0x38c] sm:$0xf]
    %v2034 = vld [vmem:[#allocation9 + $0x390] sm:$0xf]
    %v2035 = vld [vmem:[#allocation9 + $0x394] sm:$0xf]
    %v2036 = vld [vmem:[#allocation9 + $0x398] sm:$0xf]
    %v2037 = vld [vmem:[#allocation9 + $0x39c] sm:$0xf]
    %v2038 = vld [vmem:[#allocation9 + $0x3a0] sm:$0xf]
    %v2039 = vld [vmem:[#allocation9 + $0x3a4] sm:$0xf]
    %v2040 = vld [vmem:[#allocation9 + $0x3a8] sm:$0xf]
    %v2041 = vld [vmem:[#allocation9 + $0x3ac] sm:$0xf]
    %v2042 = vld [vmem:[#allocation9 + $0x3b0] sm:$0xf]
    %v2043 = vld [vmem:[#allocation9 + $0x3b4] sm:$0xf]
    %v2044 = vld [vmem:[#allocation9 + $0x3b8] sm:$0xf]
    %v2045 = vld [vmem:[#allocation9 + $0x3bc] sm:$0xf]
    %v2046 = vld [vmem:[#allocation9 + $0x3c0] sm:$0xf]
    %v2047 = vld [vmem:[#allocation9 + $0x3c4] sm:$0xf]
    %v2048 = vld [vmem:[#allocation9 + $0x3c8] sm:$0xf]
    %v2049 = vld [vmem:[#allocation9 + $0x3cc] sm:$0xf]
    %v2050 = vld [vmem:[#allocation9 + $0x3d0] sm:$0xf]
    %v2051 = vld [vmem:[#allocation9 + $0x3d4] sm:$0xf]
    %v2052 = vld [vmem:[#allocation9 + $0x3d8] sm:$0xf]
    %v2053 = vld [vmem:[#allocation9 + $0x3dc] sm:$0xf]
    %v2054 = vld [vmem:[#allocation9 + $0x3e0] sm:$0xf]
    %v2055 = vld [vmem:[#allocation9 + $0x3e4] sm:$0xf]
    %v2056 = vld [vmem:[#allocation9 + $0x3e8] sm:$0xf]
    %v2057 = vld [vmem:[#allocation9 + $0x3ec] sm:$0xf]
    %v2058 = vld [vmem:[#allocation9 + $0x3f0] sm:$0xf]
    %v2059 = vld [vmem:[#allocation9 + $0x3f4] sm:$0xf]
    %v2060 = vld [vmem:[#allocation9 + $0x3f8] sm:$0xf]
    %v2061 = vld [vmem:[#allocation9 + $0x3fc] sm:$0xf]
    %v2062 = vld [vmem:[#allocation9 + $0x400] sm:$0xf]
    %v2063 = vld [vmem:[#allocation9 + $0x404] sm:$0xf]
    %v2064 = vld [vmem:[#allocation9 + $0x408] sm:$0xf]
    %v2065 = vld [vmem:[#allocation9 + $0x40c] sm:$0xf]
    %v2066 = vld [vmem:[#allocation9 + $0x410] sm:$0xf]
    %v2067 = vld [vmem:[#allocation9 + $0x414] sm:$0xf]
    %v2068 = vld [vmem:[#allocation9 + $0x418] sm:$0xf]
    %v2069 = vld [vmem:[#allocation9 + $0x41c] sm:$0xf]
    %v2070 = vld [vmem:[#allocation9 + $0x420] sm:$0xf]
    %v2071 = vld [vmem:[#allocation9 + $0x424] sm:$0xf]
    %v2072 = vld [vmem:[#allocation9 + $0x428] sm:$0xf]
    %v2073 = vld [vmem:[#allocation9 + $0x42c] sm:$0xf]
    %v2074 = vld [vmem:[#allocation9 + $0x430] sm:$0xf]
    %v2075 = vld [vmem:[#allocation9 + $0x434] sm:$0xf]
    %v2076 = vld [vmem:[#allocation9 + $0x438] sm:$0xf]
    %v2077 = vld [vmem:[#allocation9 + $0x43c] sm:$0xf]
    %v2078 = vld [vmem:[#allocation9 + $0x440] sm:$0xf]
    %v2079 = vld [vmem:[#allocation9 + $0x444] sm:$0xf]
    %v2080 = vld [vmem:[#allocation9 + $0x448] sm:$0xf]
    %v2081 = vld [vmem:[#allocation9 + $0x44c] sm:$0xf]
    %v2082 = vld [vmem:[#allocation9 + $0x450] sm:$0xf]
    %v2083 = vld [vmem:[#allocation9 + $0x454] sm:$0xf]
    %v2084 = vld [vmem:[#allocation9 + $0x458] sm:$0xf]
    %v2085 = vld [vmem:[#allocation9 + $0x45c] sm:$0xf]
    %v2086 = vld [vmem:[#allocation9 + $0x460] sm:$0xf]
    %v2087 = vld [vmem:[#allocation9 + $0x464] sm:$0xf]
    %v2088 = vld [vmem:[#allocation9 + $0x468] sm:$0xf]
    %v2089 = vld [vmem:[#allocation9 + $0x46c] sm:$0xf]
    %v2090 = vld [vmem:[#allocation9 + $0x470] sm:$0xf]
    %v2091 = vld [vmem:[#allocation9 + $0x474] sm:$0xf]
    %v2092 = vld [vmem:[#allocation9 + $0x478] sm:$0xf]
    %v2093 = vld [vmem:[#allocation9 + $0x47c] sm:$0xf]
    %v2094 = vld [vmem:[#allocation9 + $0x480] sm:$0xf]
    %v2095 = vld [vmem:[#allocation9 + $0x484] sm:$0xf]
    %v2096 = vld [vmem:[#allocation9 + $0x488] sm:$0xf]
    %v2097 = vld [vmem:[#allocation9 + $0x48c] sm:$0xf]
    %v2098 = vld [vmem:[#allocation9 + $0x490] sm:$0xf]
    %v2099 = vld [vmem:[#allocation9 + $0x494] sm:$0xf]
    %v2100 = vld [vmem:[#allocation9 + $0x498] sm:$0xf]
    %v2101 = vld [vmem:[#allocation9 + $0x49c] sm:$0xf]
    %v2102 = vld [vmem:[#allocation9 + $0x4a0] sm:$0xf]
    %v2103 = vld [vmem:[#allocation9 + $0x4a4] sm:$0xf]
    %v2104 = vld [vmem:[#allocation9 + $0x4a8] sm:$0xf]
    %v2105 = vld [vmem:[#allocation9 + $0x4ac] sm:$0xf]
    %v2106 = vld [vmem:[#allocation9 + $0x4b0] sm:$0xf]
    %v2107 = vld [vmem:[#allocation9 + $0x4b4] sm:$0xf]
    %v2108 = vld [vmem:[#allocation9 + $0x4b8] sm:$0xf]
    %v2109 = vld [vmem:[#allocation9 + $0x4bc] sm:$0xf]
    %v2110 = vld [vmem:[#allocation9 + $0x4c0] sm:$0xf]
    %v2111 = vld [vmem:[#allocation9 + $0x4c4] sm:$0xf]
    %v2112 = vld [vmem:[#allocation9 + $0x4c8] sm:$0xf]
    %v2113 = vld [vmem:[#allocation9 + $0x4cc] sm:$0xf]
    %v2114 = vld [vmem:[#allocation9 + $0x4d0] sm:$0xf]
    %v2115 = vld [vmem:[#allocation9 + $0x4d4] sm:$0xf]
    %v2116 = vld [vmem:[#allocation9 + $0x4d8] sm:$0xf]
    %v2117 = vld [vmem:[#allocation9 + $0x4dc] sm:$0xf]
    %v2118 = vld [vmem:[#allocation9 + $0x4e0] sm:$0xf]
    %v2119 = vld [vmem:[#allocation9 + $0x4e4] sm:$0xf]
    %v2120 = vld [vmem:[#allocation9 + $0x4e8] sm:$0xf]
    %v2121 = vld [vmem:[#allocation9 + $0x4ec] sm:$0xf]
    %v2122 = vld [vmem:[#allocation9 + $0x4f0] sm:$0xf]
    %v2123 = vld [vmem:[#allocation9 + $0x4f4] sm:$0xf]
    %v2124 = vld [vmem:[#allocation9 + $0x4f8] sm:$0xf]
    %v2125 = vld [vmem:[#allocation9 + $0x4fc] sm:$0xf]
    %v2126 = vld [vmem:[#allocation9 + $0x500] sm:$0xf]
    %v2127 = vld [vmem:[#allocation9 + $0x504] sm:$0xf]
    %v2128 = vld [vmem:[#allocation9 + $0x508] sm:$0xf]
    %v2129 = vld [vmem:[#allocation9 + $0x50c] sm:$0xf]
    %v2130 = vld [vmem:[#allocation9 + $0x510] sm:$0xf]
    %v2131 = vld [vmem:[#allocation9 + $0x514] sm:$0xf]
    %v2132 = vld [vmem:[#allocation9 + $0x518] sm:$0xf]
    %v2133 = vld [vmem:[#allocation9 + $0x51c] sm:$0xf]
    %v2134 = vld [vmem:[#allocation9 + $0x520] sm:$0xf]
    %v2135 = vld [vmem:[#allocation9 + $0x524] sm:$0xf]
    %v2136 = vld [vmem:[#allocation9 + $0x528] sm:$0xf]
    %v2137 = vld [vmem:[#allocation9 + $0x52c] sm:$0xf]
    %v2138 = vld [vmem:[#allocation9 + $0x530] sm:$0xf]
    %v2139 = vld [vmem:[#allocation9 + $0x534] sm:$0xf]
    %v2140 = vld [vmem:[#allocation9 + $0x538] sm:$0xf]
    %v2141 = vld [vmem:[#allocation9 + $0x53c] sm:$0xf]
    %v2142 = vld [vmem:[%s7] sm:$0x1]
    %v2144 = vlaneseq
    %v2145 = vshrl.u32 %v2144, 7
    %v2146 = vsub.s32 0, %v2145
    %v2147 = vrot.slane %v2142, %v2146
    %v2485 = vunpack.c.l.b16 %v1806
    %v2486 = vunpack.c.l.b16 %v1807
    %v2487 = vunpack.c.l.b16 %v1808
    %v2488 = vunpack.c.l.b16 %v1809
    %v2489 = vunpack.c.l.b16 %v1810
    %v2490 = vunpack.c.l.b16 %v1811
    %v2491 = vunpack.c.l.b16 %v1812
    %v2492 = vunpack.c.l.b16 %v1813
    %v2493 = vunpack.c.l.b16 %v1814
    %v2494 = vunpack.c.l.b16 %v1815
    %v2495 = vunpack.c.l.b16 %v1816
    %v2496 = vunpack.c.l.b16 %v1817
    %v2497 = vunpack.c.l.b16 %v1818
    %v2498 = vunpack.c.l.b16 %v1819
    %v2499 = vunpack.c.l.b16 %v1820
    %v2500 = vunpack.c.l.b16 %v1821
    %v2501 = vunpack.c.l.b16 %v1822
    %v2502 = vunpack.c.l.b16 %v1823
    %v2503 = vunpack.c.l.b16 %v1824
    %v2504 = vunpack.c.l.b16 %v1825
    %v2505 = vunpack.c.l.b16 %v1826
    %v2506 = vunpack.c.l.b16 %v1827
    %v2507 = vunpack.c.l.b16 %v1828
    %v2508 = vunpack.c.l.b16 %v1829
    %v2509 = vunpack.c.l.b16 %v1830
    %v2510 = vunpack.c.l.b16 %v1831
    %v2511 = vunpack.c.l.b16 %v1832
    %v2512 = vunpack.c.l.b16 %v1833
    %v2513 = vunpack.c.l.b16 %v1834
    %v2514 = vunpack.c.l.b16 %v1835
    %v2515 = vunpack.c.l.b16 %v1836
    %v2516 = vunpack.c.l.b16 %v1837
    %v2517 = vunpack.c.l.b16 %v1838
    %v2518 = vunpack.c.l.b16 %v1839
    %v2519 = vunpack.c.l.b16 %v1840
    %v2520 = vunpack.c.l.b16 %v1841
    %v2521 = vunpack.c.l.b16 %v1842
    %v2522 = vunpack.c.l.b16 %v1843
    %v2523 = vunpack.c.l.b16 %v1844
    %v2524 = vunpack.c.l.b16 %v1845
    %v2525 = vunpack.c.l.b16 %v1846
    %v2526 = vunpack.c.l.b16 %v1847
    %v2527 = vunpack.c.l.b16 %v1848
    %v2528 = vunpack.c.l.b16 %v1849
    %v2529 = vunpack.c.l.b16 %v1850
    %v2530 = vunpack.c.l.b16 %v1851
    %v2531 = vunpack.c.l.b16 %v1852
    %v2532 = vunpack.c.l.b16 %v1853
    %v2533 = vunpack.c.l.b16 %v1854
    %v2534 = vunpack.c.l.b16 %v1855
    %v2535 = vunpack.c.l.b16 %v1856
    %v2536 = vunpack.c.l.b16 %v1857
    %v2537 = vunpack.c.l.b16 %v1858
    %v2538 = vunpack.c.l.b16 %v1859
    %v2539 = vunpack.c.l.b16 %v1860
    %v2540 = vunpack.c.l.b16 %v1861
    %v2541 = vunpack.c.l.b16 %v1862
    %v2542 = vunpack.c.l.b16 %v1863
    %v2543 = vunpack.c.l.b16 %v1864
    %v2544 = vunpack.c.l.b16 %v1865
    %v2545 = vunpack.c.l.b16 %v1866
    %v2546 = vunpack.c.l.b16 %v1867
    %v2547 = vunpack.c.l.b16 %v1868
    %v2548 = vunpack.c.l.b16 %v1869
    %v2549 = vunpack.c.l.b16 %v1870
    %v2550 = vunpack.c.l.b16 %v1871
    %v2551 = vunpack.c.l.b16 %v1872
    %v2552 = vunpack.c.l.b16 %v1873
    %v2553 = vunpack.c.l.b16 %v1874
    %v2554 = vunpack.c.l.b16 %v1875
    %v2555 = vunpack.c.l.b16 %v1876
    %v2556 = vunpack.c.l.b16 %v1877
    %v2557 = vunpack.c.l.b16 %v1878
    %v2558 = vunpack.c.l.b16 %v1879
    %v2559 = vunpack.c.l.b16 %v1880
    %v2560 = vunpack.c.l.b16 %v1881
    %v2561 = vunpack.c.l.b16 %v1882
    %v2562 = vunpack.c.l.b16 %v1883
    %v2563 = vunpack.c.l.b16 %v1884
    %v2564 = vunpack.c.l.b16 %v1885
    %v2565 = vunpack.c.l.b16 %v1886
    %v2566 = vunpack.c.l.b16 %v1887
    %v2567 = vunpack.c.l.b16 %v1888
    %v2568 = vunpack.c.l.b16 %v1889
    %v2569 = vunpack.c.l.b16 %v1890
    %v2570 = vunpack.c.l.b16 %v1891
    %v2571 = vunpack.c.l.b16 %v1892
    %v2572 = vunpack.c.l.b16 %v1893
    %v2573 = vunpack.c.l.b16 %v1894
    %v2574 = vunpack.c.l.b16 %v1895
    %v2575 = vunpack.c.l.b16 %v1896
    %v2576 = vunpack.c.l.b16 %v1897
    %v2577 = vunpack.c.l.b16 %v1898
    %v2578 = vunpack.c.l.b16 %v1899
    %v2579 = vunpack.c.l.b16 %v1900
    %v2580 = vunpack.c.l.b16 %v1901
    %v2581 = vunpack.c.l.b16 %v1902
    %v2582 = vunpack.c.l.b16 %v1903
    %v2583 = vunpack.c.l.b16 %v1904
    %v2584 = vunpack.c.l.b16 %v1905
    %v2585 = vunpack.c.l.b16 %v1906
    %v2586 = vunpack.c.l.b16 %v1907
    %v2587 = vunpack.c.l.b16 %v1908
    %v2588 = vunpack.c.l.b16 %v1909
    %v2589 = vunpack.c.l.b16 %v1910
    %v2590 = vunpack.c.l.b16 %v1911
    %v2591 = vunpack.c.l.b16 %v1912
    %v2592 = vunpack.c.l.b16 %v1913
    %v2593 = vunpack.c.l.b16 %v1914
    %v2594 = vunpack.c.l.b16 %v1915
    %v2595 = vunpack.c.l.b16 %v1916
    %v2596 = vunpack.c.l.b16 %v1917
    %v2597 = vunpack.c.l.b16 %v1918
    %v2598 = vunpack.c.l.b16 %v1919
    %v2599 = vunpack.c.l.b16 %v1920
    %v2600 = vunpack.c.l.b16 %v1921
    %v2601 = vunpack.c.l.b16 %v1922
    %v2602 = vunpack.c.l.b16 %v1923
    %v2603 = vunpack.c.l.b16 %v1924
    %v2604 = vunpack.c.l.b16 %v1925
    %v2605 = vunpack.c.l.b16 %v1926
    %v2606 = vunpack.c.l.b16 %v1927
    %v2607 = vunpack.c.l.b16 %v1928
    %v2608 = vunpack.c.l.b16 %v1929
    %v2609 = vunpack.c.l.b16 %v1930
    %v2610 = vunpack.c.l.b16 %v1931
    %v2611 = vunpack.c.l.b16 %v1932
    %v2612 = vunpack.c.l.b16 %v1933
    %v2613 = vunpack.c.l.b16 %v1934
    %v2614 = vunpack.c.l.b16 %v1935
    %v2615 = vunpack.c.l.b16 %v1936
    %v2616 = vunpack.c.l.b16 %v1937
    %v2617 = vunpack.c.l.b16 %v1938
    %v2618 = vunpack.c.l.b16 %v1939
    %v2619 = vunpack.c.l.b16 %v1940
    %v2620 = vunpack.c.l.b16 %v1941
    %v2621 = vunpack.c.l.b16 %v1942
    %v2622 = vunpack.c.l.b16 %v1943
    %v2623 = vunpack.c.l.b16 %v1944
    %v2624 = vunpack.c.l.b16 %v1945
    %v2625 = vunpack.c.l.b16 %v1946
    %v2626 = vunpack.c.l.b16 %v1947
    %v2627 = vunpack.c.l.b16 %v1948
    %v2628 = vunpack.c.l.b16 %v1949
    %v2629 = vunpack.c.l.b16 %v1950
    %v2630 = vunpack.c.l.b16 %v1951
    %v2631 = vunpack.c.l.b16 %v1952
    %v2632 = vunpack.c.l.b16 %v1953
    %v2633 = vunpack.c.l.b16 %v1954
    %v2634 = vunpack.c.l.b16 %v1955
    %v2635 = vunpack.c.l.b16 %v1956
    %v2636 = vunpack.c.l.b16 %v1957
    %v2637 = vunpack.c.l.b16 %v1958
    %v2638 = vunpack.c.l.b16 %v1959
    %v2639 = vunpack.c.l.b16 %v1960
    %v2640 = vunpack.c.l.b16 %v1961
    %v2641 = vunpack.c.l.b16 %v1962
    %v2642 = vunpack.c.l.b16 %v1963
    %v2643 = vunpack.c.l.b16 %v1964
    %v2644 = vunpack.c.l.b16 %v1965
    %v2645 = vunpack.c.l.b16 %v1966
    %v2646 = vunpack.c.l.b16 %v1967
    %v2647 = vunpack.c.l.b16 %v1968
    %v2648 = vunpack.c.l.b16 %v1969
    %v2649 = vunpack.c.l.b16 %v1970
    %v2650 = vunpack.c.l.b16 %v1971
    %v2651 = vunpack.c.l.b16 %v1972
    %v2652 = vunpack.c.l.b16 %v1973
    %v2653 = vunpack.c.l.b16 %v1974
    %v2654 = vunpack.c.l.b16 %v1975
    %v2655 = vunpack.c.l.b16 %v1976
    %v2656 = vunpack.c.l.b16 %v1977
    %v2657 = vunpack.c.l.b16 %v1978
    %v2658 = vunpack.c.l.b16 %v1979
    %v2659 = vunpack.c.l.b16 %v1980
    %v2660 = vunpack.c.l.b16 %v1981
    %v2661 = vunpack.c.l.b16 %v1982
    %v2662 = vunpack.c.l.b16 %v1983
    %v2663 = vunpack.c.l.b16 %v1984
    %v2664 = vunpack.c.l.b16 %v1985
    %v2665 = vunpack.c.l.b16 %v1986
    %v2666 = vunpack.c.l.b16 %v1987
    %v2667 = vunpack.c.l.b16 %v1988
    %v2668 = vunpack.c.l.b16 %v1989
    %v2669 = vunpack.c.l.b16 %v1990
    %v2670 = vunpack.c.l.b16 %v1991
    %v2671 = vunpack.c.l.b16 %v1992
    %v2672 = vunpack.c.l.b16 %v1993
    %v2673 = vunpack.c.l.b16 %v1994
    %v2674 = vunpack.c.l.b16 %v1995
    %v2675 = vunpack.c.l.b16 %v1996
    %v2676 = vunpack.c.l.b16 %v1997
    %v2677 = vunpack.c.l.b16 %v1998
    %v2678 = vunpack.c.l.b16 %v1999
    %v2679 = vunpack.c.l.b16 %v2000
    %v2680 = vunpack.c.l.b16 %v2001
    %v2681 = vunpack.c.l.b16 %v2002
    %v2682 = vunpack.c.l.b16 %v2003
    %v2683 = vunpack.c.l.b16 %v2004
    %v2684 = vunpack.c.l.b16 %v2005
    %v2685 = vunpack.c.l.b16 %v2006
    %v2686 = vunpack.c.l.b16 %v2007
    %v2687 = vunpack.c.l.b16 %v2008
    %v2688 = vunpack.c.l.b16 %v2009
    %v2689 = vunpack.c.l.b16 %v2010
    %v2690 = vunpack.c.l.b16 %v2011
    %v2691 = vunpack.c.l.b16 %v2012
    %v2692 = vunpack.c.l.b16 %v2013
    %v2693 = vunpack.c.l.b16 %v2014
    %v2694 = vunpack.c.l.b16 %v2015
    %v2695 = vunpack.c.l.b16 %v2016
    %v2696 = vunpack.c.l.b16 %v2017
    %v2697 = vunpack.c.l.b16 %v2018
    %v2698 = vunpack.c.l.b16 %v2019
    %v2699 = vunpack.c.l.b16 %v2020
    %v2700 = vunpack.c.l.b16 %v2021
    %v2701 = vunpack.c.l.b16 %v2022
    %v2702 = vunpack.c.l.b16 %v2023
    %v2703 = vunpack.c.l.b16 %v2024
    %v2704 = vunpack.c.l.b16 %v2025
    %v2705 = vunpack.c.l.b16 %v2026
    %v2706 = vunpack.c.l.b16 %v2027
    %v2707 = vunpack.c.l.b16 %v2028
    %v2708 = vunpack.c.l.b16 %v2029
    %v2709 = vunpack.c.l.b16 %v2030
    %v2710 = vunpack.c.l.b16 %v2031
    %v2711 = vunpack.c.l.b16 %v2032
    %v2712 = vunpack.c.l.b16 %v2033
    %v2713 = vunpack.c.l.b16 %v2034
    %v2714 = vunpack.c.l.b16 %v2035
    %v2715 = vunpack.c.l.b16 %v2036
    %v2716 = vunpack.c.l.b16 %v2037
    %v2717 = vunpack.c.l.b16 %v2038
    %v2718 = vunpack.c.l.b16 %v2039
    %v2719 = vunpack.c.l.b16 %v2040
    %v2720 = vunpack.c.l.b16 %v2041
    %v2721 = vunpack.c.l.b16 %v2042
    %v2722 = vunpack.c.l.b16 %v2043
    %v2723 = vunpack.c.l.b16 %v2044
    %v2724 = vunpack.c.l.b16 %v2045
    %v2725 = vunpack.c.l.b16 %v2046
    %v2726 = vunpack.c.l.b16 %v2047
    %v2727 = vunpack.c.l.b16 %v2048
    %v2728 = vunpack.c.l.b16 %v2049
    %v2729 = vunpack.c.l.b16 %v2050
    %v2730 = vunpack.c.l.b16 %v2051
    %v2731 = vunpack.c.l.b16 %v2052
    %v2732 = vunpack.c.l.b16 %v2053
    %v2733 = vunpack.c.l.b16 %v2054
    %v2734 = vunpack.c.l.b16 %v2055
    %v2735 = vunpack.c.l.b16 %v2056
    %v2736 = vunpack.c.l.b16 %v2057
    %v2737 = vunpack.c.l.b16 %v2058
    %v2738 = vunpack.c.l.b16 %v2059
    %v2739 = vunpack.c.l.b16 %v2060
    %v2740 = vunpack.c.l.b16 %v2061
    %v2741 = vunpack.c.l.b16 %v2062
    %v2742 = vunpack.c.l.b16 %v2063
    %v2743 = vunpack.c.l.b16 %v2064
    %v2744 = vunpack.c.l.b16 %v2065
    %v2745 = vunpack.c.l.b16 %v2066
    %v2746 = vunpack.c.l.b16 %v2067
    %v2747 = vunpack.c.l.b16 %v2068
    %v2748 = vunpack.c.l.b16 %v2069
    %v2749 = vunpack.c.l.b16 %v2070
    %v2750 = vunpack.c.l.b16 %v2071
    %v2751 = vunpack.c.l.b16 %v2072
    %v2752 = vunpack.c.l.b16 %v2073
    %v2753 = vunpack.c.l.b16 %v2074
    %v2754 = vunpack.c.l.b16 %v2075
    %v2755 = vunpack.c.l.b16 %v2076
    %v2756 = vunpack.c.l.b16 %v2077
    %v2757 = vunpack.c.l.b16 %v2078
    %v2758 = vunpack.c.l.b16 %v2079
    %v2759 = vunpack.c.l.b16 %v2080
    %v2760 = vunpack.c.l.b16 %v2081
    %v2761 = vunpack.c.l.b16 %v2082
    %v2762 = vunpack.c.l.b16 %v2083
    %v2763 = vunpack.c.l.b16 %v2084
    %v2764 = vunpack.c.l.b16 %v2085
    %v2765 = vunpack.c.l.b16 %v2086
    %v2766 = vunpack.c.l.b16 %v2087
    %v2767 = vunpack.c.l.b16 %v2088
    %v2768 = vunpack.c.l.b16 %v2089
    %v2769 = vunpack.c.l.b16 %v2090
    %v2770 = vunpack.c.l.b16 %v2091
    %v2771 = vunpack.c.l.b16 %v2092
    %v2772 = vunpack.c.l.b16 %v2093
    %v2773 = vunpack.c.l.b16 %v2094
    %v2774 = vunpack.c.l.b16 %v2095
    %v2775 = vunpack.c.l.b16 %v2096
    %v2776 = vunpack.c.l.b16 %v2097
    %v2777 = vunpack.c.l.b16 %v2098
    %v2778 = vunpack.c.l.b16 %v2099
    %v2779 = vunpack.c.l.b16 %v2100
    %v2780 = vunpack.c.l.b16 %v2101
    %v2781 = vunpack.c.l.b16 %v2102
    %v2782 = vunpack.c.l.b16 %v2103
    %v2783 = vunpack.c.l.b16 %v2104
    %v2784 = vunpack.c.l.b16 %v2105
    %v2785 = vunpack.c.l.b16 %v2106
    %v2786 = vunpack.c.l.b16 %v2107
    %v2787 = vunpack.c.l.b16 %v2108
    %v2788 = vunpack.c.l.b16 %v2109
    %v2789 = vunpack.c.l.b16 %v2110
    %v2790 = vunpack.c.l.b16 %v2111
    %v2791 = vunpack.c.l.b16 %v2112
    %v2792 = vunpack.c.l.b16 %v2113
    %v2793 = vunpack.c.l.b16 %v2114
    %v2794 = vunpack.c.l.b16 %v2115
    %v2795 = vunpack.c.l.b16 %v2116
    %v2796 = vunpack.c.l.b16 %v2117
    %v2797 = vunpack.c.l.b16 %v2118
    %v2798 = vunpack.c.l.b16 %v2119
    %v2799 = vunpack.c.l.b16 %v2120
    %v2800 = vunpack.c.l.b16 %v2121
    %v2801 = vunpack.c.l.b16 %v2122
    %v2802 = vunpack.c.l.b16 %v2123
    %v2803 = vunpack.c.l.b16 %v2124
    %v2804 = vunpack.c.l.b16 %v2125
    %v2805 = vunpack.c.l.b16 %v2126
    %v2806 = vunpack.c.l.b16 %v2127
    %v2807 = vunpack.c.l.b16 %v2128
    %v2808 = vunpack.c.l.b16 %v2129
    %v2809 = vunpack.c.l.b16 %v2130
    %v2810 = vunpack.c.l.b16 %v2131
    %v2811 = vunpack.c.l.b16 %v2132
    %v2812 = vunpack.c.l.b16 %v2133
    %v2813 = vunpack.c.l.b16 %v2134
    %v2814 = vunpack.c.l.b16 %v2135
    %v2815 = vunpack.c.l.b16 %v2136
    %v2816 = vunpack.c.l.b16 %v2137
    %v2817 = vunpack.c.l.b16 %v2138
    %v2818 = vunpack.c.l.b16 %v2139
    %v2819 = vunpack.c.l.b16 %v2140
    %v2820 = vunpack.c.l.b16 %v2141
    %v2821 = vpack.c.b16 %v2486, %v2485
    %v2822 = vpack.c.b16 %v2488, %v2487
    %v2823 = vpack.c.b16 %v2490, %v2489
    %v2824 = vpack.c.b16 %v2492, %v2491
    %v2825 = vpack.c.b16 %v2494, %v2493
    %v2826 = vpack.c.b16 %v2496, %v2495
    %v2827 = vpack.c.b16 %v2498, %v2497
    %v2828 = vpack.c.b16 %v2500, %v2499
    %v2829 = vpack.c.b16 %v2502, %v2501
    %v2830 = vpack.c.b16 %v2504, %v2503
    %v2831 = vpack.c.b16 %v2506, %v2505
    %v2832 = vpack.c.b16 %v2508, %v2507
    %v2833 = vpack.c.b16 %v2510, %v2509
    %v2834 = vpack.c.b16 %v2512, %v2511
    %v2835 = vpack.c.b16 %v2514, %v2513
    %v2836 = vpack.c.b16 %v2516, %v2515
    %v2837 = vpack.c.b16 %v2518, %v2517
    %v2838 = vpack.c.b16 %v2520, %v2519
    %v2839 = vpack.c.b16 %v2522, %v2521
    %v2840 = vpack.c.b16 %v2524, %v2523
    %v2841 = vpack.c.b16 %v2526, %v2525
    %v2842 = vpack.c.b16 %v2528, %v2527
    %v2843 = vpack.c.b16 %v2530, %v2529
    %v2844 = vpack.c.b16 %v2532, %v2531
    %v2845 = vpack.c.b16 %v2534, %v2533
    %v2846 = vpack.c.b16 %v2536, %v2535
    %v2847 = vpack.c.b16 %v2538, %v2537
    %v2848 = vpack.c.b16 %v2540, %v2539
    %v2849 = vpack.c.b16 %v2542, %v2541
    %v2850 = vpack.c.b16 %v2544, %v2543
    %v2851 = vpack.c.b16 %v2546, %v2545
    %v2852 = vpack.c.b16 %v2548, %v2547
    %v2853 = vpack.c.b16 %v2550, %v2549
    %v2854 = vpack.c.b16 %v2552, %v2551
    %v2855 = vpack.c.b16 %v2554, %v2553
    %v2856 = vpack.c.b16 %v2556, %v2555
    %v2857 = vpack.c.b16 %v2558, %v2557
    %v2858 = vpack.c.b16 %v2560, %v2559
    %v2859 = vpack.c.b16 %v2562, %v2561
    %v2860 = vpack.c.b16 %v2564, %v2563
    %v2861 = vpack.c.b16 %v2566, %v2565
    %v2862 = vpack.c.b16 %v2568, %v2567
    %v2863 = vpack.c.b16 %v2570, %v2569
    %v2864 = vpack.c.b16 %v2572, %v2571
    %v2865 = vpack.c.b16 %v2574, %v2573
    %v2866 = vpack.c.b16 %v2576, %v2575
    %v2867 = vpack.c.b16 %v2578, %v2577
    %v2868 = vpack.c.b16 %v2580, %v2579
    %v2869 = vpack.c.b16 %v2582, %v2581
    %v2870 = vpack.c.b16 %v2584, %v2583
    %v2871 = vpack.c.b16 %v2586, %v2585
    %v2872 = vpack.c.b16 %v2588, %v2587
    %v2873 = vpack.c.b16 %v2590, %v2589
    %v2874 = vpack.c.b16 %v2592, %v2591
    %v2875 = vpack.c.b16 %v2594, %v2593
    %v2876 = vpack.c.b16 %v2596, %v2595
    %v2877 = vpack.c.b16 %v2598, %v2597
    %v2878 = vpack.c.b16 %v2600, %v2599
    %v2879 = vpack.c.b16 %v2602, %v2601
    %v2880 = vpack.c.b16 %v2604, %v2603
    %v2881 = vpack.c.b16 %v2606, %v2605
    %v2882 = vpack.c.b16 %v2608, %v2607
    %v2883 = vpack.c.b16 %v2610, %v2609
    %v2884 = vpack.c.b16 %v2612, %v2611
    %v2885 = vpack.c.b16 %v2614, %v2613
    %v2886 = vpack.c.b16 %v2616, %v2615
    %v2887 = vpack.c.b16 %v2618, %v2617
    %v2888 = vpack.c.b16 %v2620, %v2619
    %v2889 = vpack.c.b16 %v2622, %v2621
    %v2890 = vpack.c.b16 %v2624, %v2623
    %v2891 = vpack.c.b16 %v2626, %v2625
    %v2892 = vpack.c.b16 %v2628, %v2627
    %v2893 = vpack.c.b16 %v2630, %v2629
    %v2894 = vpack.c.b16 %v2632, %v2631
    %v2895 = vpack.c.b16 %v2634, %v2633
    %v2896 = vpack.c.b16 %v2636, %v2635
    %v2897 = vpack.c.b16 %v2638, %v2637
    %v2898 = vpack.c.b16 %v2640, %v2639
    %v2899 = vpack.c.b16 %v2642, %v2641
    %v2900 = vpack.c.b16 %v2644, %v2643
    %v2901 = vpack.c.b16 %v2646, %v2645
    %v2902 = vpack.c.b16 %v2648, %v2647
    %v2903 = vpack.c.b16 %v2650, %v2649
    %v2904 = vpack.c.b16 %v2652, %v2651
    %v2905 = vpack.c.b16 %v2654, %v2653
    %v2906 = vpack.c.b16 %v2656, %v2655
    %v2907 = vpack.c.b16 %v2658, %v2657
    %v2908 = vpack.c.b16 %v2660, %v2659
    %v2909 = vpack.c.b16 %v2662, %v2661
    %v2910 = vpack.c.b16 %v2664, %v2663
    %v2911 = vpack.c.b16 %v2666, %v2665
    %v2912 = vpack.c.b16 %v2668, %v2667
    %v2913 = vpack.c.b16 %v2670, %v2669
    %v2914 = vpack.c.b16 %v2672, %v2671
    %v2915 = vpack.c.b16 %v2674, %v2673
    %v2916 = vpack.c.b16 %v2676, %v2675
    %v2917 = vpack.c.b16 %v2678, %v2677
    %v2918 = vpack.c.b16 %v2680, %v2679
    %v2919 = vpack.c.b16 %v2682, %v2681
    %v2920 = vpack.c.b16 %v2684, %v2683
    %v2921 = vpack.c.b16 %v2686, %v2685
    %v2922 = vpack.c.b16 %v2688, %v2687
    %v2923 = vpack.c.b16 %v2690, %v2689
    %v2924 = vpack.c.b16 %v2692, %v2691
    %v2925 = vpack.c.b16 %v2694, %v2693
    %v2926 = vpack.c.b16 %v2696, %v2695
    %v2927 = vpack.c.b16 %v2698, %v2697
    %v2928 = vpack.c.b16 %v2700, %v2699
    %v2929 = vpack.c.b16 %v2702, %v2701
    %v2930 = vpack.c.b16 %v2704, %v2703
    %v2931 = vpack.c.b16 %v2706, %v2705
    %v2932 = vpack.c.b16 %v2708, %v2707
    %v2933 = vpack.c.b16 %v2710, %v2709
    %v2934 = vpack.c.b16 %v2712, %v2711
    %v2935 = vpack.c.b16 %v2714, %v2713
    %v2936 = vpack.c.b16 %v2716, %v2715
    %v2937 = vpack.c.b16 %v2718, %v2717
    %v2938 = vpack.c.b16 %v2720, %v2719
    %v2939 = vpack.c.b16 %v2722, %v2721
    %v2940 = vpack.c.b16 %v2724, %v2723
    %v2941 = vpack.c.b16 %v2726, %v2725
    %v2942 = vpack.c.b16 %v2728, %v2727
    %v2943 = vpack.c.b16 %v2730, %v2729
    %v2944 = vpack.c.b16 %v2732, %v2731
    %v2945 = vpack.c.b16 %v2734, %v2733
    %v2946 = vpack.c.b16 %v2736, %v2735
    %v2947 = vpack.c.b16 %v2738, %v2737
    %v2948 = vpack.c.b16 %v2740, %v2739
    %v2949 = vpack.c.b16 %v2742, %v2741
    %v2950 = vpack.c.b16 %v2744, %v2743
    %v2951 = vpack.c.b16 %v2746, %v2745
    %v2952 = vpack.c.b16 %v2748, %v2747
    %v2953 = vpack.c.b16 %v2750, %v2749
    %v2954 = vpack.c.b16 %v2752, %v2751
    %v2955 = vpack.c.b16 %v2754, %v2753
    %v2956 = vpack.c.b16 %v2756, %v2755
    %v2957 = vpack.c.b16 %v2758, %v2757
    %v2958 = vpack.c.b16 %v2760, %v2759
    %v2959 = vpack.c.b16 %v2762, %v2761
    %v2960 = vpack.c.b16 %v2764, %v2763
    %v2961 = vpack.c.b16 %v2766, %v2765
    %v2962 = vpack.c.b16 %v2768, %v2767
    %v2963 = vpack.c.b16 %v2770, %v2769
    %v2964 = vpack.c.b16 %v2772, %v2771
    %v2965 = vpack.c.b16 %v2774, %v2773
    %v2966 = vpack.c.b16 %v2776, %v2775
    %v2967 = vpack.c.b16 %v2778, %v2777
    %v2968 = vpack.c.b16 %v2780, %v2779
    %v2969 = vpack.c.b16 %v2782, %v2781
    %v2970 = vpack.c.b16 %v2784, %v2783
    %v2971 = vpack.c.b16 %v2786, %v2785
    %v2972 = vpack.c.b16 %v2788, %v2787
    %v2973 = vpack.c.b16 %v2790, %v2789
    %v2974 = vpack.c.b16 %v2792, %v2791
    %v2975 = vpack.c.b16 %v2794, %v2793
    %v2976 = vpack.c.b16 %v2796, %v2795
    %v2977 = vpack.c.b16 %v2798, %v2797
    %v2978 = vpack.c.b16 %v2800, %v2799
    %v2979 = vpack.c.b16 %v2802, %v2801
    %v2980 = vpack.c.b16 %v2804, %v2803
    %v2981 = vpack.c.b16 %v2806, %v2805
    %v2982 = vpack.c.b16 %v2808, %v2807
    %v2983 = vpack.c.b16 %v2810, %v2809
    %v2984 = vpack.c.b16 %v2812, %v2811
    %v2985 = vpack.c.b16 %v2814, %v2813
    %v2986 = vpack.c.b16 %v2816, %v2815
    %v2987 = vpack.c.b16 %v2818, %v2817
    %v2988 = vpack.c.b16 %v2820, %v2819
    %3157 = vmatprep.subr.bf16.mxu0 0
    %3158 = vmatpush1.bf16.msra.mxu0 %v2821
    %3159 = vmatprep.subr.bf16.mxu0 0
    %3160 = vmatpush1.bf16.msra.mxu0 %v2822
    %3161 = vmatprep.subr.bf16.mxu0 0
    %3162 = vmatpush1.bf16.msra.mxu0 %v2823
    %3163 = vmatprep.subr.bf16.mxu0 0
    %3164 = vmatpush1.bf16.msra.mxu0 %v2824
    %3165 = vmatprep.subr.bf16.mxu0 0
    %3166 = vmatpush1.bf16.msra.mxu0 %v2825
    %3167 = vmatprep.subr.bf16.mxu0 0
    %3168 = vmatpush1.bf16.msra.mxu0 %v2826
    %3169 = vmatprep.subr.bf16.mxu0 0
    %3170 = vmatpush1.bf16.msra.mxu0 %v2827
    %3171 = vmatprep.subr.bf16.mxu0 0
    %3172 = vmatpush1.bf16.msra.mxu0 %v2828
    %3173 = vmatprep.subr.bf16.mxu0 0
    %3174 = vmatpush1.bf16.msra.mxu0 %v2829
    %3175 = vmatprep.subr.bf16.mxu0 0
    %3176 = vmatpush1.bf16.msra.mxu0 %v2830
    %3177 = vmatprep.subr.bf16.mxu0 0
    %3178 = vmatpush1.bf16.msra.mxu0 %v2831
    %3179 = vmatprep.subr.bf16.mxu0 0
    %3180 = vmatpush1.bf16.msra.mxu0 %v2832
    %3181 = vmatprep.subr.bf16.mxu0 0
    %3182 = vmatpush1.bf16.msra.mxu0 %v2833
    %3183 = vmatprep.subr.bf16.mxu0 0
    %3184 = vmatpush1.bf16.msra.mxu0 %v2834
    %3185 = vmatprep.subr.bf16.mxu0 0
    %3186 = vmatpush1.bf16.msra.mxu0 %v2835
    %3187 = vmatprep.subr.bf16.mxu0 0
    %3188 = vmatpush1.bf16.msra.mxu0 %v2836
    %3189 = vmatprep.mubr.bf16.mxu0 %v1786
    %3190 = vmatmul.mubr.bf16.gmra.mrb[0].mxu0 %v1785
    %v3191 = vpop.f32.mrb[0].mxu0
    %v3192 = vadd.f32 %v2147, %v3191
    %v3193 = vpop.f32.mrb[0].mxu0
    %v3194 = vpop.f32.mrb[0].mxu0
    %v3195 = vpop.f32.mrb[0].mxu0
    %3196 = vdwg.mxu0
    %3197 = vmatprep.subr.bf16.mxu0 0
    %3198 = vmatpush1.bf16.msra.mxu0 %v2837
    %3199 = vmatprep.subr.bf16.mxu0 0
    %3200 = vmatpush1.bf16.msra.mxu0 %v2838
    %3201 = vmatprep.subr.bf16.mxu0 0
    %3202 = vmatpush1.bf16.msra.mxu0 %v2839
    %3203 = vmatprep.subr.bf16.mxu0 0
    %3204 = vmatpush1.bf16.msra.mxu0 %v2840
    %3205 = vmatprep.subr.bf16.mxu0 0
    %3206 = vmatpush1.bf16.msra.mxu0 %v2841
    %3207 = vmatprep.subr.bf16.mxu0 0
    %3208 = vmatpush1.bf16.msra.mxu0 %v2842
    %3209 = vmatprep.subr.bf16.mxu0 0
    %3210 = vmatpush1.bf16.msra.mxu0 %v2843
    %3211 = vmatprep.subr.bf16.mxu0 0
    %3212 = vmatpush1.bf16.msra.mxu0 %v2844
    %3213 = vmatprep.subr.bf16.mxu0 0
    %3214 = vmatpush1.bf16.msra.mxu0 %v2845
    %3215 = vmatprep.subr.bf16.mxu0 0
    %3216 = vmatpush1.bf16.msra.mxu0 %v2846
    %3217 = vmatprep.subr.bf16.mxu0 0
    %3218 = vmatpush1.bf16.msra.mxu0 %v2847
    %3219 = vmatprep.subr.bf16.mxu0 0
    %3220 = vmatpush1.bf16.msra.mxu0 %v2848
    %3221 = vmatprep.subr.bf16.mxu0 0
    %3222 = vmatpush1.bf16.msra.mxu0 %v2849
    %3223 = vmatprep.subr.bf16.mxu0 0
    %3224 = vmatpush1.bf16.msra.mxu0 %v2850
    %3225 = vmatprep.subr.bf16.mxu0 0
    %3226 = vmatpush1.bf16.msra.mxu0 %v2851
    %3227 = vmatprep.subr.bf16.mxu0 0
    %3228 = vmatpush1.bf16.msra.mxu0 %v2852
    %3229 = vmatprep.mubr.bf16.mxu0 %v1788
    %3230 = vmatmul.mubr.bf16.gmra.mrb[0].mxu0 %v1787
    %v3231 = vpop.f32.mrb[0].mxu0
    %v3232 = vadd.f32 %v3192, %v3231
    %v3233 = vpop.f32.mrb[0].mxu0
    %v3234 = vpop.f32.mrb[0].mxu0
    %v3235 = vpop.f32.mrb[0].mxu0
    %3236 = vdwg.mxu0
    %3237 = vmatprep.subr.bf16.mxu0 0
    %3238 = vmatpush1.bf16.msra.mxu0 %v2853
    %3239 = vmatprep.subr.bf16.mxu0 0
    %3240 = vmatpush1.bf16.msra.mxu0 %v2854
    %3241 = vmatprep.subr.bf16.mxu0 0
    %3242 = vmatpush1.bf16.msra.mxu0 %v2855
    %3243 = vmatprep.subr.bf16.mxu0 0
    %3244 = vmatpush1.bf16.msra.mxu0 %v2856
    %3245 = vmatprep.subr.bf16.mxu0 0
    %3246 = vmatpush1.bf16.msra.mxu0 %v2857
    %3247 = vmatprep.subr.bf16.mxu0 0
    %3248 = vmatpush1.bf16.msra.mxu0 %v2858
    %3249 = vmatprep.subr.bf16.mxu0 0
    %3250 = vmatpush1.bf16.msra.mxu0 %v2859
    %3251 = vmatprep.subr.bf16.mxu0 0
    %3252 = vmatpush1.bf16.msra.mxu0 %v2860
    %3253 = vmatprep.subr.bf16.mxu0 0
    %3254 = vmatpush1.bf16.msra.mxu0 %v2861
    %3255 = vmatprep.subr.bf16.mxu0 0
    %3256 = vmatpush1.bf16.msra.mxu0 %v2862
    %3257 = vmatprep.subr.bf16.mxu0 0
    %3258 = vmatpush1.bf16.msra.mxu0 %v2863
    %3259 = vmatprep.subr.bf16.mxu0 0
    %3260 = vmatpush1.bf16.msra.mxu0 %v2864
    %3261 = vmatprep.subr.bf16.mxu0 0
    %3262 = vmatpush1.bf16.msra.mxu0 %v2865
    %3263 = vmatprep.subr.bf16.mxu0 0
    %3264 = vmatpush1.bf16.msra.mxu0 %v2866
    %3265 = vmatprep.subr.bf16.mxu0 0
    %3266 = vmatpush1.bf16.msra.mxu0 %v2867
    %3267 = vmatprep.subr.bf16.mxu0 0
    %3268 = vmatpush1.bf16.msra.mxu0 %v2868
    %3269 = vmatprep.mubr.bf16.mxu0 %v1790
    %3270 = vmatmul.mubr.bf16.gmra.mrb[0].mxu0 %v1789
    %v3271 = vpop.f32.mrb[0].mxu0
    %v3272 = vadd.f32 %v3232, %v3271
    %v3273 = vpop.f32.mrb[0].mxu0
    %v3274 = vpop.f32.mrb[0].mxu0
    %v3275 = vpop.f32.mrb[0].mxu0
    %3276 = vdwg.mxu0
    %3277 = vmatprep.subr.bf16.mxu0 0
    %3278 = vmatpush1.bf16.msra.mxu0 %v2869
    %3279 = vmatprep.subr.bf16.mxu0 0
    %3280 = vmatpush1.bf16.msra.mxu0 %v2870
    %3281 = vmatprep.subr.bf16.mxu0 0
    %3282 = vmatpush1.bf16.msra.mxu0 %v2871
    %3283 = vmatprep.subr.bf16.mxu0 0
    %3284 = vmatpush1.bf16.msra.mxu0 %v2872
    %3285 = vmatprep.subr.bf16.mxu0 0
    %3286 = vmatpush1.bf16.msra.mxu0 %v2873
    %3287 = vmatprep.subr.bf16.mxu0 0
    %3288 = vmatpush1.bf16.msra.mxu0 %v2874
    %3289 = vmatprep.subr.bf16.mxu0 0
    %3290 = vmatpush1.bf16.msra.mxu0 %v2875
    %3291 = vmatprep.subr.bf16.mxu0 0
    %3292 = vmatpush1.bf16.msra.mxu0 %v2876
    %3293 = vmatprep.subr.bf16.mxu0 0
    %3294 = vmatpush1.bf16.msra.mxu0 %v2877
    %3295 = vmatprep.subr.bf16.mxu0 0
    %3296 = vmatpush1.bf16.msra.mxu0 %v2878
    %3297 = vmatprep.subr.bf16.mxu0 0
    %3298 = vmatpush1.bf16.msra.mxu0 %v2879
    %3299 = vmatprep.subr.bf16.mxu0 0
    %3300 = vmatpush1.bf16.msra.mxu0 %v2880
    %3301 = vmatprep.subr.bf16.mxu0 0
    %3302 = vmatpush1.bf16.msra.mxu0 %v2881
    %3303 = vmatprep.subr.bf16.mxu0 0
    %3304 = vmatpush1.bf16.msra.mxu0 %v2882
    %3305 = vmatprep.subr.bf16.mxu0 0
    %3306 = vmatpush1.bf16.msra.mxu0 %v2883
    %3307 = vmatprep.subr.bf16.mxu0 0
    %3308 = vmatpush1.bf16.msra.mxu0 %v2884
    %3309 = vmatprep.mubr.bf16.mxu0 %v1792
    %3310 = vmatmul.mubr.bf16.gmra.mrb[0].mxu0 %v1791
    %v3311 = vpop.f32.mrb[0].mxu0
    %v3312 = vadd.f32 %v3272, %v3311
    %v3313 = vpop.f32.mrb[0].mxu0
    %v3314 = vpop.f32.mrb[0].mxu0
    %v3315 = vpop.f32.mrb[0].mxu0
    %3316 = vdwg.mxu0
    %3317 = vmatprep.subr.bf16.mxu0 0
    %3318 = vmatpush1.bf16.msra.mxu0 %v2885
    %3319 = vmatprep.subr.bf16.mxu0 0
    %3320 = vmatpush1.bf16.msra.mxu0 %v2886
    %3321 = vmatprep.subr.bf16.mxu0 0
    %3322 = vmatpush1.bf16.msra.mxu0 %v2887
    %3323 = vmatprep.subr.bf16.mxu0 0
    %3324 = vmatpush1.bf16.msra.mxu0 %v2888
    %3325 = vmatprep.subr.bf16.mxu0 0
    %3326 = vmatpush1.bf16.msra.mxu0 %v2889
    %3327 = vmatprep.subr.bf16.mxu0 0
    %3328 = vmatpush1.bf16.msra.mxu0 %v2890
    %3329 = vmatprep.subr.bf16.mxu0 0
    %3330 = vmatpush1.bf16.msra.mxu0 %v2891
    %3331 = vmatprep.subr.bf16.mxu0 0
    %3332 = vmatpush1.bf16.msra.mxu0 %v2892
    %3333 = vmatprep.subr.bf16.mxu0 0
    %3334 = vmatpush1.bf16.msra.mxu0 %v2893
    %3335 = vmatprep.subr.bf16.mxu0 0
    %3336 = vmatpush1.bf16.msra.mxu0 %v2894
    %3337 = vmatprep.subr.bf16.mxu0 0
    %3338 = vmatpush1.bf16.msra.mxu0 %v2895
    %3339 = vmatprep.subr.bf16.mxu0 0
    %3340 = vmatpush1.bf16.msra.mxu0 %v2896
    %3341 = vmatprep.subr.bf16.mxu0 0
    %3342 = vmatpush1.bf16.msra.mxu0 %v2897
    %3343 = vmatprep.subr.bf16.mxu0 0
    %3344 = vmatpush1.bf16.msra.mxu0 %v2898
    %3345 = vmatprep.subr.bf16.mxu0 0
    %3346 = vmatpush1.bf16.msra.mxu0 %v2899
    %3347 = vmatprep.subr.bf16.mxu0 0
    %3348 = vmatpush1.bf16.msra.mxu0 %v2900
    %3349 = vmatprep.mubr.bf16.mxu0 %v1794
    %3350 = vmatmul.mubr.bf16.gmra.mrb[0].mxu0 %v1793
    %v3351 = vpop.f32.mrb[0].mxu0
    %v3352 = vadd.f32 %v3312, %v3351
    %v3353 = vpop.f32.mrb[0].mxu0
    %v3354 = vpop.f32.mrb[0].mxu0
    %v3355 = vpop.f32.mrb[0].mxu0
    %3356 = vdwg.mxu0
    %3357 = vmatprep.subr.bf16.mxu0 0
    %3358 = vmatpush1.bf16.msra.mxu0 %v2901
    %3359 = vmatprep.subr.bf16.mxu0 0
    %3360 = vmatpush1.bf16.msra.mxu0 %v2902
    %3361 = vmatprep.subr.bf16.mxu0 0
    %3362 = vmatpush1.bf16.msra.mxu0 %v2903
    %3363 = vmatprep.subr.bf16.mxu0 0
    %3364 = vmatpush1.bf16.msra.mxu0 %v2904
    %3365 = vmatprep.subr.bf16.mxu0 0
    %3366 = vmatpush1.bf16.msra.mxu0 %v2905
    %3367 = vmatprep.subr.bf16.mxu0 0
    %3368 = vmatpush1.bf16.msra.mxu0 %v2906
    %3369 = vmatprep.subr.bf16.mxu0 0
    %3370 = vmatpush1.bf16.msra.mxu0 %v2907
    %3371 = vmatprep.subr.bf16.mxu0 0
    %3372 = vmatpush1.bf16.msra.mxu0 %v2908
    %3373 = vmatprep.subr.bf16.mxu0 0
    %3374 = vmatpush1.bf16.msra.mxu0 %v2909
    %3375 = vmatprep.subr.bf16.mxu0 0
    %3376 = vmatpush1.bf16.msra.mxu0 %v2910
    %3377 = vmatprep.subr.bf16.mxu0 0
    %3378 = vmatpush1.bf16.msra.mxu0 %v2911
    %3379 = vmatprep.subr.bf16.mxu0 0
    %3380 = vmatpush1.bf16.msra.mxu0 %v2912
    %3381 = vmatprep.subr.bf16.mxu0 0
    %3382 = vmatpush1.bf16.msra.mxu0 %v2913
    %3383 = vmatprep.subr.bf16.mxu0 0
    %3384 = vmatpush1.bf16.msra.mxu0 %v2914
    %3385 = vmatprep.subr.bf16.mxu0 0
    %3386 = vmatpush1.bf16.msra.mxu0 %v2915
    %3387 = vmatprep.subr.bf16.mxu0 0
    %3388 = vmatpush1.bf16.msra.mxu0 %v2916
    %3389 = vmatprep.mubr.bf16.mxu0 %v1796
    %3390 = vmatmul.mubr.bf16.gmra.mrb[0].mxu0 %v1795
    %v3391 = vpop.f32.mrb[0].mxu0
    %v3392 = vadd.f32 %v3352, %v3391
    %v3393 = vpop.f32.mrb[0].mxu0
    %v3394 = vpop.f32.mrb[0].mxu0
    %v3395 = vpop.f32.mrb[0].mxu0
    %3396 = vdwg.mxu0
    %3397 = vmatprep.subr.bf16.mxu0 0
    %3398 = vmatpush1.bf16.msra.mxu0 %v2917
    %3399 = vmatprep.subr.bf16.mxu0 0
    %3400 = vmatpush1.bf16.msra.mxu0 %v2918
    %3401 = vmatprep.subr.bf16.mxu0 0
    %3402 = vmatpush1.bf16.msra.mxu0 %v2919
    %3403 = vmatprep.subr.bf16.mxu0 0
    %3404 = vmatpush1.bf16.msra.mxu0 %v2920
    %3405 = vmatprep.subr.bf16.mxu0 0
    %3406 = vmatpush1.bf16.msra.mxu0 %v2921
    %3407 = vmatprep.subr.bf16.mxu0 0
    %3408 = vmatpush1.bf16.msra.mxu0 %v2922
    %3409 = vmatprep.subr.bf16.mxu0 0
    %3410 = vmatpush1.bf16.msra.mxu0 %v2923
    %3411 = vmatprep.subr.bf16.mxu0 0
    %3412 = vmatpush1.bf16.msra.mxu0 %v2924
    %3413 = vmatprep.subr.bf16.mxu0 0
    %3414 = vmatpush1.bf16.msra.mxu0 %v2925
    %3415 = vmatprep.subr.bf16.mxu0 0
    %3416 = vmatpush1.bf16.msra.mxu0 %v2926
    %3417 = vmatprep.subr.bf16.mxu0 0
    %3418 = vmatpush1.bf16.msra.mxu0 %v2927
    %3419 = vmatprep.subr.bf16.mxu0 0
    %3420 = vmatpush1.bf16.msra.mxu0 %v2928
    %3421 = vmatprep.subr.bf16.mxu0 0
    %3422 = vmatpush1.bf16.msra.mxu0 %v2929
    %3423 = vmatprep.subr.bf16.mxu0 0
    %3424 = vmatpush1.bf16.msra.mxu0 %v2930
    %3425 = vmatprep.subr.bf16.mxu0 0
    %3426 = vmatpush1.bf16.msra.mxu0 %v2931
    %3427 = vmatprep.subr.bf16.mxu0 0
    %3428 = vmatpush1.bf16.msra.mxu0 %v2932
    %3429 = vmatprep.mubr.bf16.mxu0 %v1798
    %3430 = vmatmul.mubr.bf16.gmra.mrb[0].mxu0 %v1797
    %v3431 = vpop.f32.mrb[0].mxu0
    %v3432 = vadd.f32 %v3392, %v3431
    %v3433 = vpop.f32.mrb[0].mxu0
    %v3434 = vpop.f32.mrb[0].mxu0
    %v3435 = vpop.f32.mrb[0].mxu0
    %3436 = vdwg.mxu0
    %3437 = vmatprep.subr.bf16.mxu0 0
    %3438 = vmatpush1.bf16.msra.mxu0 %v2933
    %3439 = vmatprep.subr.bf16.mxu0 0
    %3440 = vmatpush1.bf16.msra.mxu0 %v2934
    %3441 = vmatprep.subr.bf16.mxu0 0
    %3442 = vmatpush1.bf16.msra.mxu0 %v2935
    %3443 = vmatprep.subr.bf16.mxu0 0
    %3444 = vmatpush1.bf16.msra.mxu0 %v2936
    %3445 = vmatprep.subr.bf16.mxu0 0
    %3446 = vmatpush1.bf16.msra.mxu0 %v2937
    %3447 = vmatprep.subr.bf16.mxu0 0
    %3448 = vmatpush1.bf16.msra.mxu0 %v2938
    %3449 = vmatprep.subr.bf16.mxu0 0
    %3450 = vmatpush1.bf16.msra.mxu0 %v2939
    %3451 = vmatprep.subr.bf16.mxu0 0
    %3452 = vmatpush1.bf16.msra.mxu0 %v2940
    %3453 = vmatprep.subr.bf16.mxu0 0
    %3454 = vmatpush1.bf16.msra.mxu0 %v2941
    %3455 = vmatprep.subr.bf16.mxu0 0
    %3456 = vmatpush1.bf16.msra.mxu0 %v2942
    %3457 = vmatprep.subr.bf16.mxu0 0
    %3458 = vmatpush1.bf16.msra.mxu0 %v2943
    %3459 = vmatprep.subr.bf16.mxu0 0
    %3460 = vmatpush1.bf16.msra.mxu0 %v2944
    %3461 = vmatprep.subr.bf16.mxu0 0
    %3462 = vmatpush1.bf16.msra.mxu0 %v2945
    %3463 = vmatprep.subr.bf16.mxu0 0
    %3464 = vmatpush1.bf16.msra.mxu0 %v2946
    %3465 = vmatprep.subr.bf16.mxu0 0
    %3466 = vmatpush1.bf16.msra.mxu0 %v2947
    %3467 = vmatprep.subr.bf16.mxu0 0
    %3468 = vmatpush1.bf16.msra.mxu0 %v2948
    %3469 = vmatprep.mubr.bf16.mxu0 %v1800
    %3470 = vmatmul.mubr.bf16.gmra.mrb[0].mxu0 %v1799
    %v3471 = vpop.f32.mrb[0].mxu0
    %v3472 = vadd.f32 %v3432, %v3471
    %v3473 = vpop.f32.mrb[0].mxu0
    %v3474 = vpop.f32.mrb[0].mxu0
    %v3475 = vpop.f32.mrb[0].mxu0
    %3476 = vdwg.mxu0
    %3477 = vmatprep.subr.bf16.mxu0 0
    %3478 = vmatpush1.bf16.msra.mxu0 %v2949
    %3479 = vmatprep.subr.bf16.mxu0 0
    %3480 = vmatpush1.bf16.msra.mxu0 %v2950
    %3481 = vmatprep.subr.bf16.mxu0 0
    %3482 = vmatpush1.bf16.msra.mxu0 %v2951
    %3483 = vmatprep.subr.bf16.mxu0 0
    %3484 = vmatpush1.bf16.msra.mxu0 %v2952
    %3485 = vmatprep.subr.bf16.mxu0 0
    %3486 = vmatpush1.bf16.msra.mxu0 %v2953
    %3487 = vmatprep.subr.bf16.mxu0 0
    %3488 = vmatpush1.bf16.msra.mxu0 %v2954
    %3489 = vmatprep.subr.bf16.mxu0 0
    %3490 = vmatpush1.bf16.msra.mxu0 %v2955
    %3491 = vmatprep.subr.bf16.mxu0 0
    %3492 = vmatpush1.bf16.msra.mxu0 %v2956
    %3493 = vmatprep.subr.bf16.mxu0 0
    %3494 = vmatpush1.bf16.msra.mxu0 %v2957
    %3495 = vmatprep.subr.bf16.mxu0 0
    %3496 = vmatpush1.bf16.msra.mxu0 %v2958
    %3497 = vmatprep.subr.bf16.mxu0 0
    %3498 = vmatpush1.bf16.msra.mxu0 %v2959
    %3499 = vmatprep.subr.bf16.mxu0 0
    %3500 = vmatpush1.bf16.msra.mxu0 %v2960
    %3501 = vmatprep.subr.bf16.mxu0 0
    %3502 = vmatpush1.bf16.msra.mxu0 %v2961
    %3503 = vmatprep.subr.bf16.mxu0 0
    %3504 = vmatpush1.bf16.msra.mxu0 %v2962
    %3505 = vmatprep.subr.bf16.mxu0 0
    %3506 = vmatpush1.bf16.msra.mxu0 %v2963
    %3507 = vmatprep.subr.bf16.mxu0 0
    %3508 = vmatpush1.bf16.msra.mxu0 %v2964
    %3509 = vmatprep.mubr.bf16.mxu0 %v1802
    %3510 = vmatmul.mubr.bf16.gmra.mrb[0].mxu0 %v1801
    %v3511 = vpop.f32.mrb[0].mxu0
    %v3512 = vadd.f32 %v3472, %v3511
    %v3513 = vpop.f32.mrb[0].mxu0
    %v3514 = vpop.f32.mrb[0].mxu0
    %v3515 = vpop.f32.mrb[0].mxu0
    %3516 = vdwg.mxu0
    %3517 = vmatprep.subr.bf16.mxu0 0
    %3518 = vmatpush1.bf16.msra.mxu0 %v2965
    %3519 = vmatprep.subr.bf16.mxu0 0
    %3520 = vmatpush1.bf16.msra.mxu0 %v2966
    %3521 = vmatprep.subr.bf16.mxu0 0
    %3522 = vmatpush1.bf16.msra.mxu0 %v2967
    %3523 = vmatprep.subr.bf16.mxu0 0
    %3524 = vmatpush1.bf16.msra.mxu0 %v2968
    %3525 = vmatprep.subr.bf16.mxu0 0
    %3526 = vmatpush1.bf16.msra.mxu0 %v2969
    %3527 = vmatprep.subr.bf16.mxu0 0
    %3528 = vmatpush1.bf16.msra.mxu0 %v2970
    %3529 = vmatprep.subr.bf16.mxu0 0
    %3530 = vmatpush1.bf16.msra.mxu0 %v2971
    %3531 = vmatprep.subr.bf16.mxu0 0
    %3532 = vmatpush1.bf16.msra.mxu0 %v2972
    %3533 = vmatprep.subr.bf16.mxu0 0
    %3534 = vmatpush1.bf16.msra.mxu0 %v2973
    %3535 = vmatprep.subr.bf16.mxu0 0
    %3536 = vmatpush1.bf16.msra.mxu0 %v2974
    %3537 = vmatprep.subr.bf16.mxu0 0
    %3538 = vmatpush1.bf16.msra.mxu0 %v2975
    %3539 = vmatprep.subr.bf16.mxu0 0
    %3540 = vmatpush1.bf16.msra.mxu0 %v2976
    %3541 = vmatprep.subr.bf16.mxu0 0
    %3542 = vmatpush1.bf16.msra.mxu0 %v2977
    %3543 = vmatprep.subr.bf16.mxu0 0
    %3544 = vmatpush1.bf16.msra.mxu0 %v2978
    %3545 = vmatprep.subr.bf16.mxu0 0
    %3546 = vmatpush1.bf16.msra.mxu0 %v2979
    %3547 = vmatprep.subr.bf16.mxu0 0
    %3548 = vmatpush1.bf16.msra.mxu0 %v2980
    %3549 = vmatprep.mubr.bf16.mxu0 %v1804
    %3550 = vmatmul.mubr.bf16.gmra.mrb[0].mxu0 %v1803
    %v3551 = vpop.f32.mrb[0].mxu0
    %v3552 = vadd.f32 %v3512, %v3551
    %v3553 = vpop.f32.mrb[0].mxu0
    %v3554 = vpop.f32.mrb[0].mxu0
    %v3555 = vpop.f32.mrb[0].mxu0
    %3556 = vdwg.mxu0
    %3557 = vmatprep.subr.bf16.mxu0 0
    %3558 = vmatpush1.bf16.msra.mxu0 %v2981
    %3559 = vmatprep.subr.bf16.mxu0 0
    %3560 = vmatpush1.bf16.msra.mxu0 %v2982
    %3561 = vmatprep.subr.bf16.mxu0 0
    %3562 = vmatpush1.bf16.msra.mxu0 %v2983
    %3563 = vmatprep.subr.bf16.mxu0 0
    %3564 = vmatpush1.bf16.msra.mxu0 %v2984
    %3565 = vmatprep.subr.bf16.mxu0 0
    %3566 = vmatpush1.bf16.msra.mxu0 %v2985
    %3567 = vmatprep.subr.bf16.mxu0 0
    %3568 = vmatpush1.bf16.msra.mxu0 %v2986
    %3569 = vmatprep.subr.bf16.mxu0 0
    %3570 = vmatpush1.bf16.msra.mxu0 %v2987
    %3571 = vmatprep.subr.bf16.mxu0 0
    %3572 = vmatpush1.bf16.msra.mxu0 %v2988
    %3573 = vmatprep.subr.bf16.mxu0 0
    %3574 = vmatpush1.bf16.msra.mxu0 0
    %3575 = vmatprep.subr.bf16.mxu0 0
    %3576 = vmatpush1.bf16.msra.mxu0 0
    %3577 = vmatprep.subr.bf16.mxu0 0
    %3578 = vmatpush1.bf16.msra.mxu0 0
    %3579 = vmatprep.subr.bf16.mxu0 0
    %3580 = vmatpush1.bf16.msra.mxu0 0
    %3581 = vmatprep.subr.bf16.mxu0 0
    %3582 = vmatpush1.bf16.msra.mxu0 0
    %3583 = vmatprep.subr.bf16.mxu0 0
    %3584 = vmatpush1.bf16.msra.mxu0 0
    %3585 = vmatprep.subr.bf16.mxu0 0
    %3586 = vmatpush1.bf16.msra.mxu0 0
    %3587 = vmatprep.subr.bf16.mxu0 0
    %3588 = vmatpush1.bf16.msra.mxu0 0
    %3589 = vmatprep.mubr.bf16.mxu0 0
    %3590 = vmatmul.mubr.bf16.gmra.mrb[0].mxu0 %v1805
    %v3591 = vpop.f32.mrb[0].mxu0
    %v3592 = vadd.f32 %v3552, %v3591
    %v3593 = vpop.f32.mrb[0].mxu0
    %v3594 = vpop.f32.mrb[0].mxu0
    %v3595 = vpop.f32.mrb[0].mxu0
    %3596 = vdwg.mxu0
    %v3597 = vmax.f32 %v3592, 0.0
    %v3598 = vpack.c.bf16 %v3597, %v3597
    %v3599 = vld [vmem:[%s8] sm:$0xf]
    %v3600 = vld [vmem:[%s8 + $0x4] sm:$0xf]
    %v3601 = vld [vmem:[%s8 + $0x8] sm:$0xf]
    %v3602 = vld [vmem:[%s8 + $0xc] sm:$0xf]
    %v3603 = vld [vmem:[%s8 + $0x10] sm:$0xf]
    %v3604 = vld [vmem:[%s8 + $0x14] sm:$0xf]
    %v3605 = vld [vmem:[%s8 + $0x18] sm:$0xf]
    %v3606 = vld [vmem:[%s8 + $0x1c] sm:$0xf]
    %v3607 = vld [vmem:[%s8 + $0x20] sm:$0xf]
    %v3608 = vld [vmem:[%s8 + $0x24] sm:$0xf]
    %v3609 = vld [vmem:[%s8 + $0x28] sm:$0xf]
    %v3610 = vld [vmem:[%s8 + $0x2c] sm:$0xf]
    %v3611 = vld [vmem:[%s8 + $0x30] sm:$0xf]
    %v3612 = vld [vmem:[%s8 + $0x34] sm:$0xf]
    %v3613 = vld [vmem:[%s8 + $0x38] sm:$0xf]
    %v3614 = vld [vmem:[%s8 + $0x3c] sm:$0xf]
    %v3615 = vld [vmem:[%s9] sm:$0x1]
    %v3617 = vlaneseq
    %v3618 = vshrl.u32 %v3617, 7
    %v3619 = vsub.s32 0, %v3618
    %v3620 = vrot.slane %v3615, %v3619
    %v3638 = vunpack.c.l.b16 %v3599
    %v3639 = vunpack.c.l.b16 %v3600
    %v3640 = vunpack.c.l.b16 %v3601
    %v3641 = vunpack.c.l.b16 %v3602
    %v3642 = vunpack.c.l.b16 %v3603
    %v3643 = vunpack.c.l.b16 %v3604
    %v3644 = vunpack.c.l.b16 %v3605
    %v3645 = vunpack.c.l.b16 %v3606
    %v3646 = vunpack.c.l.b16 %v3607
    %v3647 = vunpack.c.l.b16 %v3608
    %v3648 = vunpack.c.l.b16 %v3609
    %v3649 = vunpack.c.l.b16 %v3610
    %v3650 = vunpack.c.l.b16 %v3611
    %v3651 = vunpack.c.l.b16 %v3612
    %v3652 = vunpack.c.l.b16 %v3613
    %v3653 = vunpack.c.l.b16 %v3614
    %v3654 = vpack.c.b16 %v3639, %v3638
    %v3655 = vpack.c.b16 %v3641, %v3640
    %v3656 = vpack.c.b16 %v3643, %v3642
    %v3657 = vpack.c.b16 %v3645, %v3644
    %v3658 = vpack.c.b16 %v3647, %v3646
    %v3659 = vpack.c.b16 %v3649, %v3648
    %v3660 = vpack.c.b16 %v3651, %v3650
    %v3661 = vpack.c.b16 %v3653, %v3652
    %3670 = vmatprep.subr.bf16.mxu0 0
    %3671 = vmatpush1.bf16.msra.mxu0 %v3654
    %3672 = vmatprep.subr.bf16.mxu0 0
    %3673 = vmatpush1.bf16.msra.mxu0 %v3655
    %3674 = vmatprep.subr.bf16.mxu0 0
    %3675 = vmatpush1.bf16.msra.mxu0 %v3656
    %3676 = vmatprep.subr.bf16.mxu0 0
    %3677 = vmatpush1.bf16.msra.mxu0 %v3657
    %3678 = vmatprep.subr.bf16.mxu0 0
    %3679 = vmatpush1.bf16.msra.mxu0 %v3658
    %3680 = vmatprep.subr.bf16.mxu0 0
    %3681 = vmatpush1.bf16.msra.mxu0 %v3659
    %3682 = vmatprep.subr.bf16.mxu0 0
    %3683 = vmatpush1.bf16.msra.mxu0 %v3660
    %3684 = vmatprep.subr.bf16.mxu0 0
    %3685 = vmatpush1.bf16.msra.mxu0 %v3661
    %3686 = vmatprep.subr.bf16.mxu0 0
    %3687 = vmatpush1.bf16.msra.mxu0 0
    %3688 = vmatprep.subr.bf16.mxu0 0
    %3689 = vmatpush1.bf16.msra.mxu0 0
    %3690 = vmatprep.subr.bf16.mxu0 0
    %3691 = vmatpush1.bf16.msra.mxu0 0
    %3692 = vmatprep.subr.bf16.mxu0 0
    %3693 = vmatpush1.bf16.msra.mxu0 0
    %3694 = vmatprep.subr.bf16.mxu0 0
    %3695 = vmatpush1.bf16.msra.mxu0 0
    %3696 = vmatprep.subr.bf16.mxu0 0
    %3697 = vmatpush1.bf16.msra.mxu0 0
    %3698 = vmatprep.subr.bf16.mxu0 0
    %3699 = vmatpush1.bf16.msra.mxu0 0
    %3700 = vmatprep.subr.bf16.mxu0 0
    %3701 = vmatpush1.bf16.msra.mxu0 0
    %3702 = vmatprep.mubr.bf16.mxu0 0
    %3703 = vmatmul.mubr.bf16.gmra.mrb[0].mxu0 %v3598
    %v3704 = vpop.f32.mrb[0].mxu0
    %v3705 = vadd.f32 %v3620, %v3704
    %v3706 = vpop.f32.mrb[0].mxu0
    %v3707 = vpop.f32.mrb[0].mxu0
    %v3708 = vpop.f32.mrb[0].mxu0
    %3709 = vdwg.mxu0
    %v3710 = vxor.u32 %v3705, 2147483648
    %v3711 = vmul.f32 %v3710, 1.442695
    %v3712 = vpow.pop %v3711
    %v3713 = vadd.f32 %v3712, 1.0
    %v3714 = vrcp.pop %v3713
    %v3715 = vmul.f32 1.0, %v3714
    %3716 = vst [vmem:[#allocation11] sm:$0xff] %v3715
    // Predicated region
    $region42: #{tpu_custom_call.1} parent=1 // pred_check
      _
    $region43: #{tpu_custom_call.1} parent=1 // pred_check_branch
      %3718 = sbr.rel (0) target = $region45
    $region44: #{tpu_custom_call.1} parent=1 // pred_region
      %s3720 = ssub.s32 128, 128
      %3721 = vsyncadd [#allocation8], %s3720
      %s3723 = sshll.u32 [#allocation11], 4
      %s3724 = int_to_ptr.vmem [resolvable:$true] %s3723
      %3726 = dma.vmem_to_hbm [thread:$0]  %s3724, 128, %s10, [#allocation8]
    $region45: #{tpu_custom_call.1} parent=1 // pred_fallthru
      _
    // Predicated region
    $region46: #{tpu_custom_call.1} parent=1 // pred_check
      _
    $region47: #{tpu_custom_call.1} parent=1 // pred_check_branch
      %3728 = sbr.rel (0) target = $region49
    $region48: #{tpu_custom_call.1} parent=1 // pred_region
      %3729 = dma.done [#allocation8], 128
    $region49: #{tpu_custom_call.1} parent=1 // pred_fallthru
      _
    %3730 = vsyncpa [#allocation7], 1
    %3731 = vsyncpa [#allocation10], 1
    %3732 = vsyncpa [#allocation8], 1

</llo_original>
